<compile_context>
chip_gen: v6e
topology: v6e:2x2x1
jax: 0.10.0
libtpu: 0.0.40
codegen_flags: <defaults>
</compile_context>

<pallas_src>
import jax
import jax.numpy as jnp
from jax.experimental import pallas as pl
from jax.experimental.pallas import tpu as pltpu

KSIZE = 3
_GELU_C = 0.7978845608028654  # sqrt(2 / pi)
_LANES = 128


def _conv_block_kernel(xh_ref, w1_ref, t1_ref, w2_ref, t2_ref, o_ref,
                       xbuf, ybuf, sem):
    """One (batch, row-tile) grid step.

    xh_ref : (B, H+4, W, Cp) bf16 in HBM (pl.ANY) -- input, 2 zero halo rows
             on each side, channels zero-padded to Cp lanes.
    w*_ref : (3, 3*Cp, Cp) bf16  -- per-ky weights with the BN scale folded in,
             rows ordered (kx, cin).
    t*_ref : (1, Cp) f32         -- BN shift with the conv bias folded in.
    o_ref  : (tile_h, W, Cp) f32
    xbuf   : (tile_h+4, W, Cp) bf16 scratch (this tile's input rows + halo).
    ybuf   : (tile_h+2, W, 3*Cp) bf16 scratch (conv2's lane-stacked kx taps).
    """
    b = pl.program_id(0)
    t = pl.program_id(1)
    n_t = pl.num_programs(1)
    th, w, cp = o_ref.shape
    th2, th4 = th + 2, th + 4
    m0, m1, m2 = th * w, th2 * w, th4 * w

    # ---- fetch this tile's input rows (incl. the 2-row vertical halo)
    row0 = pl.multiple_of(t * th, th)
    cpy = pltpu.make_async_copy(xh_ref.at[b, pl.ds(row0, th4)], xbuf, sem)
    cpy.start()

    # W-edge validity masks for the column (kx) taps, shared by both convs.
    col = jax.lax.broadcasted_iota(jnp.int32, (1, w, cp), 1)
    lmask = col >= 1          # positions whose col-1 neighbour is in-image
    rmask = col <= w - 2      # positions whose col+1 neighbour is in-image

    def kx_taps(v, rows):
        """v: (rows*w, cp) f32 -> masked (left, right) column taps, bf16."""
        lt = pltpu.roll(v, shift=1, axis=0).reshape(rows, w, cp)
        rt = pltpu.roll(v, shift=rows * w - 1, axis=0).reshape(rows, w, cp)
        lt = jnp.where(lmask, lt, 0.0).astype(jnp.bfloat16).reshape(rows * w, cp)
        rt = jnp.where(rmask, rt, 0.0).astype(jnp.bfloat16).reshape(rows * w, cp)
        return lt, rt

    cpy.wait()

    # ---- conv1 (BN1 scale folded into w1, conv1 bias folded into t1) -------
    # All slices below are along the sublane axis at multiples of W (ideally a
    # multiple of 8), so they stay aligned.
    x2 = xbuf[...].reshape(m2, cp)                              # bf16
    xl, xr = kx_taps(x2.astype(jnp.float32), th4)
    xcat = jnp.concatenate([xl, x2, xr], axis=-1)               # (m2, 3*Cp) bf16
    acc = jnp.dot(xcat[0:m1], w1_ref[0], preferred_element_type=jnp.float32)
    acc = acc + jnp.dot(xcat[w:w + m1], w1_ref[1],
                        preferred_element_type=jnp.float32)
    acc = acc + jnp.dot(xcat[2 * w:2 * w + m1], w1_ref[2],
                        preferred_element_type=jnp.float32)
    y = acc + t1_ref[...]

    # GELU(approximate='tanh'), kept in f32 (EUP tanh)
    y = 0.5 * y * (1.0 + jnp.tanh(_GELU_C * (y + 0.044715 * y * y * y)))

    # ---- conv2 input: lane-stacked kx taps of y, staged in bf16 ------------
    yl, yr = kx_taps(y, th2)
    ybuf[:, :, 0:cp] = yl.reshape(th2, w, cp)
    ybuf[:, :, cp:2 * cp] = y.astype(jnp.bfloat16).reshape(th2, w, cp)
    ybuf[:, :, 2 * cp:3 * cp] = yr.reshape(th2, w, cp)

    # conv1 rows that fall outside the image are conv2's zero padding, not
    # GELU(BN1(0)); only the first / last row tile has such rows.
    @pl.when(t == 0)
    def _():
        ybuf[0] = jnp.zeros((w, KSIZE * cp), jnp.bfloat16)

    @pl.when(t == n_t - 1)
    def _():
        ybuf[th2 - 1] = jnp.zeros((w, KSIZE * cp), jnp.bfloat16)

    ycat = ybuf[...].reshape(m1, KSIZE * cp)

    # ---- conv2 (BN2 scale folded into w2, conv2 bias folded into t2) -------
    acc2 = jnp.dot(ycat[0:m0], w2_ref[0], preferred_element_type=jnp.float32)
    acc2 = acc2 + jnp.dot(ycat[w:w + m0], w2_ref[1],
                          preferred_element_type=jnp.float32)
    acc2 = acc2 + jnp.dot(ycat[2 * w:2 * w + m0], w2_ref[2],
                          preferred_element_type=jnp.float32)
    z = acc2 + t2_ref[...]

    # ---- residual from the centre rows of the already-loaded input tile ----
    resid = x2[2 * w:2 * w + m0, :].astype(jnp.float32)

    # drop_path = Identity (p = 0.0); layer_scale disabled (None)
    o_ref[...] = (resid + z).reshape(th, w, cp)


def _vmem_capacity():
    try:
        info = pltpu.get_tpu_info()
        return int(getattr(info, "vmem_capacity_bytes", 64 << 20))
    except Exception:
        return 64 << 20            # conservative default (v7x per-core VMEM)


def _pick_tile_h(B, H, W, Cp, vmem_cap):
    """Largest divisor of H whose per-step footprint fits the VMEM budget."""
    # two folded weight sets, double-buffered by the pipeline, + slack
    fixed = 2 * 2 * (KSIZE * KSIZE * Cp * Cp * 2) + (4 << 20)
    budget = max(int(vmem_cap * 0.6) - fixed, 1 << 20)
    # per output row: xbuf(bf16) + ybuf(3*Cp bf16) + out(2 x f32 buffers)
    #                 + xcat(bf16) + f32 temporaries (acc / y / taps)
    per_row = W * Cp * (2 + 6 + 8 + 6 + 12)
    max_rows = max(1, budget // per_row)
    tile = 1
    for d in range(1, H + 1):
        if H % d == 0 and d <= max_rows:
            tile = d
    # keep >= 2 grid steps so both v7x TensorCores get work
    if B * (H // tile) < 2:
        for d in range(1, H):
            if H % d == 0 and H // d >= 2:
                tile = d
    return tile


def conv_block_forward(x_nchw, params, tile_h=None):
    """ConvBlock forward. x_nchw: (B, C, H, W) f32.

    params = (w1, b1, s1, t1, w2, b2, s2, t2): conv weights in HWIO layout,
    (s, t) are the folded inference-mode BatchNorm scale/shift.
    """
    w1, b1, s1, t1, w2, b2, s2, t2 = params
    B, C, H, W = x_nchw.shape
    Cp = ((C + _LANES - 1) // _LANES) * _LANES   # pad channels to full lanes
    # NOTE: W is ideally a multiple of 8 so all in-kernel row slices stay
    # sublane-aligned (true for typical vision stages).

    # Single fused pre-pass: NCHW -> NHWC, bf16 cast, channel pad to Cp lanes,
    # 2 zero halo rows on each side of H.  No tap stacking, no tile stacking.
    xh = jnp.transpose(x_nchw, (0, 2, 3, 1)).astype(jnp.bfloat16)
    xh = jnp.pad(xh, ((0, 0), (2, 2), (0, 0), (0, Cp - C)))      # (B, H+4, W, Cp)

    cap = _vmem_capacity()
    if tile_h is None:
        tile_h = _pick_tile_h(B, H, W, Cp, cap)
    assert H % tile_h == 0, "tile_h must divide H"
    n_t = H // tile_h

    # ---- fold BN scale into weights and conv bias into the BN shift:
    #        BN(conv(x) + b) = conv_{w*s}(x) + (t + s*b)
    def fold_w(wt, s):     # (3,3,C,C) HWIO -> (3, 3*Cp, Cp) bf16, rows (kx,cin)
        wf = wt * s.reshape(1, 1, 1, C)
        wf = jnp.pad(wf, ((0, 0), (0, 0), (0, Cp - C), (0, Cp - C)))
        return wf.reshape(KSIZE, KSIZE * Cp, Cp).astype(jnp.bfloat16)

    def fold_t(t, s, b):
        return jnp.pad(t + s * b, (0, Cp - C)).reshape(1, Cp).astype(jnp.float32)

    w1c, t1c = fold_w(w1, s1), fold_t(t1, s1, b1)
    w2c, t2c = fold_w(w2, s2), fold_t(t2, s2, b2)

    out = pl.pallas_call(
        _conv_block_kernel,
        out_shape=jax.ShapeDtypeStruct((B, H, W, Cp), jnp.float32),
        grid_spec=pltpu.PrefetchScalarGridSpec(
            num_scalar_prefetch=0,
            grid=(B, n_t),
            in_specs=[
                pl.BlockSpec(memory_space=pl.ANY),                          # xh (HBM)
                pl.BlockSpec((KSIZE, KSIZE * Cp, Cp), lambda b, t: (0, 0, 0)),  # w1
                pl.BlockSpec((1, Cp), lambda b, t: (0, 0)),                 # t1
                pl.BlockSpec((KSIZE, KSIZE * Cp, Cp), lambda b, t: (0, 0, 0)),  # w2
                pl.BlockSpec((1, Cp), lambda b, t: (0, 0)),                 # t2
            ],
            out_specs=pl.BlockSpec((None, tile_h, W, Cp),
                                   lambda b, t: (b, t, 0, 0)),
            scratch_shapes=[
                pltpu.VMEM((tile_h + 4, W, Cp), jnp.bfloat16),          # xbuf
                pltpu.VMEM((tile_h + 2, W, KSIZE * Cp), jnp.bfloat16),  # ybuf
                pltpu.SemaphoreType.DMA,
            ],
        ),
        compiler_params=pltpu.CompilerParams(
            dimension_semantics=("parallel", "parallel"),
            vmem_limit_bytes=min(int(cap * 0.75), 100 * 1024 * 1024)),
    )(xh, w1c, t1c, w2c, t2c)

    # TODO(synk): if the surrounding model consumes NHWC / bf16, this un-pad +
    #             transpose (and the f32 output) can be dropped or fused away.
    out = out[..., :C]
    return jnp.transpose(out, (0, 3, 1, 2))                      # back to NCHW


def _reference(x_nchw, params):
    """Plain-JAX reference using the same folded bf16-matmul / f32-acc recipe."""
    w1, b1, s1, t1, w2, b2, s2, t2 = params
    x = jnp.transpose(x_nchw, (0, 2, 3, 1)).astype(jnp.bfloat16)

    def conv_bn(v, wt, bias, s, t):
        wf = (wt * s.reshape(1, 1, 1, -1)).astype(jnp.bfloat16)
        y = jax.lax.conv_general_dilated(
            v, wf, window_strides=(1, 1), padding=((1, 1), (1, 1)),
            dimension_numbers=('NHWC', 'HWIO', 'NHWC'),
            preferred_element_type=jnp.float32)
        return y + (t + s * bias)

    y = conv_bn(x, w1, b1, s1, t1)
    y = 0.5 * y * (1.0 + jnp.tanh(_GELU_C * (y + 0.044715 * y ** 3)))
    y = conv_bn(y.astype(jnp.bfloat16), w2, b2, s2, t2)
    out = x.astype(jnp.float32) + y
    return jnp.transpose(out, (0, 3, 1, 2))


def _make_params(key, dim):
    ks = jax.random.split(key, 12)
    eps = 1e-5

    w1 = 0.1 * jax.random.normal(ks[0], (KSIZE, KSIZE, dim, dim), jnp.float32)
    b1 = 0.1 * jax.random.normal(ks[1], (dim,), jnp.float32)
    g1 = 1.0 + 0.1 * jax.random.normal(ks[2], (dim,), jnp.float32)
    be1 = 0.1 * jax.random.normal(ks[3], (dim,), jnp.float32)
    m1 = 0.1 * jax.random.normal(ks[4], (dim,), jnp.float32)
    v1 = jax.random.uniform(ks[5], (dim,), jnp.float32, 0.5, 1.5)
    s1 = g1 / jnp.sqrt(v1 + eps)
    t1 = be1 - m1 * s1

    w2 = 0.1 * jax.random.normal(ks[6], (KSIZE, KSIZE, dim, dim), jnp.float32)
    b2 = 0.1 * jax.random.normal(ks[7], (dim,), jnp.float32)
    g2 = 1.0 + 0.1 * jax.random.normal(ks[8], (dim,), jnp.float32)
    be2 = 0.1 * jax.random.normal(ks[9], (dim,), jnp.float32)
    m2 = 0.1 * jax.random.normal(ks[10], (dim,), jnp.float32)
    v2 = jax.random.uniform(ks[11], (dim,), jnp.float32, 0.5, 1.5)
    s2 = g2 / jnp.sqrt(v2 + eps)
    t2 = be2 - m2 * s2

    return (w1, b1, s1, t1, w2, b2, s2, t2)


if __name__ == "__main__":
    key = jax.random.PRNGKey(0)
    k_x, k_p = jax.random.split(key)

    B, C, H, W = 2, 4, 16, 16
    x = jax.random.normal(k_x, (B, C, H, W), jnp.float32)   # NCHW, like PyTorch
    params = _make_params(k_p, C)

    ref = jax.block_until_ready(_reference(x, params))

    # multi-row-tile path: 4 row tiles per image -> grid (B, 4), exercises the
    # top / interior / bottom halo handling.
    out = jax.block_until_ready(conv_block_forward(x, params, tile_h=4))
    assert out.shape == (B, C, H, W)
    assert jnp.allclose(out, ref, rtol=1e-3, atol=1e-3), "mismatch (tiled)"

    # auto tile size (whole image per step at this small shape)
    out2 = jax.block_until_ready(conv_block_forward(x, params))
    assert jnp.allclose(out2, ref, rtol=1e-3, atol=1e-3), "mismatch (auto tile)"

    print("KERNEL_OK")
</pallas_src>

<mosaic_0001>
module attributes {stable_mosaic.version = 11 : i64} {
  func.func @_conv_block_kernel(%arg0: i32, %arg1: i32, %arg2: memref<2x20x16x128xbf16, #tpu.memory_space<any>>, %arg3: memref<3x384x128xbf16, #tpu.memory_space<vmem>>, %arg4: memref<1x128xf32, #tpu.memory_space<vmem>>, %arg5: memref<3x384x128xbf16, #tpu.memory_space<vmem>>, %arg6: memref<1x128xf32, #tpu.memory_space<vmem>>, %arg7: memref<1x4x16x128xf32, #tpu.memory_space<vmem>>, %arg8: memref<8x16x128xbf16, #tpu.memory_space<vmem>>, %arg9: memref<6x16x384xbf16, #tpu.memory_space<vmem>>, %arg10: memref<!tpu.dma_semaphore, #tpu.memory_space<semaphore_mem>>) attributes {dimension_semantics = [#tpu.dimension_semantics<parallel>, #tpu.dimension_semantics<parallel>], iteration_bounds = array<i64: 2, 4>, scalar_prefetch = 0 : i64, scratch_operands = 3 : i64, tpu.core_type = #tpu.core_type<tc>, window_params = [{}, {pipeline_mode = #tpu.pipeline_mode<synchronous>, transform_indices = @transform_1, window_bounds = array<i64: 3, 384, 128>}, {pipeline_mode = #tpu.pipeline_mode<synchronous>, transform_indices = @transform_2, window_bounds = array<i64: 1, 128>}, {pipeline_mode = #tpu.pipeline_mode<synchronous>, transform_indices = @transform_3, window_bounds = array<i64: 3, 384, 128>}, {pipeline_mode = #tpu.pipeline_mode<synchronous>, transform_indices = @transform_4, window_bounds = array<i64: 1, 128>}, {transform_indices = @transform_5, window_bounds = array<i64: 1, 4, 16, 128>}]} {
    %c4_i32 = arith.constant 4 : i32
    %0 = arith.muli %arg1, %c4_i32 : i32
    %1 = tpu.assume_multiple %0, 4 : i32
    %c0_i32 = arith.constant 0 : i32
    %c0_i32_0 = arith.constant 0 : i32
    %2 = tpu.memref_slice %arg2[%arg0, %1, %c0_i32, %c0_i32_0] : memref<2x20x16x128xbf16, #tpu.memory_space<any>> -> memref<1x8x16x128xbf16, #tpu.memory_space<any>>
    %3 = tpu.memref_squeeze %2 : memref<1x8x16x128xbf16, #tpu.memory_space<any>> -> memref<8x16x128xbf16, #tpu.memory_space<any>>
    tpu.enqueue_dma source(%3 : memref<8x16x128xbf16, #tpu.memory_space<any>>) target(%arg8 : memref<8x16x128xbf16, #tpu.memory_space<vmem>>) target_semaphore(%arg10 : memref<!tpu.dma_semaphore, #tpu.memory_space<semaphore_mem>>)
    %4 = tpu.iota {dimensions = array<i32: 1>} : vector<1x16x128xi32>
    %c1_i32 = arith.constant 1 : i32
    %5 = vector.broadcast %c1_i32 : i32 to vector<1x16x128xi32>
    %6 = arith.cmpi sge, %4, %5 : vector<1x16x128xi32>
    %c14_i32 = arith.constant 14 : i32
    %7 = vector.broadcast %c14_i32 : i32 to vector<1x16x128xi32>
    %8 = arith.cmpi sle, %4, %7 : vector<1x16x128xi32>
    %c0_i32_1 = arith.constant 0 : i32
    %c0_i32_2 = arith.constant 0 : i32
    %9 = tpu.memref_slice %arg2[%arg0, %1, %c0_i32_1, %c0_i32_2] : memref<2x20x16x128xbf16, #tpu.memory_space<any>> -> memref<1x8x16x128xbf16, #tpu.memory_space<any>>
    %10 = tpu.memref_squeeze %9 : memref<1x8x16x128xbf16, #tpu.memory_space<any>> -> memref<8x16x128xbf16, #tpu.memory_space<any>>
    tpu.wait_dma2 semaphore(%arg10 : memref<!tpu.dma_semaphore, #tpu.memory_space<semaphore_mem>>) src(%10 : memref<8x16x128xbf16, #tpu.memory_space<any>>) dst(%arg8 : memref<8x16x128xbf16, #tpu.memory_space<vmem>>)
    %c0 = arith.constant 0 : index
    %c0_3 = arith.constant 0 : index
    %c0_4 = arith.constant 0 : index
    %11 = vector.load %arg8[%c0, %c0_3, %c0_4] : memref<8x16x128xbf16, #tpu.memory_space<vmem>>, vector<8x16x128xbf16>
    %12 = vector.shape_cast %11 : vector<8x16x128xbf16> to vector<128x128xbf16>
    %13 = arith.extf %12 : vector<128x128xbf16> to vector<128x128xf32>
    %c1_i32_5 = arith.constant 1 : i32
    %14 = tpu.dynamic_rotate %13 by %c1_i32_5 dim 0 : vector<128x128xf32>, i32 -> vector<128x128xf32>
    %15 = vector.shape_cast %14 : vector<128x128xf32> to vector<8x16x128xf32>
    %c127_i32 = arith.constant 127 : i32
    %16 = tpu.dynamic_rotate %13 by %c127_i32 dim 0 : vector<128x128xf32>, i32 -> vector<128x128xf32>
    %17 = vector.shape_cast %16 : vector<128x128xf32> to vector<8x16x128xf32>
    %cst = arith.constant 0.000000e+00 : f32
    %18 = vector.shape_cast %6 : vector<1x16x128xi1> to vector<1x16x128xi1>
    %19 = vector.broadcast %18 : vector<1x16x128xi1> to vector<8x16x128xi1>
    %20 = vector.broadcast %cst : f32 to vector<8x16x128xf32>
    %21 = arith.select %19, %15, %20 : vector<8x16x128xi1>, vector<8x16x128xf32>
    %22 = arith.truncf %21 : vector<8x16x128xf32> to vector<8x16x128xbf16>
    %23 = vector.shape_cast %22 : vector<8x16x128xbf16> to vector<128x128xbf16>
    %cst_6 = arith.constant 0.000000e+00 : f32
    %24 = vector.shape_cast %8 : vector<1x16x128xi1> to vector<1x16x128xi1>
    %25 = vector.broadcast %24 : vector<1x16x128xi1> to vector<8x16x128xi1>
    %26 = vector.broadcast %cst_6 : f32 to vector<8x16x128xf32>
    %27 = arith.select %25, %17, %26 : vector<8x16x128xi1>, vector<8x16x128xf32>
    %28 = arith.truncf %27 : vector<8x16x128xf32> to vector<8x16x128xbf16>
    %29 = vector.shape_cast %28 : vector<8x16x128xbf16> to vector<128x128xbf16>
    %30 = tpu.concatenate %23, %12, %29 in 1 : vector<128x128xbf16>, vector<128x128xbf16>, vector<128x128xbf16> -> vector<128x384xbf16>
    %31 = vector.extract_strided_slice %30 {offsets = [0, 0], sizes = [96, 384], strides = [1, 1]} : vector<128x384xbf16> to vector<96x384xbf16>
    %c0_7 = arith.constant 0 : index
    %c0_8 = arith.constant 0 : index
    %c0_9 = arith.constant 0 : index
    %32 = vector.load %arg3[%c0_7, %c0_8, %c0_9] : memref<3x384x128xbf16, #tpu.memory_space<vmem>>, vector<1x384x128xbf16>
    %33 = vector.shape_cast %32 : vector<1x384x128xbf16> to vector<384x128xbf16>
    %cst_10 = arith.constant dense<0.000000e+00> : vector<96x128xf32>
    %34 = tpu.matmul %31, %33, %cst_10 {dimension_numbers = #tpu.dot_dimension_numbers<[1], [0], [0], [1], [0, 0, 1, 1], [], []>} : vector<96x384xbf16>, vector<384x128xbf16>, vector<96x128xf32> -> vector<96x128xf32>
    %35 = vector.extract_strided_slice %30 {offsets = [16, 0], sizes = [96, 384], strides = [1, 1]} : vector<128x384xbf16> to vector<96x384xbf16>
    %c1 = arith.constant 1 : index
    %c0_11 = arith.constant 0 : index
    %c0_12 = arith.constant 0 : index
    %36 = vector.load %arg3[%c1, %c0_11, %c0_12] : memref<3x384x128xbf16, #tpu.memory_space<vmem>>, vector<1x384x128xbf16>
    %37 = vector.shape_cast %36 : vector<1x384x128xbf16> to vector<384x128xbf16>
    %cst_13 = arith.constant dense<0.000000e+00> : vector<96x128xf32>
    %38 = tpu.matmul %35, %37, %cst_13 {dimension_numbers = #tpu.dot_dimension_numbers<[1], [0], [0], [1], [0, 0, 1, 1], [], []>} : vector<96x384xbf16>, vector<384x128xbf16>, vector<96x128xf32> -> vector<96x128xf32>
    %39 = arith.addf %34, %38 : vector<96x128xf32>
    %40 = vector.extract_strided_slice %30 {offsets = [32, 0], sizes = [96, 384], strides = [1, 1]} : vector<128x384xbf16> to vector<96x384xbf16>
    %c2 = arith.constant 2 : index
    %c0_14 = arith.constant 0 : index
    %c0_15 = arith.constant 0 : index
    %41 = vector.load %arg3[%c2, %c0_14, %c0_15] : memref<3x384x128xbf16, #tpu.memory_space<vmem>>, vector<1x384x128xbf16>
    %42 = vector.shape_cast %41 : vector<1x384x128xbf16> to vector<384x128xbf16>
    %cst_16 = arith.constant dense<0.000000e+00> : vector<96x128xf32>
    %43 = tpu.matmul %40, %42, %cst_16 {dimension_numbers = #tpu.dot_dimension_numbers<[1], [0], [0], [1], [0, 0, 1, 1], [], []>} : vector<96x384xbf16>, vector<384x128xbf16>, vector<96x128xf32> -> vector<96x128xf32>
    %44 = arith.addf %39, %43 : vector<96x128xf32>
    %c0_17 = arith.constant 0 : index
    %c0_18 = arith.constant 0 : index
    %45 = vector.load %arg4[%c0_17, %c0_18] : memref<1x128xf32, #tpu.memory_space<vmem>>, vector<1x128xf32>
    %46 = vector.broadcast %45 : vector<1x128xf32> to vector<96x128xf32>
    %47 = arith.addf %44, %46 : vector<96x128xf32>
    %cst_19 = arith.constant 5.000000e-01 : f32
    %48 = vector.broadcast %cst_19 : f32 to vector<96x128xf32>
    %49 = arith.mulf %48, %47 : vector<96x128xf32>
    %cst_20 = arith.constant 4.471500e-02 : f32
    %50 = vector.broadcast %cst_20 : f32 to vector<96x128xf32>
    %51 = arith.mulf %50, %47 : vector<96x128xf32>
    %52 = arith.mulf %51, %47 : vector<96x128xf32>
    %53 = arith.mulf %52, %47 : vector<96x128xf32>
    %54 = arith.addf %47, %53 : vector<96x128xf32>
    %cst_21 = arith.constant 0.797884583 : f32
    %55 = vector.broadcast %cst_21 : f32 to vector<96x128xf32>
    %56 = arith.mulf %55, %54 : vector<96x128xf32>
    %57 = math.tanh %56 : vector<96x128xf32>
    %cst_22 = arith.constant 1.000000e+00 : f32
    %58 = vector.broadcast %cst_22 : f32 to vector<96x128xf32>
    %59 = arith.addf %58, %57 : vector<96x128xf32>
    %60 = arith.mulf %49, %59 : vector<96x128xf32>
    %c1_i32_23 = arith.constant 1 : i32
    %61 = tpu.dynamic_rotate %60 by %c1_i32_23 dim 0 : vector<96x128xf32>, i32 -> vector<96x128xf32>
    %62 = vector.shape_cast %61 : vector<96x128xf32> to vector<6x16x128xf32>
    %c95_i32 = arith.constant 95 : i32
    %63 = tpu.dynamic_rotate %60 by %c95_i32 dim 0 : vector<96x128xf32>, i32 -> vector<96x128xf32>
    %64 = vector.shape_cast %63 : vector<96x128xf32> to vector<6x16x128xf32>
    %cst_24 = arith.constant 0.000000e+00 : f32
    %65 = vector.shape_cast %6 : vector<1x16x128xi1> to vector<1x16x128xi1>
    %66 = vector.broadcast %65 : vector<1x16x128xi1> to vector<6x16x128xi1>
    %67 = vector.broadcast %cst_24 : f32 to vector<6x16x128xf32>
    %68 = arith.select %66, %62, %67 : vector<6x16x128xi1>, vector<6x16x128xf32>
    %69 = arith.truncf %68 : vector<6x16x128xf32> to vector<6x16x128xbf16>
    %70 = vector.shape_cast %69 : vector<6x16x128xbf16> to vector<96x128xbf16>
    %cst_25 = arith.constant 0.000000e+00 : f32
    %71 = vector.shape_cast %8 : vector<1x16x128xi1> to vector<1x16x128xi1>
    %72 = vector.broadcast %71 : vector<1x16x128xi1> to vector<6x16x128xi1>
    %73 = vector.broadcast %cst_25 : f32 to vector<6x16x128xf32>
    %74 = arith.select %72, %64, %73 : vector<6x16x128xi1>, vector<6x16x128xf32>
    %75 = arith.truncf %74 : vector<6x16x128xf32> to vector<6x16x128xbf16>
    %76 = vector.shape_cast %75 : vector<6x16x128xbf16> to vector<96x128xbf16>
    %77 = vector.shape_cast %70 : vector<96x128xbf16> to vector<6x16x128xbf16>
    %c0_26 = arith.constant 0 : index
    %c0_27 = arith.constant 0 : index
    %c0_28 = arith.constant 0 : index
    %78 = vector.load %arg9[%c0_26, %c0_27, %c0_28] : memref<6x16x384xbf16, #tpu.memory_space<vmem>>, vector<6x16x128xbf16>
    tpu.vector_store %arg9[%c0_26, %c0_27, %c0_28], %77 {strides = array<i32>} : memref<6x16x384xbf16, #tpu.memory_space<vmem>>, vector<6x16x128xbf16>,
    %79 = arith.truncf %60 : vector<96x128xf32> to vector<96x128xbf16>
    %80 = vector.shape_cast %79 : vector<96x128xbf16> to vector<6x16x128xbf16>
    %c0_29 = arith.constant 0 : index
    %c0_30 = arith.constant 0 : index
    %c128 = arith.constant 128 : index
    %81 = vector.load %arg9[%c0_29, %c0_30, %c128] : memref<6x16x384xbf16, #tpu.memory_space<vmem>>, vector<6x16x128xbf16>
    tpu.vector_store %arg9[%c0_29, %c0_30, %c128], %80 {strides = array<i32>} : memref<6x16x384xbf16, #tpu.memory_space<vmem>>, vector<6x16x128xbf16>,
    %82 = vector.shape_cast %76 : vector<96x128xbf16> to vector<6x16x128xbf16>
    %c0_31 = arith.constant 0 : index
    %c0_32 = arith.constant 0 : index
    %c256 = arith.constant 256 : index
    %83 = vector.load %arg9[%c0_31, %c0_32, %c256] : memref<6x16x384xbf16, #tpu.memory_space<vmem>>, vector<6x16x128xbf16>
    tpu.vector_store %arg9[%c0_31, %c0_32, %c256], %82 {strides = array<i32>} : memref<6x16x384xbf16, #tpu.memory_space<vmem>>, vector<6x16x128xbf16>,
    %c0_i32_33 = arith.constant 0 : i32
    %84 = arith.cmpi eq, %arg1, %c0_i32_33 : i32
    %85 = arith.extui %84 : i1 to i32
    %c0_i32_34 = arith.constant 0 : i32
    %86 = arith.cmpi ne, %85, %c0_i32_34 : i32
    scf.if %86 {
      %cst_57 = arith.constant 0.000000e+00 : bf16
      %116 = vector.broadcast %cst_57 : bf16 to vector<16x384xbf16>
      %c0_58 = arith.constant 0 : index
      %c0_59 = arith.constant 0 : index
      %c0_60 = arith.constant 0 : index
      %117 = vector.load %arg9[%c0_58, %c0_59, %c0_60] : memref<6x16x384xbf16, #tpu.memory_space<vmem>>, vector<1x16x384xbf16>
      %118 = vector.shape_cast %117 : vector<1x16x384xbf16> to vector<16x384xbf16>
      %119 = vector.shape_cast %116 : vector<16x384xbf16> to vector<1x16x384xbf16>
      tpu.vector_store %arg9[%c0_58, %c0_59, %c0_60], %119 {strides = array<i32>} : memref<6x16x384xbf16, #tpu.memory_space<vmem>>, vector<1x16x384xbf16>,
    } else {
    }
    %c3_i32 = arith.constant 3 : i32
    %87 = arith.cmpi eq, %arg1, %c3_i32 : i32
    %88 = arith.extui %87 : i1 to i32
    %c0_i32_35 = arith.constant 0 : i32
    %89 = arith.cmpi ne, %88, %c0_i32_35 : i32
    scf.if %89 {
      %cst_57 = arith.constant 0.000000e+00 : bf16
      %116 = vector.broadcast %cst_57 : bf16 to vector<16x384xbf16>
      %c5 = arith.constant 5 : index
      %c0_58 = arith.constant 0 : index
      %c0_59 = arith.constant 0 : index
      %117 = vector.load %arg9[%c5, %c0_58, %c0_59] : memref<6x16x384xbf16, #tpu.memory_space<vmem>>, vector<1x16x384xbf16>
      %118 = vector.shape_cast %117 : vector<1x16x384xbf16> to vector<16x384xbf16>
      %119 = vector.shape_cast %116 : vector<16x384xbf16> to vector<1x16x384xbf16>
      tpu.vector_store %arg9[%c5, %c0_58, %c0_59], %119 {strides = array<i32>} : memref<6x16x384xbf16, #tpu.memory_space<vmem>>, vector<1x16x384xbf16>,
    } else {
    }
    %c0_36 = arith.constant 0 : index
    %c0_37 = arith.constant 0 : index
    %c0_38 = arith.constant 0 : index
    %90 = vector.load %arg9[%c0_36, %c0_37, %c0_38] : memref<6x16x384xbf16, #tpu.memory_space<vmem>>, vector<6x16x384xbf16>
    %91 = vector.shape_cast %90 : vector<6x16x384xbf16> to vector<96x384xbf16>
    %92 = vector.extract_strided_slice %91 {offsets = [0, 0], sizes = [64, 384], strides = [1, 1]} : vector<96x384xbf16> to vector<64x384xbf16>
    %c0_39 = arith.constant 0 : index
    %c0_40 = arith.constant 0 : index
    %c0_41 = arith.constant 0 : index
    %93 = vector.load %arg5[%c0_39, %c0_40, %c0_41] : memref<3x384x128xbf16, #tpu.memory_space<vmem>>, vector<1x384x128xbf16>
    %94 = vector.shape_cast %93 : vector<1x384x128xbf16> to vector<384x128xbf16>
    %cst_42 = arith.constant dense<0.000000e+00> : vector<64x128xf32>
    %95 = tpu.matmul %92, %94, %cst_42 {dimension_numbers = #tpu.dot_dimension_numbers<[1], [0], [0], [1], [0, 0, 1, 1], [], []>} : vector<64x384xbf16>, vector<384x128xbf16>, vector<64x128xf32> -> vector<64x128xf32>
    %96 = vector.extract_strided_slice %91 {offsets = [16, 0], sizes = [64, 384], strides = [1, 1]} : vector<96x384xbf16> to vector<64x384xbf16>
    %c1_43 = arith.constant 1 : index
    %c0_44 = arith.constant 0 : index
    %c0_45 = arith.constant 0 : index
    %97 = vector.load %arg5[%c1_43, %c0_44, %c0_45] : memref<3x384x128xbf16, #tpu.memory_space<vmem>>, vector<1x384x128xbf16>
    %98 = vector.shape_cast %97 : vector<1x384x128xbf16> to vector<384x128xbf16>
    %cst_46 = arith.constant dense<0.000000e+00> : vector<64x128xf32>
    %99 = tpu.matmul %96, %98, %cst_46 {dimension_numbers = #tpu.dot_dimension_numbers<[1], [0], [0], [1], [0, 0, 1, 1], [], []>} : vector<64x384xbf16>, vector<384x128xbf16>, vector<64x128xf32> -> vector<64x128xf32>
    %100 = arith.addf %95, %99 : vector<64x128xf32>
    %101 = vector.extract_strided_slice %91 {offsets = [32, 0], sizes = [64, 384], strides = [1, 1]} : vector<96x384xbf16> to vector<64x384xbf16>
    %c2_47 = arith.constant 2 : index
    %c0_48 = arith.constant 0 : index
    %c0_49 = arith.constant 0 : index
    %102 = vector.load %arg5[%c2_47, %c0_48, %c0_49] : memref<3x384x128xbf16, #tpu.memory_space<vmem>>, vector<1x384x128xbf16>
    %103 = vector.shape_cast %102 : vector<1x384x128xbf16> to vector<384x128xbf16>
    %cst_50 = arith.constant dense<0.000000e+00> : vector<64x128xf32>
    %104 = tpu.matmul %101, %103, %cst_50 {dimension_numbers = #tpu.dot_dimension_numbers<[1], [0], [0], [1], [0, 0, 1, 1], [], []>} : vector<64x384xbf16>, vector<384x128xbf16>, vector<64x128xf32> -> vector<64x128xf32>
    %105 = arith.addf %100, %104 : vector<64x128xf32>
    %c0_51 = arith.constant 0 : index
    %c0_52 = arith.constant 0 : index
    %106 = vector.load %arg6[%c0_51, %c0_52] : memref<1x128xf32, #tpu.memory_space<vmem>>, vector<1x128xf32>
    %107 = vector.broadcast %106 : vector<1x128xf32> to vector<64x128xf32>
    %108 = arith.addf %105, %107 : vector<64x128xf32>
    %109 = vector.extract_strided_slice %12 {offsets = [32, 0], sizes = [64, 128], strides = [1, 1]} : vector<128x128xbf16> to vector<64x128xbf16>
    %110 = arith.extf %109 : vector<64x128xbf16> to vector<64x128xf32>
    %111 = arith.addf %110, %108 : vector<64x128xf32>
    %112 = vector.shape_cast %111 : vector<64x128xf32> to vector<4x16x128xf32>
    %c0_53 = arith.constant 0 : index
    %c0_54 = arith.constant 0 : index
    %c0_55 = arith.constant 0 : index
    %c0_56 = arith.constant 0 : index
    %113 = vector.load %arg7[%c0_53, %c0_54, %c0_55, %c0_56] : memref<1x4x16x128xf32, #tpu.memory_space<vmem>>, vector<1x4x16x128xf32>
    %114 = vector.shape_cast %113 : vector<1x4x16x128xf32> to vector<4x16x128xf32>
    %115 = vector.shape_cast %112 : vector<4x16x128xf32> to vector<1x4x16x128xf32>
    tpu.vector_store %arg7[%c0_53, %c0_54, %c0_55, %c0_56], %115 {strides = array<i32>} : memref<1x4x16x128xf32, #tpu.memory_space<vmem>>, vector<1x4x16x128xf32>,
    return
  }
  func.func @transform_1(%arg0: i32, %arg1: i32) -> (i32, i32, i32) {
    %c0_i32 = arith.constant 0 : i32
    %c0_i32_0 = arith.constant 0 : i32
    %c0_i32_1 = arith.constant 0 : i32
    %c0_i32_2 = arith.constant 0 : i32
    return %c0_i32, %c0_i32_0, %c0_i32_1 : i32, i32, i32
  }
  func.func @transform_2(%arg0: i32, %arg1: i32) -> (i32, i32) {
    %c0_i32 = arith.constant 0 : i32
    %c0_i32_0 = arith.constant 0 : i32
    %c0_i32_1 = arith.constant 0 : i32
    return %c0_i32, %c0_i32_0 : i32, i32
  }
  func.func @transform_3(%arg0: i32, %arg1: i32) -> (i32, i32, i32) {
    %c0_i32 = arith.constant 0 : i32
    %c0_i32_0 = arith.constant 0 : i32
    %c0_i32_1 = arith.constant 0 : i32
    %c0_i32_2 = arith.constant 0 : i32
    return %c0_i32, %c0_i32_0, %c0_i32_1 : i32, i32, i32
  }
  func.func @transform_4(%arg0: i32, %arg1: i32) -> (i32, i32) {
    %c0_i32 = arith.constant 0 : i32
    %c0_i32_0 = arith.constant 0 : i32
    %c0_i32_1 = arith.constant 0 : i32
    return %c0_i32, %c0_i32_0 : i32, i32
  }
  func.func @transform_5(%arg0: i32, %arg1: i32) -> (i32, i32, i32, i32) {
    %c0_i32 = arith.constant 0 : i32
    %c0_i32_0 = arith.constant 0 : i32
    %c0_i32_1 = arith.constant 0 : i32
    return %arg0, %arg1, %c0_i32, %c0_i32_0 : i32, i32, i32, i32
  }
}

</mosaic_0001>

<llo_original>
// kernel: tpu_custom_call.1
$region0: #{tpu_custom_call.1}
  #allocation0 [shape = 'u32[]', space=smem, size = 0x4, offset = 0x4, fixed_abs, tag = 'smem constant byte address 0x4 - core index']
  #allocation1 [shape = 'u32[144,128]{1,0:T(1,128)}', space=vmem, size = 0x12000, scoped, tag = 'internal scratch']
  #allocation2 [shape = 'bf16[8,16,128]{2,1,0:T(8,128)(2,1)}', space=vmem, size = 0x8000, scoped, tag = 'scratch operand']
  #allocation3 [shape = 'bf16[6,16,384]{2,1,0:T(8,128)(2,1)}', space=vmem, size = 0x12000, scoped, tag = 'scratch operand']
  #allocation4 [shape = 's32[1]{0}', space=sflag, size = 0x4, scoped, tag = 'scratch operand']
  #allocation11 [shape = 's32[]', space=sflag, size = 0x4, offset = 0, fixed_abs, tag = 'sflag constant byte address 0x0 - dummy sync flag']
  #allocation12 [shape = 's32[]', space=sflag, size = 0x4, offset = 0, fixed_abs, tag = 'sflag constant byte address 0x0 - dummy sync flag']
  #allocation13 [shape = 'u32[]', space=smem, size = 0x4, offset = 0x44, fixed_abs, tag = 'smem constant byte address 0x44 - assertion arg 0']
  #allocation14 [shape = 'u32[]', space=smem, size = 0x4, offset = 0x48, fixed_abs, tag = 'smem constant byte address 0x48 - assertion arg 1']
  %s0 = inlined_call_operand.hbm [shape: bf16[2,20,16,128], index: 0, kind: input, shape index: {}]
  %s1 = inlined_call_operand.hbm [shape: bf16[3,384,128], index: 1, kind: input, shape index: {}]
  %s2 = inlined_call_operand.vmem [shape: f32[1,128], index: 2, kind: input, shape index: {}]
  %s3 = inlined_call_operand.hbm [shape: bf16[3,384,128], index: 3, kind: input, shape index: {}]
  %s4 = inlined_call_operand.vmem [shape: f32[1,128], index: 4, kind: input, shape index: {}]
  %s5 = inlined_call_operand.hbm [shape: f32[2,16,16,128], index: 5, kind: output, shape index: {}]
  %s6 = sld [smem:[#allocation0]]
  $region69: #{tpu_custom_call.1} parent=0
    _
  %s8 = ssub.s32 1, %s6
  %s9 = scalar_select 0, %s8, %s6
  $region1: #{tpu_custom_call.1} parent=0
    #allocation5 [shape = 'u8[294912]{0}', space=vmem, size = 0x48000, scoped, tag = 'input window, operand 1, single buffered']
    #allocation6 [shape = 's32[2]{0}', space=sflag, size = 0x8, scoped, tag = 'scoped memory for tpu_custom_call.1']
    #allocation7 [shape = 's32[2]{0}', space=sflag, size = 0x8, scoped, tag = 'scoped memory for tpu_custom_call.1']
    #allocation8 [shape = 'u8[294912]{0}', space=vmem, size = 0x48000, scoped, tag = 'input window, operand 3, single buffered']
    #allocation9 [shape = 's32[1]{0}', space=sflag, size = 0x4, scoped, tag = 'scoped memory for tpu_custom_call.1']
    #allocation10 [shape = 'u8[65536]{0}', space=vmem, size = 0x10000, scoped, tag = 'output window, operand 0']
    %10 = vsyncpa [#allocation6], 0
    %11 = vsyncpa [#allocation9], 0
    %12 = vsyncpa [#allocation7], 0
    %s13 = scalar_lea.sflag [#allocation7], 1
    %14 = vsyncpa %s13, 0
    loop: start=0, step=1, limit=10
    $region2: #{tpu_custom_call.1} parent=1 // loop_pre_header
      _
    $region3: #{tpu_custom_call.1} parent=1 // loop_header
      %s16 = sphi 0, %s20
      %p17 = scmp.ge.s32.totalorder %s16, 10
      %s23 = sphi 0, %s35
      %s24 = sphi 0, %s31
      %s25 = sphi 0, %s23
      %s26 = sphi 0, %s24
      %s27 = sphi 0, %s25
      %s28 = sphi 0, %s26
      %s36 = sphi 0, %s36
      %s38 = sphi 0, %s36
      %s39 = sphi 0, %s38
      %s53 = sphi 0, %s39
      %s57 = sphi 0, %s57
      %s59 = sphi 0, %s57
      %s60 = sphi 0, %s59
      %s74 = sphi 0, %s60
      %s78 = sphi 0, %s78
      %s80 = sphi 0, %s78
      %s81 = sphi 0, %s80
      %s95 = sphi 0, %s81
      %s99 = sphi 0, %s99
      %s101 = sphi 0, %s99
      %s102 = sphi 0, %s101
      %s116 = sphi 0, %s102
      %s124 = sphi 0, %s126
      %s127 = sphi 0, %s124
      %s128 = sphi 0, %s127
      %s144 = sphi 0, %s128
    $region4: #{tpu_custom_call.1} parent=1 // loop_header_branch
      %19 = sbr.rel (%p17) target = $region8
    $region5: #{tpu_custom_call.1} parent=1 // loop_body
      %s21 = ssub.s32 %s16, 1
      %s22 = ssub.s32 %s16, 2
      %s29 = sadd.s32 1, %s24
      %p30 = scmp.ge.s32.totalorder %s29, 4
      %s31 = scalar_select %p30, 0, %s29
      %s32 = sadd.s32 1, %s23
      %s33 = scalar_select %p30, %s32, %s23
      %p34 = scmp.ge.s32.totalorder %s33, 2
      %s35 = scalar_select %p34, 0, %s33
      %s37 = sadd.s32 %s36, 1
      %p40 = scmp.eq.s32.totalorder %s16, 7
      %p41 = scmp.ne.s32.totalorder %s36, %s38
      %p42 = scmp.eq.s32.totalorder %s16, 0
      %p43 = por %p41, %p42
      %p44 = scmp.ne.s32.totalorder %s36, %s38
      %p45 = scmp.eq.s32.totalorder %s21, 7
      %p46 = por %p44, %p45
      %p47 = scmp.ne.s32.totalorder %s38, %s39
      %p48 = scmp.eq.s32.totalorder %s21, 0
      %p49 = por %p47, %p48
      %p50 = scmp.ne.s32.totalorder %s38, %s39
      %p51 = scmp.eq.s32.totalorder %s22, 7
      %p52 = por %p50, %p51
      %p54 = scmp.ne.s32.totalorder %s39, %s53
      %p55 = scmp.eq.s32.totalorder %s22, 0
      %p56 = por %p54, %p55
      %s58 = sadd.s32 %s57, 1
      %p61 = scmp.eq.s32.totalorder %s16, 7
      %p62 = scmp.ne.s32.totalorder %s57, %s59
      %p63 = scmp.eq.s32.totalorder %s16, 0
      %p64 = por %p62, %p63
      %p65 = scmp.ne.s32.totalorder %s57, %s59
      %p66 = scmp.eq.s32.totalorder %s21, 7
      %p67 = por %p65, %p66
      %p68 = scmp.ne.s32.totalorder %s59, %s60
      %p69 = scmp.eq.s32.totalorder %s21, 0
      %p70 = por %p68, %p69
      %p71 = scmp.ne.s32.totalorder %s59, %s60
      %p72 = scmp.eq.s32.totalorder %s22, 7
      %p73 = por %p71, %p72
      %p75 = scmp.ne.s32.totalorder %s60, %s74
      %p76 = scmp.eq.s32.totalorder %s22, 0
      %p77 = por %p75, %p76
      %s79 = sadd.s32 %s78, 1
      %p82 = scmp.eq.s32.totalorder %s16, 7
      %p83 = scmp.ne.s32.totalorder %s78, %s80
      %p84 = scmp.eq.s32.totalorder %s16, 0
      %p85 = por %p83, %p84
      %p86 = scmp.ne.s32.totalorder %s78, %s80
      %p87 = scmp.eq.s32.totalorder %s21, 7
      %p88 = por %p86, %p87
      %p89 = scmp.ne.s32.totalorder %s80, %s81
      %p90 = scmp.eq.s32.totalorder %s21, 0
      %p91 = por %p89, %p90
      %p92 = scmp.ne.s32.totalorder %s80, %s81
      %p93 = scmp.eq.s32.totalorder %s22, 7
      %p94 = por %p92, %p93
      %p96 = scmp.ne.s32.totalorder %s81, %s95
      %p97 = scmp.eq.s32.totalorder %s22, 0
      %p98 = por %p96, %p97
      %s100 = sadd.s32 %s99, 1
      %p103 = scmp.eq.s32.totalorder %s16, 7
      %p104 = scmp.ne.s32.totalorder %s99, %s101
      %p105 = scmp.eq.s32.totalorder %s16, 0
      %p106 = por %p104, %p105
      %p107 = scmp.ne.s32.totalorder %s99, %s101
      %p108 = scmp.eq.s32.totalorder %s21, 7
      %p109 = por %p107, %p108
      %p110 = scmp.ne.s32.totalorder %s101, %s102
      %p111 = scmp.eq.s32.totalorder %s21, 0
      %p112 = por %p110, %p111
      %p113 = scmp.ne.s32.totalorder %s101, %s102
      %p114 = scmp.eq.s32.totalorder %s22, 7
      %p115 = por %p113, %p114
      %p117 = scmp.ne.s32.totalorder %s102, %s116
      %p118 = scmp.eq.s32.totalorder %s22, 0
      %p119 = por %p117, %p118
      %s120 = ssub.s32 %s23, %s35
      %s121 = ssub.s32 %s24, %s31
      %s122 = sor.u32 %s120, %s121
      %p123 = scmp.eq.s32.totalorder %s122, 0
      %s125 = sadd.s32 %s124, 1
      %s126 = scalar_select %p123, %s124, %s125
      %p129 = pneg %p123
      %p130 = scmp.eq.s32.totalorder %s16, 7
      %p131 = por %p129, %p130
      %p132 = scmp.ne.s32.totalorder %s124, %s127
      %p133 = scmp.eq.s32.totalorder %s16, 0
      %p134 = por %p132, %p133
      %p135 = scmp.ne.s32.totalorder %s124, %s127
      %p136 = scmp.eq.s32.totalorder %s21, 7
      %p137 = por %p135, %p136
      %p138 = scmp.ne.s32.totalorder %s127, %s128
      %p139 = scmp.eq.s32.totalorder %s21, 0
      %p140 = por %p138, %p139
      %p141 = scmp.ne.s32.totalorder %s127, %s128
      %p142 = scmp.eq.s32.totalorder %s22, 7
      %p143 = por %p141, %p142
      %p145 = scmp.ne.s32.totalorder %s128, %s144
      %p146 = scmp.eq.s32.totalorder %s22, 0
      %p147 = por %p145, %p146
      %p148 = scmp.le.s32.totalorder 1, %s16
      %p149 = scmp.lt.s32.totalorder %s16, 9
      %p150 = pnand %p148, %p149
      %p151 = pneg %p150
      // Predicated region
      $region9: #{tpu_custom_call.1} parent=5 // pred_check
        _
      $region10: #{tpu_custom_call.1} parent=5 // pred_check_branch
        %153 = sbr.rel (%p150) target = $region12
      $region11: #{tpu_custom_call.1} parent=5 // pred_region
        %s154 = ssub.s32 %s16, 1
        // Predicated region
        $region13: #{tpu_custom_call.1} parent=11 // pred_check
          %p155 = pneg %p49
        $region14: #{tpu_custom_call.1} parent=11 // pred_check_branch
          %157 = sbr.rel (%p155) target = $region16
        $region15: #{tpu_custom_call.1} parent=11 // pred_region
          %s159 = ssub.s32 9216, 9216
          %160 = vsyncadd [#allocation6], %s159
          %s161 = sshll.u32 [#allocation5], 4
          %s162 = int_to_ptr.vmem [resolvable:$true] %s161
          %167 = dma.hbm_to_vmem [thread:$0]  %s1, 9216, %s162, [#allocation6], 64, 64, 4
        $region16: #{tpu_custom_call.1} parent=11 // pred_fallthru
          _
        // Predicated region
        $region17: #{tpu_custom_call.1} parent=11 // pred_check
          %p168 = pneg %p70
        $region18: #{tpu_custom_call.1} parent=11 // pred_check_branch
          %170 = sbr.rel (%p168) target = $region20
        $region19: #{tpu_custom_call.1} parent=11 // pred_region
          _
        $region20: #{tpu_custom_call.1} parent=11 // pred_fallthru
          _
        // Predicated region
        $region21: #{tpu_custom_call.1} parent=11 // pred_check
          %p171 = pneg %p91
        $region22: #{tpu_custom_call.1} parent=11 // pred_check_branch
          %173 = sbr.rel (%p171) target = $region24
        $region23: #{tpu_custom_call.1} parent=11 // pred_region
          %s175 = ssub.s32 9216, 9216
          %176 = vsyncadd [#allocation9], %s175
          %s177 = sshll.u32 [#allocation8], 4
          %s178 = int_to_ptr.vmem [resolvable:$true] %s177
          %183 = dma.hbm_to_vmem [thread:$0]  %s3, 9216, %s178, [#allocation9], 64, 64, 4
        $region24: #{tpu_custom_call.1} parent=11 // pred_fallthru
          _
        // Predicated region
        $region25: #{tpu_custom_call.1} parent=11 // pred_check
          %p184 = pneg %p112
        $region26: #{tpu_custom_call.1} parent=11 // pred_check_branch
          %186 = sbr.rel (%p184) target = $region28
        $region27: #{tpu_custom_call.1} parent=11 // pred_region
          _
        $region28: #{tpu_custom_call.1} parent=11 // pred_fallthru
          _
      $region12: #{tpu_custom_call.1} parent=5 // pred_fallthru
        _
      %p187 = scmp.lt.s32.totalorder %s16, 8
      // Predicated region
      $region29: #{tpu_custom_call.1} parent=5 // pred_check
        %p188 = pneg %p187
      $region30: #{tpu_custom_call.1} parent=5 // pred_check_branch
        %190 = sbr.rel (%p188) target = $region32
      $region31: #{tpu_custom_call.1} parent=5 // pred_region
        _
      $region32: #{tpu_custom_call.1} parent=5 // pred_fallthru
        _
      %p191 = scmp.le.s32.totalorder 1, %s16
      %p192 = scmp.lt.s32.totalorder %s16, 9
      %p193 = pnand %p191, %p192
      %p194 = pneg %p193
      // Predicated region
      $region33: #{tpu_custom_call.1} parent=5 // pred_check
        _
      $region34: #{tpu_custom_call.1} parent=5 // pred_check_branch
        %196 = sbr.rel (%p193) target = $region36
      $region35: #{tpu_custom_call.1} parent=5 // pred_region
        %s197 = ssub.s32 %s16, 1
        // Predicated region
        $region37: #{tpu_custom_call.1} parent=35 // pred_check
          %p198 = pneg %p49
        $region38: #{tpu_custom_call.1} parent=35 // pred_check_branch
          %200 = sbr.rel (%p198) target = $region40
        $region39: #{tpu_custom_call.1} parent=35 // pred_region
          %201 = dma.done [#allocation6], 9216
        $region40: #{tpu_custom_call.1} parent=35 // pred_fallthru
          _
        // Predicated region
        $region41: #{tpu_custom_call.1} parent=35 // pred_check
          %p202 = pneg %p91
        $region42: #{tpu_custom_call.1} parent=35 // pred_check_branch
          %204 = sbr.rel (%p202) target = $region44
        $region43: #{tpu_custom_call.1} parent=35 // pred_region
          %205 = dma.done [#allocation9], 9216
        $region44: #{tpu_custom_call.1} parent=35 // pred_fallthru
          _
        %p206 = pneg %p49
        %p207 = pneg %p46
        %p208 = pneg %p70
        %p209 = pneg %p67
        %p210 = pneg %p91
        %p211 = pneg %p88
        %p212 = pneg %p112
        %p213 = pneg %p109
        %p214 = pneg %p140
        %p215 = pneg %p137
        %s216 = sand.u32 %s127, 1
        %s217 = scalar_lea.sflag [#allocation7], %s216
        %s218 = sand.u32 %s127, 1
        %s219 = smul.addr %s218, 64
        %s220 = scalar_lea.vmem [#allocation10], %s219
        %s221 = smul.u32 4, %s26
        %s223 = smul.u32 %s26, 4
        %s224 = smul.u32 %s223, 2
        %s225 = smul.u32 %s25, 40
        %s226 = sadd.s32 %s224, %s225
        %s227 = smul.addr %s226, 64
        %s228 = scalar_lea.hbm %s0, %s227
        // Predicated region
        $region45: #{tpu_custom_call.1} parent=35 // pred_check
          _
        $region46: #{tpu_custom_call.1} parent=35 // pred_check_branch
          %230 = sbr.rel target = $region48
        $region47: #{tpu_custom_call.1} parent=35 // pred_region
          %231 = sst [smem:[#allocation13]] [#allocation12]
          %232 = sst [smem:[#allocation14]] [#allocation11]
        $region48: #{tpu_custom_call.1} parent=35 // pred_fallthru
          _
        %234 = shalt.err (0)
        %s236 = sshll.u32 [#allocation2], 4
        %s237 = int_to_ptr.vmem [resolvable:$true] %s236
        %239 = dma.hbm_to_vmem [thread:$0]  %s228, 1024, %s237, [#allocation4]
        %v240 = vlaneseq
        %v241 = vshrl.u32 %v240, 7
        %v242 = vadd.s32 %v241, 8
        %vm243 = vcmp.ge.s32.totalorder %v241, 1
        %vm244 = vcmp.ge.s32.totalorder %v242, 1
        %vm245 = vcmp.le.s32.totalorder %v241, 14
        %vm246 = vcmp.le.s32.totalorder %v242, 14
        %s247 = smul.u32 4, 8
        %s248 = smul.u32 %s247, 2
        %s249 = smul.u32 %s248, 1
        %s250 = sshll.u32 %s249, 4
        %251 = dma.done [#allocation4], %s250
        %v252 = vld [vmem:[#allocation2] sm:$0xf]
        %v253 = vld [vmem:[#allocation2 + $0x4] sm:$0xf]
        %v254 = vld [vmem:[#allocation2 + $0x8] sm:$0xf]
        %v255 = vld [vmem:[#allocation2 + $0xc] sm:$0xf]
        %v256 = vld [vmem:[#allocation2 + $0x10] sm:$0xf]
        %v257 = vld [vmem:[#allocation2 + $0x14] sm:$0xf]
        %v258 = vld [vmem:[#allocation2 + $0x18] sm:$0xf]
        %v259 = vld [vmem:[#allocation2 + $0x1c] sm:$0xf]
        %v260 = vld [vmem:[#allocation2 + $0x20] sm:$0xf]
        %v261 = vld [vmem:[#allocation2 + $0x24] sm:$0xf]
        %v262 = vld [vmem:[#allocation2 + $0x28] sm:$0xf]
        %v263 = vld [vmem:[#allocation2 + $0x2c] sm:$0xf]
        %v264 = vld [vmem:[#allocation2 + $0x30] sm:$0xf]
        %v265 = vld [vmem:[#allocation2 + $0x34] sm:$0xf]
        %v266 = vld [vmem:[#allocation2 + $0x38] sm:$0xf]
        %v267 = vld [vmem:[#allocation2 + $0x3c] sm:$0xf]
        %v268 = vunpack.c.l.bf16 %v252
        %v269 = vunpack.c.l.bf16 %v253
        %v270 = vunpack.c.l.bf16 %v254
        %v271 = vunpack.c.l.bf16 %v255
        %v272 = vunpack.c.l.bf16 %v256
        %v273 = vunpack.c.l.bf16 %v257
        %v274 = vunpack.c.l.bf16 %v258
        %v275 = vunpack.c.l.bf16 %v259
        %v276 = vunpack.c.l.bf16 %v260
        %v277 = vunpack.c.l.bf16 %v261
        %v278 = vunpack.c.l.bf16 %v262
        %v279 = vunpack.c.l.bf16 %v263
        %v280 = vunpack.c.l.bf16 %v264
        %v281 = vunpack.c.l.bf16 %v265
        %v282 = vunpack.c.l.bf16 %v266
        %v283 = vunpack.c.l.bf16 %v267
        %v284 = vrot.slane %v268, 7
        %v285 = vrot.slane %v269, 7
        %v286 = vrot.slane %v270, 7
        %v287 = vrot.slane %v271, 7
        %v288 = vrot.slane %v272, 7
        %v289 = vrot.slane %v273, 7
        %v290 = vrot.slane %v274, 7
        %v291 = vrot.slane %v275, 7
        %v292 = vrot.slane %v276, 7
        %v293 = vrot.slane %v277, 7
        %v294 = vrot.slane %v278, 7
        %v295 = vrot.slane %v279, 7
        %v296 = vrot.slane %v280, 7
        %v297 = vrot.slane %v281, 7
        %v298 = vrot.slane %v282, 7
        %v299 = vrot.slane %v283, 7
        %vm300 = vcmp.lt.s32.totalorder %v241, 1
        %v301 = vsel %vm300, %v298, %v299
        %v302 = vsel %vm300, %v297, %v298
        %v303 = vsel %vm300, %v296, %v297
        %v304 = vsel %vm300, %v295, %v296
        %v305 = vsel %vm300, %v294, %v295
        %v306 = vsel %vm300, %v293, %v294
        %v307 = vsel %vm300, %v292, %v293
        %v308 = vsel %vm300, %v291, %v292
        %v309 = vsel %vm300, %v290, %v291
        %v310 = vsel %vm300, %v289, %v290
        %v311 = vsel %vm300, %v288, %v289
        %v312 = vsel %vm300, %v287, %v288
        %v313 = vsel %vm300, %v286, %v287
        %v314 = vsel %vm300, %v285, %v286
        %v315 = vsel %vm300, %v284, %v285
        %v316 = vsel %vm300, %v299, %v284
        %v317 = vrot.slane %v268, 1
        %v318 = vrot.slane %v269, 1
        %v319 = vrot.slane %v270, 1
        %v320 = vrot.slane %v271, 1
        %v321 = vrot.slane %v272, 1
        %v322 = vrot.slane %v273, 1
        %v323 = vrot.slane %v274, 1
        %v324 = vrot.slane %v275, 1
        %v325 = vrot.slane %v276, 1
        %v326 = vrot.slane %v277, 1
        %v327 = vrot.slane %v278, 1
        %v328 = vrot.slane %v279, 1
        %v329 = vrot.slane %v280, 1
        %v330 = vrot.slane %v281, 1
        %v331 = vrot.slane %v282, 1
        %v332 = vrot.slane %v283, 1
        %vm333 = vcmp.lt.s32.totalorder %v241, 7
        %v334 = vsel %vm333, %v331, %v332
        %v335 = vsel %vm333, %v330, %v331
        %v336 = vsel %vm333, %v329, %v330
        %v337 = vsel %vm333, %v328, %v329
        %v338 = vsel %vm333, %v327, %v328
        %v339 = vsel %vm333, %v326, %v327
        %v340 = vsel %vm333, %v325, %v326
        %v341 = vsel %vm333, %v324, %v325
        %v342 = vsel %vm333, %v323, %v324
        %v343 = vsel %vm333, %v322, %v323
        %v344 = vsel %vm333, %v321, %v322
        %v345 = vsel %vm333, %v320, %v321
        %v346 = vsel %vm333, %v319, %v320
        %v347 = vsel %vm333, %v318, %v319
        %v348 = vsel %vm333, %v317, %v318
        %v349 = vsel %vm333, %v332, %v317
        %v350 = vsel %vm243, 1, 0
        %v351 = vsel %vm244, 1, 0
        %vm352 = vcmp.eq.s32.totalorder %v350, 1
        %vm353 = vcmp.eq.s32.totalorder %v351, 1
        %v354 = vsel %vm352, %v316, 0.0
        %v355 = vsel %vm353, %v315, 0.0
        %v356 = vsel %vm352, %v314, 0.0
        %v357 = vsel %vm353, %v313, 0.0
        %v358 = vsel %vm352, %v312, 0.0
        %v359 = vsel %vm353, %v311, 0.0
        %v360 = vsel %vm352, %v310, 0.0
        %v361 = vsel %vm353, %v309, 0.0
        %v362 = vsel %vm352, %v308, 0.0
        %v363 = vsel %vm353, %v307, 0.0
        %v364 = vsel %vm352, %v306, 0.0
        %v365 = vsel %vm353, %v305, 0.0
        %v366 = vsel %vm352, %v304, 0.0
        %v367 = vsel %vm353, %v303, 0.0
        %v368 = vsel %vm352, %v302, 0.0
        %v369 = vsel %vm353, %v301, 0.0
        %v370 = vpack.c.bf16 %v355, %v354
        %v371 = vpack.c.bf16 %v357, %v356
        %v372 = vpack.c.bf16 %v359, %v358
        %v373 = vpack.c.bf16 %v361, %v360
        %v374 = vpack.c.bf16 %v363, %v362
        %v375 = vpack.c.bf16 %v365, %v364
        %v376 = vpack.c.bf16 %v367, %v366
        %v377 = vpack.c.bf16 %v369, %v368
        %v378 = vsel %vm245, 1, 0
        %v379 = vsel %vm246, 1, 0
        %vm380 = vcmp.eq.s32.totalorder %v378, 1
        %vm381 = vcmp.eq.s32.totalorder %v379, 1
        %v382 = vsel %vm380, %v348, 0.0
        %v383 = vsel %vm381, %v347, 0.0
        %v384 = vsel %vm380, %v346, 0.0
        %v385 = vsel %vm381, %v345, 0.0
        %v386 = vsel %vm380, %v344, 0.0
        %v387 = vsel %vm381, %v343, 0.0
        %v388 = vsel %vm380, %v342, 0.0
        %v389 = vsel %vm381, %v341, 0.0
        %v390 = vsel %vm380, %v340, 0.0
        %v391 = vsel %vm381, %v339, 0.0
        %v392 = vsel %vm380, %v338, 0.0
        %v393 = vsel %vm381, %v337, 0.0
        %v394 = vsel %vm380, %v336, 0.0
        %v395 = vsel %vm381, %v335, 0.0
        %v396 = vsel %vm380, %v334, 0.0
        %v397 = vsel %vm381, %v349, 0.0
        %v398 = vpack.c.bf16 %v383, %v382
        %v399 = vpack.c.bf16 %v385, %v384
        %v400 = vpack.c.bf16 %v387, %v386
        %v401 = vpack.c.bf16 %v389, %v388
        %v402 = vpack.c.bf16 %v391, %v390
        %v403 = vpack.c.bf16 %v393, %v392
        %v404 = vpack.c.bf16 %v395, %v394
        %v405 = vpack.c.bf16 %v397, %v396
        %v422 = vunpack.c.l.b16 %v252
        %v423 = vunpack.c.l.b16 %v253
        %v424 = vunpack.c.l.b16 %v254
        %v425 = vunpack.c.l.b16 %v255
        %v426 = vunpack.c.l.b16 %v256
        %v427 = vunpack.c.l.b16 %v257
        %v428 = vunpack.c.l.b16 %v258
        %v429 = vunpack.c.l.b16 %v259
        %v430 = vunpack.c.l.b16 %v260
        %v431 = vunpack.c.l.b16 %v261
        %v432 = vunpack.c.l.b16 %v262
        %v433 = vunpack.c.l.b16 %v263
        %v434 = vunpack.c.l.b16 %v264
        %v435 = vunpack.c.l.b16 %v265
        %v436 = vunpack.c.l.b16 %v266
        %v437 = vunpack.c.l.b16 %v267
        %v438 = vpack.c.b16 %v423, %v422
        %v439 = vpack.c.b16 %v425, %v424
        %v440 = vpack.c.b16 %v427, %v426
        %v441 = vpack.c.b16 %v429, %v428
        %v442 = vpack.c.b16 %v431, %v430
        %v443 = vpack.c.b16 %v433, %v432
        %v444 = vpack.c.b16 %v435, %v434
        %v445 = vpack.c.b16 %v437, %v436
        %v454 = vld [vmem:[#allocation5] sm:$0xf]
        %v455 = vld [vmem:[#allocation5 + $0x4] sm:$0xf]
        %v456 = vld [vmem:[#allocation5 + $0x8] sm:$0xf]
        %v457 = vld [vmem:[#allocation5 + $0xc] sm:$0xf]
        %v458 = vld [vmem:[#allocation5 + $0x10] sm:$0xf]
        %v459 = vld [vmem:[#allocation5 + $0x14] sm:$0xf]
        %v460 = vld [vmem:[#allocation5 + $0x18] sm:$0xf]
        %v461 = vld [vmem:[#allocation5 + $0x1c] sm:$0xf]
        %v462 = vld [vmem:[#allocation5 + $0x20] sm:$0xf]
        %v463 = vld [vmem:[#allocation5 + $0x24] sm:$0xf]
        %v464 = vld [vmem:[#allocation5 + $0x28] sm:$0xf]
        %v465 = vld [vmem:[#allocation5 + $0x2c] sm:$0xf]
        %v466 = vld [vmem:[#allocation5 + $0x30] sm:$0xf]
        %v467 = vld [vmem:[#allocation5 + $0x34] sm:$0xf]
        %v468 = vld [vmem:[#allocation5 + $0x38] sm:$0xf]
        %v469 = vld [vmem:[#allocation5 + $0x3c] sm:$0xf]
        %v470 = vld [vmem:[#allocation5 + $0x40] sm:$0xf]
        %v471 = vld [vmem:[#allocation5 + $0x44] sm:$0xf]
        %v472 = vld [vmem:[#allocation5 + $0x48] sm:$0xf]
        %v473 = vld [vmem:[#allocation5 + $0x4c] sm:$0xf]
        %v474 = vld [vmem:[#allocation5 + $0x50] sm:$0xf]
        %v475 = vld [vmem:[#allocation5 + $0x54] sm:$0xf]
        %v476 = vld [vmem:[#allocation5 + $0x58] sm:$0xf]
        %v477 = vld [vmem:[#allocation5 + $0x5c] sm:$0xf]
        %v478 = vld [vmem:[#allocation5 + $0x60] sm:$0xf]
        %v479 = vld [vmem:[#allocation5 + $0x64] sm:$0xf]
        %v480 = vld [vmem:[#allocation5 + $0x68] sm:$0xf]
        %v481 = vld [vmem:[#allocation5 + $0x6c] sm:$0xf]
        %v482 = vld [vmem:[#allocation5 + $0x70] sm:$0xf]
        %v483 = vld [vmem:[#allocation5 + $0x74] sm:$0xf]
        %v484 = vld [vmem:[#allocation5 + $0x78] sm:$0xf]
        %v485 = vld [vmem:[#allocation5 + $0x7c] sm:$0xf]
        %v486 = vld [vmem:[#allocation5 + $0x80] sm:$0xf]
        %v487 = vld [vmem:[#allocation5 + $0x84] sm:$0xf]
        %v488 = vld [vmem:[#allocation5 + $0x88] sm:$0xf]
        %v489 = vld [vmem:[#allocation5 + $0x8c] sm:$0xf]
        %v490 = vld [vmem:[#allocation5 + $0x90] sm:$0xf]
        %v491 = vld [vmem:[#allocation5 + $0x94] sm:$0xf]
        %v492 = vld [vmem:[#allocation5 + $0x98] sm:$0xf]
        %v493 = vld [vmem:[#allocation5 + $0x9c] sm:$0xf]
        %v494 = vld [vmem:[#allocation5 + $0xa0] sm:$0xf]
        %v495 = vld [vmem:[#allocation5 + $0xa4] sm:$0xf]
        %v496 = vld [vmem:[#allocation5 + $0xa8] sm:$0xf]
        %v497 = vld [vmem:[#allocation5 + $0xac] sm:$0xf]
        %v498 = vld [vmem:[#allocation5 + $0xb0] sm:$0xf]
        %v499 = vld [vmem:[#allocation5 + $0xb4] sm:$0xf]
        %v500 = vld [vmem:[#allocation5 + $0xb8] sm:$0xf]
        %v501 = vld [vmem:[#allocation5 + $0xbc] sm:$0xf]
        %s502 = scalar_lea.vmem [#allocation5], 192
        %v503 = vld [vmem:[%s502] sm:$0xf]
        %v504 = vld [vmem:[%s502 + $0x4] sm:$0xf]
        %v505 = vld [vmem:[%s502 + $0x8] sm:$0xf]
        %v506 = vld [vmem:[%s502 + $0xc] sm:$0xf]
        %v507 = vld [vmem:[%s502 + $0x10] sm:$0xf]
        %v508 = vld [vmem:[%s502 + $0x14] sm:$0xf]
        %v509 = vld [vmem:[%s502 + $0x18] sm:$0xf]
        %v510 = vld [vmem:[%s502 + $0x1c] sm:$0xf]
        %v511 = vld [vmem:[%s502 + $0x20] sm:$0xf]
        %v512 = vld [vmem:[%s502 + $0x24] sm:$0xf]
        %v513 = vld [vmem:[%s502 + $0x28] sm:$0xf]
        %v514 = vld [vmem:[%s502 + $0x2c] sm:$0xf]
        %v515 = vld [vmem:[%s502 + $0x30] sm:$0xf]
        %v516 = vld [vmem:[%s502 + $0x34] sm:$0xf]
        %v517 = vld [vmem:[%s502 + $0x38] sm:$0xf]
        %v518 = vld [vmem:[%s502 + $0x3c] sm:$0xf]
        %v519 = vld [vmem:[%s502 + $0x40] sm:$0xf]
        %v520 = vld [vmem:[%s502 + $0x44] sm:$0xf]
        %v521 = vld [vmem:[%s502 + $0x48] sm:$0xf]
        %v522 = vld [vmem:[%s502 + $0x4c] sm:$0xf]
        %v523 = vld [vmem:[%s502 + $0x50] sm:$0xf]
        %v524 = vld [vmem:[%s502 + $0x54] sm:$0xf]
        %v525 = vld [vmem:[%s502 + $0x58] sm:$0xf]
        %v526 = vld [vmem:[%s502 + $0x5c] sm:$0xf]
        %v527 = vld [vmem:[%s502 + $0x60] sm:$0xf]
        %v528 = vld [vmem:[%s502 + $0x64] sm:$0xf]
        %v529 = vld [vmem:[%s502 + $0x68] sm:$0xf]
        %v530 = vld [vmem:[%s502 + $0x6c] sm:$0xf]
        %v531 = vld [vmem:[%s502 + $0x70] sm:$0xf]
        %v532 = vld [vmem:[%s502 + $0x74] sm:$0xf]
        %v533 = vld [vmem:[%s502 + $0x78] sm:$0xf]
        %v534 = vld [vmem:[%s502 + $0x7c] sm:$0xf]
        %v535 = vld [vmem:[%s502 + $0x80] sm:$0xf]
        %v536 = vld [vmem:[%s502 + $0x84] sm:$0xf]
        %v537 = vld [vmem:[%s502 + $0x88] sm:$0xf]
        %v538 = vld [vmem:[%s502 + $0x8c] sm:$0xf]
        %v539 = vld [vmem:[%s502 + $0x90] sm:$0xf]
        %v540 = vld [vmem:[%s502 + $0x94] sm:$0xf]
        %v541 = vld [vmem:[%s502 + $0x98] sm:$0xf]
        %v542 = vld [vmem:[%s502 + $0x9c] sm:$0xf]
        %v543 = vld [vmem:[%s502 + $0xa0] sm:$0xf]
        %v544 = vld [vmem:[%s502 + $0xa4] sm:$0xf]
        %v545 = vld [vmem:[%s502 + $0xa8] sm:$0xf]
        %v546 = vld [vmem:[%s502 + $0xac] sm:$0xf]
        %v547 = vld [vmem:[%s502 + $0xb0] sm:$0xf]
        %v548 = vld [vmem:[%s502 + $0xb4] sm:$0xf]
        %v549 = vld [vmem:[%s502 + $0xb8] sm:$0xf]
        %v550 = vld [vmem:[%s502 + $0xbc] sm:$0xf]
        %v599 = vunpack.c.l.b16 %v503
        %v600 = vunpack.c.l.b16 %v504
        %v601 = vunpack.c.l.b16 %v505
        %v602 = vunpack.c.l.b16 %v506
        %v603 = vunpack.c.l.b16 %v507
        %v604 = vunpack.c.l.b16 %v508
        %v605 = vunpack.c.l.b16 %v509
        %v606 = vunpack.c.l.b16 %v510
        %v607 = vunpack.c.l.b16 %v511
        %v608 = vunpack.c.l.b16 %v512
        %v609 = vunpack.c.l.b16 %v513
        %v610 = vunpack.c.l.b16 %v514
        %v611 = vunpack.c.l.b16 %v515
        %v612 = vunpack.c.l.b16 %v516
        %v613 = vunpack.c.l.b16 %v517
        %v614 = vunpack.c.l.b16 %v518
        %v615 = vunpack.c.l.b16 %v519
        %v616 = vunpack.c.l.b16 %v520
        %v617 = vunpack.c.l.b16 %v521
        %v618 = vunpack.c.l.b16 %v522
        %v619 = vunpack.c.l.b16 %v523
        %v620 = vunpack.c.l.b16 %v524
        %v621 = vunpack.c.l.b16 %v525
        %v622 = vunpack.c.l.b16 %v526
        %v623 = vunpack.c.l.b16 %v527
        %v624 = vunpack.c.l.b16 %v528
        %v625 = vunpack.c.l.b16 %v529
        %v626 = vunpack.c.l.b16 %v530
        %v627 = vunpack.c.l.b16 %v531
        %v628 = vunpack.c.l.b16 %v532
        %v629 = vunpack.c.l.b16 %v533
        %v630 = vunpack.c.l.b16 %v534
        %v631 = vunpack.c.l.b16 %v535
        %v632 = vunpack.c.l.b16 %v536
        %v633 = vunpack.c.l.b16 %v537
        %v634 = vunpack.c.l.b16 %v538
        %v635 = vunpack.c.l.b16 %v539
        %v636 = vunpack.c.l.b16 %v540
        %v637 = vunpack.c.l.b16 %v541
        %v638 = vunpack.c.l.b16 %v542
        %v639 = vunpack.c.l.b16 %v543
        %v640 = vunpack.c.l.b16 %v544
        %v641 = vunpack.c.l.b16 %v545
        %v642 = vunpack.c.l.b16 %v546
        %v643 = vunpack.c.l.b16 %v547
        %v644 = vunpack.c.l.b16 %v548
        %v645 = vunpack.c.l.b16 %v549
        %v646 = vunpack.c.l.b16 %v550
        %v647 = vpack.c.b16 %v600, %v599
        %v648 = vpack.c.b16 %v602, %v601
        %v649 = vpack.c.b16 %v604, %v603
        %v650 = vpack.c.b16 %v606, %v605
        %v651 = vpack.c.b16 %v608, %v607
        %v652 = vpack.c.b16 %v610, %v609
        %v653 = vpack.c.b16 %v612, %v611
        %v654 = vpack.c.b16 %v614, %v613
        %v655 = vpack.c.b16 %v616, %v615
        %v656 = vpack.c.b16 %v618, %v617
        %v657 = vpack.c.b16 %v620, %v619
        %v658 = vpack.c.b16 %v622, %v621
        %v659 = vpack.c.b16 %v624, %v623
        %v660 = vpack.c.b16 %v626, %v625
        %v661 = vpack.c.b16 %v628, %v627
        %v662 = vpack.c.b16 %v630, %v629
        %v663 = vpack.c.b16 %v632, %v631
        %v664 = vpack.c.b16 %v634, %v633
        %v665 = vpack.c.b16 %v636, %v635
        %v666 = vpack.c.b16 %v638, %v637
        %v667 = vpack.c.b16 %v640, %v639
        %v668 = vpack.c.b16 %v642, %v641
        %v669 = vpack.c.b16 %v644, %v643
        %v670 = vpack.c.b16 %v646, %v645
        %695 = vmatprep.subr.bf16.mxu0 0
        %696 = vmatpush1.bf16.msra.mxu0 %v654
        %697 = vmatprep.subr.bf16.mxu0 0
        %698 = vmatpush1.bf16.msra.mxu0 %v653
        %699 = vmatprep.subr.bf16.mxu0 0
        %700 = vmatpush1.bf16.msra.mxu0 %v652
        %701 = vmatprep.subr.bf16.mxu0 0
        %702 = vmatpush1.bf16.msra.mxu0 %v651
        %703 = vmatprep.subr.bf16.mxu0 0
        %704 = vmatpush1.bf16.msra.mxu0 %v650
        %705 = vmatprep.subr.bf16.mxu0 0
        %706 = vmatpush1.bf16.msra.mxu0 %v649
        %707 = vmatprep.subr.bf16.mxu0 0
        %708 = vmatpush1.bf16.msra.mxu0 %v648
        %709 = vmatprep.subr.bf16.mxu0 0
        %710 = vmatpush1.bf16.msra.mxu0 %v647
        %711 = vmatprep.subr.bf16.mxu0 0
        %712 = vmatpush2.bf16.msra.mxu0 %v662
        %713 = vmatprep.subr.bf16.mxu0 0
        %714 = vmatpush2.bf16.msra.mxu0 %v661
        %715 = vmatprep.subr.bf16.mxu0 0
        %716 = vmatpush2.bf16.msra.mxu0 %v660
        %717 = vmatprep.subr.bf16.mxu0 0
        %718 = vmatpush2.bf16.msra.mxu0 %v659
        %719 = vmatprep.subr.bf16.mxu0 0
        %720 = vmatpush2.bf16.msra.mxu0 %v658
        %721 = vmatprep.subr.bf16.mxu0 0
        %722 = vmatpush2.bf16.msra.mxu0 %v657
        %723 = vmatprep.subr.bf16.mxu0 0
        %724 = vmatpush2.bf16.msra.mxu0 %v656
        %725 = vmatprep.subr.bf16.mxu0 0
        %726 = vmatpush2.bf16.msra.mxu0 %v655
        %727 = vmatprep.mubr.bf16.mxu0 %v439
        %728 = vmatmul.mubr.bf16.gmra.mxu0 %v371
        %v729 = vpop.f32.mrf.mxu0
        %v730 = vadd.f32 0.0, %v729
        %v731 = vpop.f32.mrf.mxu0
        %v732 = vpop.f32.mrf.mxu0
        %v733 = vadd.f32 0.0, %v732
        %v734 = vpop.f32.mrf.mxu0
        %735 = vmatprep.mubr.bf16.mxu0 %v440
        %736 = vmatmul.mubr.bf16.gmra.mxu0 %v372
        %v737 = vpop.f32.mrf.mxu0
        %v738 = vadd.f32 0.0, %v737
        %v739 = vpop.f32.mrf.mxu0
        %v740 = vpop.f32.mrf.mxu0
        %v741 = vadd.f32 0.0, %v740
        %v742 = vpop.f32.mrf.mxu0
        %743 = vmatprep.mubr.bf16.mxu0 %v441
        %744 = vmatmul.mubr.bf16.gmra.mxu0 %v373
        %v745 = vpop.f32.mrf.mxu0
        %v746 = vadd.f32 0.0, %v745
        %v747 = vpop.f32.mrf.mxu0
        %v748 = vpop.f32.mrf.mxu0
        %v749 = vadd.f32 0.0, %v748
        %v750 = vpop.f32.mrf.mxu0
        %751 = vmatprep.mubr.bf16.mxu0 %v442
        %752 = vmatmul.mubr.bf16.gmra.mxu0 %v374
        %v753 = vpop.f32.mrf.mxu0
        %v754 = vadd.f32 0.0, %v753
        %v755 = vpop.f32.mrf.mxu0
        %v756 = vpop.f32.mrf.mxu0
        %v757 = vadd.f32 0.0, %v756
        %v758 = vpop.f32.mrf.mxu0
        %759 = vmatprep.mubr.bf16.mxu0 %v443
        %760 = vmatmul.mubr.bf16.gmra.mxu0 %v375
        %v761 = vpop.f32.mrf.mxu0
        %v762 = vadd.f32 0.0, %v761
        %v763 = vpop.f32.mrf.mxu0
        %v764 = vpop.f32.mrf.mxu0
        %v765 = vadd.f32 0.0, %v764
        %v766 = vpop.f32.mrf.mxu0
        %767 = vmatprep.mubr.bf16.mxu0 %v444
        %768 = vmatmul.mubr.bf16.gmra.mxu0 %v376
        %v769 = vpop.f32.mrf.mxu0
        %v770 = vadd.f32 0.0, %v769
        %v771 = vpop.f32.mrf.mxu0
        %v772 = vpop.f32.mrf.mxu0
        %v773 = vadd.f32 0.0, %v772
        %v774 = vpop.f32.mrf.mxu0
        %775 = vdwg.mxu0
        %776 = vmatprep.subr.bf16.mxu0 0
        %777 = vmatpush1.bf16.msra.mxu0 %v670
        %778 = vmatprep.subr.bf16.mxu0 0
        %779 = vmatpush1.bf16.msra.mxu0 %v669
        %780 = vmatprep.subr.bf16.mxu0 0
        %781 = vmatpush1.bf16.msra.mxu0 %v668
        %782 = vmatprep.subr.bf16.mxu0 0
        %783 = vmatpush1.bf16.msra.mxu0 %v667
        %784 = vmatprep.subr.bf16.mxu0 0
        %785 = vmatpush1.bf16.msra.mxu0 %v666
        %786 = vmatprep.subr.bf16.mxu0 0
        %787 = vmatpush1.bf16.msra.mxu0 %v665
        %788 = vmatprep.subr.bf16.mxu0 0
        %789 = vmatpush1.bf16.msra.mxu0 %v664
        %790 = vmatprep.subr.bf16.mxu0 0
        %791 = vmatpush1.bf16.msra.mxu0 %v663
        %792 = vmatprep.subr.bf16.mxu0 0
        %793 = vmatpush2.bf16.msra.mxu0 0
        %794 = vmatprep.subr.bf16.mxu0 0
        %795 = vmatpush2.bf16.msra.mxu0 0
        %796 = vmatprep.subr.bf16.mxu0 0
        %797 = vmatpush2.bf16.msra.mxu0 0
        %798 = vmatprep.subr.bf16.mxu0 0
        %799 = vmatpush2.bf16.msra.mxu0 0
        %800 = vmatprep.subr.bf16.mxu0 0
        %801 = vmatpush2.bf16.msra.mxu0 0
        %802 = vmatprep.subr.bf16.mxu0 0
        %803 = vmatpush2.bf16.msra.mxu0 0
        %804 = vmatprep.subr.bf16.mxu0 0
        %805 = vmatpush2.bf16.msra.mxu0 0
        %806 = vmatprep.subr.bf16.mxu0 0
        %807 = vmatpush2.bf16.msra.mxu0 0
        %808 = vmatprep.mubr.bf16.mxu0 0
        %809 = vmatmul.mubr.bf16.gmra.mxu0 %v399
        %v810 = vpop.f32.mrf.mxu0
        %v811 = vadd.f32 %v730, %v810
        %v812 = vpop.f32.mrf.mxu0
        %v813 = vpop.f32.mrf.mxu0
        %v814 = vadd.f32 %v733, %v813
        %v815 = vpop.f32.mrf.mxu0
        %816 = vmatprep.mubr.bf16.mxu0 0
        %817 = vmatmul.mubr.bf16.gmra.mxu0 %v400
        %v818 = vpop.f32.mrf.mxu0
        %v819 = vadd.f32 %v738, %v818
        %v820 = vpop.f32.mrf.mxu0
        %v821 = vpop.f32.mrf.mxu0
        %v822 = vadd.f32 %v741, %v821
        %v823 = vpop.f32.mrf.mxu0
        %824 = vmatprep.mubr.bf16.mxu0 0
        %825 = vmatmul.mubr.bf16.gmra.mxu0 %v401
        %v826 = vpop.f32.mrf.mxu0
        %v827 = vadd.f32 %v746, %v826
        %v828 = vpop.f32.mrf.mxu0
        %v829 = vpop.f32.mrf.mxu0
        %v830 = vadd.f32 %v749, %v829
        %v831 = vpop.f32.mrf.mxu0
        %832 = vmatprep.mubr.bf16.mxu0 0
        %833 = vmatmul.mubr.bf16.gmra.mxu0 %v402
        %v834 = vpop.f32.mrf.mxu0
        %v835 = vadd.f32 %v754, %v834
        %v836 = vpop.f32.mrf.mxu0
        %v837 = vpop.f32.mrf.mxu0
        %v838 = vadd.f32 %v757, %v837
        %v839 = vpop.f32.mrf.mxu0
        %840 = vmatprep.mubr.bf16.mxu0 0
        %841 = vmatmul.mubr.bf16.gmra.mxu0 %v403
        %v842 = vpop.f32.mrf.mxu0
        %v843 = vadd.f32 %v762, %v842
        %v844 = vpop.f32.mrf.mxu0
        %v845 = vpop.f32.mrf.mxu0
        %v846 = vadd.f32 %v765, %v845
        %v847 = vpop.f32.mrf.mxu0
        %848 = vmatprep.mubr.bf16.mxu0 0
        %849 = vmatmul.mubr.bf16.gmra.mxu0 %v404
        %v850 = vpop.f32.mrf.mxu0
        %v851 = vadd.f32 %v770, %v850
        %v852 = vpop.f32.mrf.mxu0
        %v853 = vpop.f32.mrf.mxu0
        %v854 = vadd.f32 %v773, %v853
        %v855 = vpop.f32.mrf.mxu0
        %856 = vdwg.mxu0
        %v905 = vunpack.c.l.b16 %v454
        %v906 = vunpack.c.l.b16 %v455
        %v907 = vunpack.c.l.b16 %v456
        %v908 = vunpack.c.l.b16 %v457
        %v909 = vunpack.c.l.b16 %v458
        %v910 = vunpack.c.l.b16 %v459
        %v911 = vunpack.c.l.b16 %v460
        %v912 = vunpack.c.l.b16 %v461
        %v913 = vunpack.c.l.b16 %v462
        %v914 = vunpack.c.l.b16 %v463
        %v915 = vunpack.c.l.b16 %v464
        %v916 = vunpack.c.l.b16 %v465
        %v917 = vunpack.c.l.b16 %v466
        %v918 = vunpack.c.l.b16 %v467
        %v919 = vunpack.c.l.b16 %v468
        %v920 = vunpack.c.l.b16 %v469
        %v921 = vunpack.c.l.b16 %v470
        %v922 = vunpack.c.l.b16 %v471
        %v923 = vunpack.c.l.b16 %v472
        %v924 = vunpack.c.l.b16 %v473
        %v925 = vunpack.c.l.b16 %v474
        %v926 = vunpack.c.l.b16 %v475
        %v927 = vunpack.c.l.b16 %v476
        %v928 = vunpack.c.l.b16 %v477
        %v929 = vunpack.c.l.b16 %v478
        %v930 = vunpack.c.l.b16 %v479
        %v931 = vunpack.c.l.b16 %v480
        %v932 = vunpack.c.l.b16 %v481
        %v933 = vunpack.c.l.b16 %v482
        %v934 = vunpack.c.l.b16 %v483
        %v935 = vunpack.c.l.b16 %v484
        %v936 = vunpack.c.l.b16 %v485
        %v937 = vunpack.c.l.b16 %v486
        %v938 = vunpack.c.l.b16 %v487
        %v939 = vunpack.c.l.b16 %v488
        %v940 = vunpack.c.l.b16 %v489
        %v941 = vunpack.c.l.b16 %v490
        %v942 = vunpack.c.l.b16 %v491
        %v943 = vunpack.c.l.b16 %v492
        %v944 = vunpack.c.l.b16 %v493
        %v945 = vunpack.c.l.b16 %v494
        %v946 = vunpack.c.l.b16 %v495
        %v947 = vunpack.c.l.b16 %v496
        %v948 = vunpack.c.l.b16 %v497
        %v949 = vunpack.c.l.b16 %v498
        %v950 = vunpack.c.l.b16 %v499
        %v951 = vunpack.c.l.b16 %v500
        %v952 = vunpack.c.l.b16 %v501
        %v953 = vpack.c.b16 %v906, %v905
        %v954 = vpack.c.b16 %v908, %v907
        %v955 = vpack.c.b16 %v910, %v909
        %v956 = vpack.c.b16 %v912, %v911
        %v957 = vpack.c.b16 %v914, %v913
        %v958 = vpack.c.b16 %v916, %v915
        %v959 = vpack.c.b16 %v918, %v917
        %v960 = vpack.c.b16 %v920, %v919
        %v961 = vpack.c.b16 %v922, %v921
        %v962 = vpack.c.b16 %v924, %v923
        %v963 = vpack.c.b16 %v926, %v925
        %v964 = vpack.c.b16 %v928, %v927
        %v965 = vpack.c.b16 %v930, %v929
        %v966 = vpack.c.b16 %v932, %v931
        %v967 = vpack.c.b16 %v934, %v933
        %v968 = vpack.c.b16 %v936, %v935
        %v969 = vpack.c.b16 %v938, %v937
        %v970 = vpack.c.b16 %v940, %v939
        %v971 = vpack.c.b16 %v942, %v941
        %v972 = vpack.c.b16 %v944, %v943
        %v973 = vpack.c.b16 %v946, %v945
        %v974 = vpack.c.b16 %v948, %v947
        %v975 = vpack.c.b16 %v950, %v949
        %v976 = vpack.c.b16 %v952, %v951
        %1001 = vmatprep.subr.bf16.mxu0 0
        %1002 = vmatpush1.bf16.msra.mxu0 %v960
        %1003 = vmatprep.subr.bf16.mxu0 0
        %1004 = vmatpush1.bf16.msra.mxu0 %v959
        %1005 = vmatprep.subr.bf16.mxu0 0
        %1006 = vmatpush1.bf16.msra.mxu0 %v958
        %1007 = vmatprep.subr.bf16.mxu0 0
        %1008 = vmatpush1.bf16.msra.mxu0 %v957
        %1009 = vmatprep.subr.bf16.mxu0 0
        %1010 = vmatpush1.bf16.msra.mxu0 %v956
        %1011 = vmatprep.subr.bf16.mxu0 0
        %1012 = vmatpush1.bf16.msra.mxu0 %v955
        %1013 = vmatprep.subr.bf16.mxu0 0
        %1014 = vmatpush1.bf16.msra.mxu0 %v954
        %1015 = vmatprep.subr.bf16.mxu0 0
        %1016 = vmatpush1.bf16.msra.mxu0 %v953
        %1017 = vmatprep.subr.bf16.mxu0 0
        %1018 = vmatpush2.bf16.msra.mxu0 %v968
        %1019 = vmatprep.subr.bf16.mxu0 0
        %1020 = vmatpush2.bf16.msra.mxu0 %v967
        %1021 = vmatprep.subr.bf16.mxu0 0
        %1022 = vmatpush2.bf16.msra.mxu0 %v966
        %1023 = vmatprep.subr.bf16.mxu0 0
        %1024 = vmatpush2.bf16.msra.mxu0 %v965
        %1025 = vmatprep.subr.bf16.mxu0 0
        %1026 = vmatpush2.bf16.msra.mxu0 %v964
        %1027 = vmatprep.subr.bf16.mxu0 0
        %1028 = vmatpush2.bf16.msra.mxu0 %v963
        %1029 = vmatprep.subr.bf16.mxu0 0
        %1030 = vmatpush2.bf16.msra.mxu0 %v962
        %1031 = vmatprep.subr.bf16.mxu0 0
        %1032 = vmatpush2.bf16.msra.mxu0 %v961
        %1033 = vmatprep.mubr.bf16.mxu0 %v438
        %1034 = vmatmul.mubr.bf16.gmra.mxu0 %v370
        %v1035 = vpop.f32.mrf.mxu0
        %v1036 = vadd.f32 %v811, %v1035
        %v1037 = vpop.f32.mrf.mxu0
        %v1038 = vpop.f32.mrf.mxu0
        %v1039 = vadd.f32 %v814, %v1038
        %v1040 = vpop.f32.mrf.mxu0
        %1041 = vmatprep.mubr.bf16.mxu0 %v439
        %1042 = vmatmul.mubr.bf16.gmra.mxu0 %v371
        %v1043 = vpop.f32.mrf.mxu0
        %v1044 = vadd.f32 %v819, %v1043
        %v1045 = vpop.f32.mrf.mxu0
        %v1046 = vpop.f32.mrf.mxu0
        %v1047 = vadd.f32 %v822, %v1046
        %v1048 = vpop.f32.mrf.mxu0
        %1049 = vmatprep.mubr.bf16.mxu0 %v440
        %1050 = vmatmul.mubr.bf16.gmra.mxu0 %v372
        %v1051 = vpop.f32.mrf.mxu0
        %v1052 = vadd.f32 %v827, %v1051
        %v1053 = vpop.f32.mrf.mxu0
        %v1054 = vpop.f32.mrf.mxu0
        %v1055 = vadd.f32 %v830, %v1054
        %v1056 = vpop.f32.mrf.mxu0
        %1057 = vmatprep.mubr.bf16.mxu0 %v441
        %1058 = vmatmul.mubr.bf16.gmra.mxu0 %v373
        %v1059 = vpop.f32.mrf.mxu0
        %v1060 = vadd.f32 %v835, %v1059
        %v1061 = vpop.f32.mrf.mxu0
        %v1062 = vpop.f32.mrf.mxu0
        %v1063 = vadd.f32 %v838, %v1062
        %v1064 = vpop.f32.mrf.mxu0
        %1065 = vmatprep.mubr.bf16.mxu0 %v442
        %1066 = vmatmul.mubr.bf16.gmra.mxu0 %v374
        %v1067 = vpop.f32.mrf.mxu0
        %v1068 = vadd.f32 %v843, %v1067
        %v1069 = vpop.f32.mrf.mxu0
        %v1070 = vpop.f32.mrf.mxu0
        %v1071 = vadd.f32 %v846, %v1070
        %v1072 = vpop.f32.mrf.mxu0
        %1073 = vmatprep.mubr.bf16.mxu0 %v443
        %1074 = vmatmul.mubr.bf16.gmra.mxu0 %v375
        %v1075 = vpop.f32.mrf.mxu0
        %v1076 = vadd.f32 %v851, %v1075
        %v1077 = vpop.f32.mrf.mxu0
        %v1078 = vpop.f32.mrf.mxu0
        %v1079 = vadd.f32 %v854, %v1078
        %v1080 = vpop.f32.mrf.mxu0
        %1081 = vdwg.mxu0
        %1082 = vmatprep.subr.bf16.mxu0 0
        %1083 = vmatpush1.bf16.msra.mxu0 %v976
        %1084 = vmatprep.subr.bf16.mxu0 0
        %1085 = vmatpush1.bf16.msra.mxu0 %v975
        %1086 = vmatprep.subr.bf16.mxu0 0
        %1087 = vmatpush1.bf16.msra.mxu0 %v974
        %1088 = vmatprep.subr.bf16.mxu0 0
        %1089 = vmatpush1.bf16.msra.mxu0 %v973
        %1090 = vmatprep.subr.bf16.mxu0 0
        %1091 = vmatpush1.bf16.msra.mxu0 %v972
        %1092 = vmatprep.subr.bf16.mxu0 0
        %1093 = vmatpush1.bf16.msra.mxu0 %v971
        %1094 = vmatprep.subr.bf16.mxu0 0
        %1095 = vmatpush1.bf16.msra.mxu0 %v970
        %1096 = vmatprep.subr.bf16.mxu0 0
        %1097 = vmatpush1.bf16.msra.mxu0 %v969
        %1098 = vmatprep.subr.bf16.mxu0 0
        %1099 = vmatpush2.bf16.msra.mxu0 0
        %1100 = vmatprep.subr.bf16.mxu0 0
        %1101 = vmatpush2.bf16.msra.mxu0 0
        %1102 = vmatprep.subr.bf16.mxu0 0
        %1103 = vmatpush2.bf16.msra.mxu0 0
        %1104 = vmatprep.subr.bf16.mxu0 0
        %1105 = vmatpush2.bf16.msra.mxu0 0
        %1106 = vmatprep.subr.bf16.mxu0 0
        %1107 = vmatpush2.bf16.msra.mxu0 0
        %1108 = vmatprep.subr.bf16.mxu0 0
        %1109 = vmatpush2.bf16.msra.mxu0 0
        %1110 = vmatprep.subr.bf16.mxu0 0
        %1111 = vmatpush2.bf16.msra.mxu0 0
        %1112 = vmatprep.subr.bf16.mxu0 0
        %1113 = vmatpush2.bf16.msra.mxu0 0
        %1114 = vmatprep.mubr.bf16.mxu0 0
        %1115 = vmatmul.mubr.bf16.gmra.mxu0 %v398
        %v1116 = vpop.f32.mrf.mxu0
        %v1117 = vadd.f32 %v1036, %v1116
        %v1118 = vpop.f32.mrf.mxu0
        %v1119 = vpop.f32.mrf.mxu0
        %v1120 = vadd.f32 %v1039, %v1119
        %v1121 = vpop.f32.mrf.mxu0
        %1122 = vmatprep.mubr.bf16.mxu0 0
        %1123 = vmatmul.mubr.bf16.gmra.mxu0 %v399
        %v1124 = vpop.f32.mrf.mxu0
        %v1125 = vadd.f32 %v1044, %v1124
        %v1126 = vpop.f32.mrf.mxu0
        %v1127 = vpop.f32.mrf.mxu0
        %v1128 = vadd.f32 %v1047, %v1127
        %v1129 = vpop.f32.mrf.mxu0
        %1130 = vmatprep.mubr.bf16.mxu0 0
        %1131 = vmatmul.mubr.bf16.gmra.mxu0 %v400
        %v1132 = vpop.f32.mrf.mxu0
        %v1133 = vadd.f32 %v1052, %v1132
        %v1134 = vpop.f32.mrf.mxu0
        %v1135 = vpop.f32.mrf.mxu0
        %v1136 = vadd.f32 %v1055, %v1135
        %v1137 = vpop.f32.mrf.mxu0
        %1138 = vmatprep.mubr.bf16.mxu0 0
        %1139 = vmatmul.mubr.bf16.gmra.mxu0 %v401
        %v1140 = vpop.f32.mrf.mxu0
        %v1141 = vadd.f32 %v1060, %v1140
        %v1142 = vpop.f32.mrf.mxu0
        %v1143 = vpop.f32.mrf.mxu0
        %v1144 = vadd.f32 %v1063, %v1143
        %v1145 = vpop.f32.mrf.mxu0
        %1146 = vmatprep.mubr.bf16.mxu0 0
        %1147 = vmatmul.mubr.bf16.gmra.mxu0 %v402
        %v1148 = vpop.f32.mrf.mxu0
        %v1149 = vadd.f32 %v1068, %v1148
        %v1150 = vpop.f32.mrf.mxu0
        %v1151 = vpop.f32.mrf.mxu0
        %v1152 = vadd.f32 %v1071, %v1151
        %v1153 = vpop.f32.mrf.mxu0
        %1154 = vmatprep.mubr.bf16.mxu0 0
        %1155 = vmatmul.mubr.bf16.gmra.mxu0 %v403
        %v1156 = vpop.f32.mrf.mxu0
        %v1157 = vadd.f32 %v1076, %v1156
        %v1158 = vpop.f32.mrf.mxu0
        %v1159 = vpop.f32.mrf.mxu0
        %v1160 = vadd.f32 %v1079, %v1159
        %v1161 = vpop.f32.mrf.mxu0
        %1162 = vdwg.mxu0
        %s1163 = scalar_lea.vmem [#allocation5], 384
        %v1164 = vld [vmem:[%s1163] sm:$0xf]
        %v1165 = vld [vmem:[%s1163 + $0x4] sm:$0xf]
        %v1166 = vld [vmem:[%s1163 + $0x8] sm:$0xf]
        %v1167 = vld [vmem:[%s1163 + $0xc] sm:$0xf]
        %v1168 = vld [vmem:[%s1163 + $0x10] sm:$0xf]
        %v1169 = vld [vmem:[%s1163 + $0x14] sm:$0xf]
        %v1170 = vld [vmem:[%s1163 + $0x18] sm:$0xf]
        %v1171 = vld [vmem:[%s1163 + $0x1c] sm:$0xf]
        %v1172 = vld [vmem:[%s1163 + $0x20] sm:$0xf]
        %v1173 = vld [vmem:[%s1163 + $0x24] sm:$0xf]
        %v1174 = vld [vmem:[%s1163 + $0x28] sm:$0xf]
        %v1175 = vld [vmem:[%s1163 + $0x2c] sm:$0xf]
        %v1176 = vld [vmem:[%s1163 + $0x30] sm:$0xf]
        %v1177 = vld [vmem:[%s1163 + $0x34] sm:$0xf]
        %v1178 = vld [vmem:[%s1163 + $0x38] sm:$0xf]
        %v1179 = vld [vmem:[%s1163 + $0x3c] sm:$0xf]
        %v1180 = vld [vmem:[%s1163 + $0x40] sm:$0xf]
        %v1181 = vld [vmem:[%s1163 + $0x44] sm:$0xf]
        %v1182 = vld [vmem:[%s1163 + $0x48] sm:$0xf]
        %v1183 = vld [vmem:[%s1163 + $0x4c] sm:$0xf]
        %v1184 = vld [vmem:[%s1163 + $0x50] sm:$0xf]
        %v1185 = vld [vmem:[%s1163 + $0x54] sm:$0xf]
        %v1186 = vld [vmem:[%s1163 + $0x58] sm:$0xf]
        %v1187 = vld [vmem:[%s1163 + $0x5c] sm:$0xf]
        %v1188 = vld [vmem:[%s1163 + $0x60] sm:$0xf]
        %v1189 = vld [vmem:[%s1163 + $0x64] sm:$0xf]
        %v1190 = vld [vmem:[%s1163 + $0x68] sm:$0xf]
        %v1191 = vld [vmem:[%s1163 + $0x6c] sm:$0xf]
        %v1192 = vld [vmem:[%s1163 + $0x70] sm:$0xf]
        %v1193 = vld [vmem:[%s1163 + $0x74] sm:$0xf]
        %v1194 = vld [vmem:[%s1163 + $0x78] sm:$0xf]
        %v1195 = vld [vmem:[%s1163 + $0x7c] sm:$0xf]
        %v1196 = vld [vmem:[%s1163 + $0x80] sm:$0xf]
        %v1197 = vld [vmem:[%s1163 + $0x84] sm:$0xf]
        %v1198 = vld [vmem:[%s1163 + $0x88] sm:$0xf]
        %v1199 = vld [vmem:[%s1163 + $0x8c] sm:$0xf]
        %v1200 = vld [vmem:[%s1163 + $0x90] sm:$0xf]
        %v1201 = vld [vmem:[%s1163 + $0x94] sm:$0xf]
        %v1202 = vld [vmem:[%s1163 + $0x98] sm:$0xf]
        %v1203 = vld [vmem:[%s1163 + $0x9c] sm:$0xf]
        %v1204 = vld [vmem:[%s1163 + $0xa0] sm:$0xf]
        %v1205 = vld [vmem:[%s1163 + $0xa4] sm:$0xf]
        %v1206 = vld [vmem:[%s1163 + $0xa8] sm:$0xf]
        %v1207 = vld [vmem:[%s1163 + $0xac] sm:$0xf]
        %v1208 = vld [vmem:[%s1163 + $0xb0] sm:$0xf]
        %v1209 = vld [vmem:[%s1163 + $0xb4] sm:$0xf]
        %v1210 = vld [vmem:[%s1163 + $0xb8] sm:$0xf]
        %v1211 = vld [vmem:[%s1163 + $0xbc] sm:$0xf]
        %v1260 = vunpack.c.l.b16 %v1164
        %v1261 = vunpack.c.l.b16 %v1165
        %v1262 = vunpack.c.l.b16 %v1166
        %v1263 = vunpack.c.l.b16 %v1167
        %v1264 = vunpack.c.l.b16 %v1168
        %v1265 = vunpack.c.l.b16 %v1169
        %v1266 = vunpack.c.l.b16 %v1170
        %v1267 = vunpack.c.l.b16 %v1171
        %v1268 = vunpack.c.l.b16 %v1172
        %v1269 = vunpack.c.l.b16 %v1173
        %v1270 = vunpack.c.l.b16 %v1174
        %v1271 = vunpack.c.l.b16 %v1175
        %v1272 = vunpack.c.l.b16 %v1176
        %v1273 = vunpack.c.l.b16 %v1177
        %v1274 = vunpack.c.l.b16 %v1178
        %v1275 = vunpack.c.l.b16 %v1179
        %v1276 = vunpack.c.l.b16 %v1180
        %v1277 = vunpack.c.l.b16 %v1181
        %v1278 = vunpack.c.l.b16 %v1182
        %v1279 = vunpack.c.l.b16 %v1183
        %v1280 = vunpack.c.l.b16 %v1184
        %v1281 = vunpack.c.l.b16 %v1185
        %v1282 = vunpack.c.l.b16 %v1186
        %v1283 = vunpack.c.l.b16 %v1187
        %v1284 = vunpack.c.l.b16 %v1188
        %v1285 = vunpack.c.l.b16 %v1189
        %v1286 = vunpack.c.l.b16 %v1190
        %v1287 = vunpack.c.l.b16 %v1191
        %v1288 = vunpack.c.l.b16 %v1192
        %v1289 = vunpack.c.l.b16 %v1193
        %v1290 = vunpack.c.l.b16 %v1194
        %v1291 = vunpack.c.l.b16 %v1195
        %v1292 = vunpack.c.l.b16 %v1196
        %v1293 = vunpack.c.l.b16 %v1197
        %v1294 = vunpack.c.l.b16 %v1198
        %v1295 = vunpack.c.l.b16 %v1199
        %v1296 = vunpack.c.l.b16 %v1200
        %v1297 = vunpack.c.l.b16 %v1201
        %v1298 = vunpack.c.l.b16 %v1202
        %v1299 = vunpack.c.l.b16 %v1203
        %v1300 = vunpack.c.l.b16 %v1204
        %v1301 = vunpack.c.l.b16 %v1205
        %v1302 = vunpack.c.l.b16 %v1206
        %v1303 = vunpack.c.l.b16 %v1207
        %v1304 = vunpack.c.l.b16 %v1208
        %v1305 = vunpack.c.l.b16 %v1209
        %v1306 = vunpack.c.l.b16 %v1210
        %v1307 = vunpack.c.l.b16 %v1211
        %v1308 = vpack.c.b16 %v1261, %v1260
        %v1309 = vpack.c.b16 %v1263, %v1262
        %v1310 = vpack.c.b16 %v1265, %v1264
        %v1311 = vpack.c.b16 %v1267, %v1266
        %v1312 = vpack.c.b16 %v1269, %v1268
        %v1313 = vpack.c.b16 %v1271, %v1270
        %v1314 = vpack.c.b16 %v1273, %v1272
        %v1315 = vpack.c.b16 %v1275, %v1274
        %v1316 = vpack.c.b16 %v1277, %v1276
        %v1317 = vpack.c.b16 %v1279, %v1278
        %v1318 = vpack.c.b16 %v1281, %v1280
        %v1319 = vpack.c.b16 %v1283, %v1282
        %v1320 = vpack.c.b16 %v1285, %v1284
        %v1321 = vpack.c.b16 %v1287, %v1286
        %v1322 = vpack.c.b16 %v1289, %v1288
        %v1323 = vpack.c.b16 %v1291, %v1290
        %v1324 = vpack.c.b16 %v1293, %v1292
        %v1325 = vpack.c.b16 %v1295, %v1294
        %v1326 = vpack.c.b16 %v1297, %v1296
        %v1327 = vpack.c.b16 %v1299, %v1298
        %v1328 = vpack.c.b16 %v1301, %v1300
        %v1329 = vpack.c.b16 %v1303, %v1302
        %v1330 = vpack.c.b16 %v1305, %v1304
        %v1331 = vpack.c.b16 %v1307, %v1306
        %1356 = vmatprep.subr.bf16.mxu0 0
        %1357 = vmatpush1.bf16.msra.mxu0 %v1315
        %1358 = vmatprep.subr.bf16.mxu0 0
        %1359 = vmatpush1.bf16.msra.mxu0 %v1314
        %1360 = vmatprep.subr.bf16.mxu0 0
        %1361 = vmatpush1.bf16.msra.mxu0 %v1313
        %1362 = vmatprep.subr.bf16.mxu0 0
        %1363 = vmatpush1.bf16.msra.mxu0 %v1312
        %1364 = vmatprep.subr.bf16.mxu0 0
        %1365 = vmatpush1.bf16.msra.mxu0 %v1311
        %1366 = vmatprep.subr.bf16.mxu0 0
        %1367 = vmatpush1.bf16.msra.mxu0 %v1310
        %1368 = vmatprep.subr.bf16.mxu0 0
        %1369 = vmatpush1.bf16.msra.mxu0 %v1309
        %1370 = vmatprep.subr.bf16.mxu0 0
        %1371 = vmatpush1.bf16.msra.mxu0 %v1308
        %1372 = vmatprep.subr.bf16.mxu0 0
        %1373 = vmatpush2.bf16.msra.mxu0 %v1323
        %1374 = vmatprep.subr.bf16.mxu0 0
        %1375 = vmatpush2.bf16.msra.mxu0 %v1322
        %1376 = vmatprep.subr.bf16.mxu0 0
        %1377 = vmatpush2.bf16.msra.mxu0 %v1321
        %1378 = vmatprep.subr.bf16.mxu0 0
        %1379 = vmatpush2.bf16.msra.mxu0 %v1320
        %1380 = vmatprep.subr.bf16.mxu0 0
        %1381 = vmatpush2.bf16.msra.mxu0 %v1319
        %1382 = vmatprep.subr.bf16.mxu0 0
        %1383 = vmatpush2.bf16.msra.mxu0 %v1318
        %1384 = vmatprep.subr.bf16.mxu0 0
        %1385 = vmatpush2.bf16.msra.mxu0 %v1317
        %1386 = vmatprep.subr.bf16.mxu0 0
        %1387 = vmatpush2.bf16.msra.mxu0 %v1316
        %1388 = vmatprep.mubr.bf16.mxu0 %v440
        %1389 = vmatmul.mubr.bf16.gmra.mxu0 %v372
        %v1390 = vpop.f32.mrf.mxu0
        %v1391 = vadd.f32 0.0, %v1390
        %v1392 = vpop.f32.mrf.mxu0
        %v1393 = vpop.f32.mrf.mxu0
        %v1394 = vadd.f32 0.0, %v1393
        %v1395 = vpop.f32.mrf.mxu0
        %1396 = vmatprep.mubr.bf16.mxu0 %v441
        %1397 = vmatmul.mubr.bf16.gmra.mxu0 %v373
        %v1398 = vpop.f32.mrf.mxu0
        %v1399 = vadd.f32 0.0, %v1398
        %v1400 = vpop.f32.mrf.mxu0
        %v1401 = vpop.f32.mrf.mxu0
        %v1402 = vadd.f32 0.0, %v1401
        %v1403 = vpop.f32.mrf.mxu0
        %1404 = vmatprep.mubr.bf16.mxu0 %v442
        %1405 = vmatmul.mubr.bf16.gmra.mxu0 %v374
        %v1406 = vpop.f32.mrf.mxu0
        %v1407 = vadd.f32 0.0, %v1406
        %v1408 = vpop.f32.mrf.mxu0
        %v1409 = vpop.f32.mrf.mxu0
        %v1410 = vadd.f32 0.0, %v1409
        %v1411 = vpop.f32.mrf.mxu0
        %1412 = vmatprep.mubr.bf16.mxu0 %v443
        %1413 = vmatmul.mubr.bf16.gmra.mxu0 %v375
        %v1414 = vpop.f32.mrf.mxu0
        %v1415 = vadd.f32 0.0, %v1414
        %v1416 = vpop.f32.mrf.mxu0
        %v1417 = vpop.f32.mrf.mxu0
        %v1418 = vadd.f32 0.0, %v1417
        %v1419 = vpop.f32.mrf.mxu0
        %1420 = vmatprep.mubr.bf16.mxu0 %v444
        %1421 = vmatmul.mubr.bf16.gmra.mxu0 %v376
        %v1422 = vpop.f32.mrf.mxu0
        %v1423 = vadd.f32 0.0, %v1422
        %v1424 = vpop.f32.mrf.mxu0
        %v1425 = vpop.f32.mrf.mxu0
        %v1426 = vadd.f32 0.0, %v1425
        %v1427 = vpop.f32.mrf.mxu0
        %1428 = vmatprep.mubr.bf16.mxu0 %v445
        %1429 = vmatmul.mubr.bf16.gmra.mxu0 %v377
        %v1430 = vpop.f32.mrf.mxu0
        %v1431 = vadd.f32 0.0, %v1430
        %v1432 = vpop.f32.mrf.mxu0
        %v1433 = vpop.f32.mrf.mxu0
        %v1434 = vadd.f32 0.0, %v1433
        %v1435 = vpop.f32.mrf.mxu0
        %1436 = vdwg.mxu0
        %1437 = vmatprep.subr.bf16.mxu0 0
        %1438 = vmatpush1.bf16.msra.mxu0 %v1331
        %1439 = vmatprep.subr.bf16.mxu0 0
        %1440 = vmatpush1.bf16.msra.mxu0 %v1330
        %1441 = vmatprep.subr.bf16.mxu0 0
        %1442 = vmatpush1.bf16.msra.mxu0 %v1329
        %1443 = vmatprep.subr.bf16.mxu0 0
        %1444 = vmatpush1.bf16.msra.mxu0 %v1328
        %1445 = vmatprep.subr.bf16.mxu0 0
        %1446 = vmatpush1.bf16.msra.mxu0 %v1327
        %1447 = vmatprep.subr.bf16.mxu0 0
        %1448 = vmatpush1.bf16.msra.mxu0 %v1326
        %1449 = vmatprep.subr.bf16.mxu0 0
        %1450 = vmatpush1.bf16.msra.mxu0 %v1325
        %1451 = vmatprep.subr.bf16.mxu0 0
        %1452 = vmatpush1.bf16.msra.mxu0 %v1324
        %1453 = vmatprep.subr.bf16.mxu0 0
        %1454 = vmatpush2.bf16.msra.mxu0 0
        %1455 = vmatprep.subr.bf16.mxu0 0
        %1456 = vmatpush2.bf16.msra.mxu0 0
        %1457 = vmatprep.subr.bf16.mxu0 0
        %1458 = vmatpush2.bf16.msra.mxu0 0
        %1459 = vmatprep.subr.bf16.mxu0 0
        %1460 = vmatpush2.bf16.msra.mxu0 0
        %1461 = vmatprep.subr.bf16.mxu0 0
        %1462 = vmatpush2.bf16.msra.mxu0 0
        %1463 = vmatprep.subr.bf16.mxu0 0
        %1464 = vmatpush2.bf16.msra.mxu0 0
        %1465 = vmatprep.subr.bf16.mxu0 0
        %1466 = vmatpush2.bf16.msra.mxu0 0
        %1467 = vmatprep.subr.bf16.mxu0 0
        %1468 = vmatpush2.bf16.msra.mxu0 0
        %1469 = vmatprep.mubr.bf16.mxu0 0
        %1470 = vmatmul.mubr.bf16.gmra.mxu0 %v400
        %v1471 = vpop.f32.mrf.mxu0
        %v1472 = vadd.f32 %v1391, %v1471
        %v1473 = vpop.f32.mrf.mxu0
        %v1474 = vpop.f32.mrf.mxu0
        %v1475 = vadd.f32 %v1394, %v1474
        %v1476 = vpop.f32.mrf.mxu0
        %1477 = vmatprep.mubr.bf16.mxu0 0
        %1478 = vmatmul.mubr.bf16.gmra.mxu0 %v401
        %v1479 = vpop.f32.mrf.mxu0
        %v1480 = vadd.f32 %v1399, %v1479
        %v1481 = vpop.f32.mrf.mxu0
        %v1482 = vpop.f32.mrf.mxu0
        %v1483 = vadd.f32 %v1402, %v1482
        %v1484 = vpop.f32.mrf.mxu0
        %1485 = vmatprep.mubr.bf16.mxu0 0
        %1486 = vmatmul.mubr.bf16.gmra.mxu0 %v402
        %v1487 = vpop.f32.mrf.mxu0
        %v1488 = vadd.f32 %v1407, %v1487
        %v1489 = vpop.f32.mrf.mxu0
        %v1490 = vpop.f32.mrf.mxu0
        %v1491 = vadd.f32 %v1410, %v1490
        %v1492 = vpop.f32.mrf.mxu0
        %1493 = vmatprep.mubr.bf16.mxu0 0
        %1494 = vmatmul.mubr.bf16.gmra.mxu0 %v403
        %v1495 = vpop.f32.mrf.mxu0
        %v1496 = vadd.f32 %v1415, %v1495
        %v1497 = vpop.f32.mrf.mxu0
        %v1498 = vpop.f32.mrf.mxu0
        %v1499 = vadd.f32 %v1418, %v1498
        %v1500 = vpop.f32.mrf.mxu0
        %1501 = vmatprep.mubr.bf16.mxu0 0
        %1502 = vmatmul.mubr.bf16.gmra.mxu0 %v404
        %v1503 = vpop.f32.mrf.mxu0
        %v1504 = vadd.f32 %v1423, %v1503
        %v1505 = vpop.f32.mrf.mxu0
        %v1506 = vpop.f32.mrf.mxu0
        %v1507 = vadd.f32 %v1426, %v1506
        %v1508 = vpop.f32.mrf.mxu0
        %1509 = vmatprep.mubr.bf16.mxu0 0
        %1510 = vmatmul.mubr.bf16.gmra.mxu0 %v405
        %v1511 = vpop.f32.mrf.mxu0
        %v1512 = vadd.f32 %v1431, %v1511
        %v1513 = vpop.f32.mrf.mxu0
        %v1514 = vpop.f32.mrf.mxu0
        %v1515 = vadd.f32 %v1434, %v1514
        %v1516 = vpop.f32.mrf.mxu0
        %1517 = vdwg.mxu0
        %v1518 = vadd.f32 %v1117, %v1472
        %v1519 = vadd.f32 %v1120, %v1475
        %v1520 = vadd.f32 %v1125, %v1480
        %v1521 = vadd.f32 %v1128, %v1483
        %v1522 = vadd.f32 %v1133, %v1488
        %v1523 = vadd.f32 %v1136, %v1491
        %v1524 = vadd.f32 %v1141, %v1496
        %v1525 = vadd.f32 %v1144, %v1499
        %v1526 = vadd.f32 %v1149, %v1504
        %v1527 = vadd.f32 %v1152, %v1507
        %v1528 = vadd.f32 %v1157, %v1512
        %v1529 = vadd.f32 %v1160, %v1515
        %v1530 = vld [vmem:[%s2] sm:$0x1]
        %v1532 = vlaneseq
        %v1533 = vshrl.u32 %v1532, 7
        %v1534 = vsub.s32 0, %v1533
        %v1535 = vrot.slane %v1530, %v1534
        %v1537 = vadd.f32 %v1518, %v1535
        %v1538 = vadd.f32 %v1519, %v1535
        %v1539 = vadd.f32 %v1520, %v1535
        %v1540 = vadd.f32 %v1521, %v1535
        %v1541 = vadd.f32 %v1522, %v1535
        %v1542 = vadd.f32 %v1523, %v1535
        %v1543 = vadd.f32 %v1524, %v1535
        %v1544 = vadd.f32 %v1525, %v1535
        %v1545 = vadd.f32 %v1526, %v1535
        %v1546 = vadd.f32 %v1527, %v1535
        %v1547 = vadd.f32 %v1528, %v1535
        %v1548 = vadd.f32 %v1529, %v1535
        %v1549 = vmul.f32 %v1537, 0.5
        %v1550 = vmul.f32 %v1538, 0.5
        %v1551 = vmul.f32 %v1539, 0.5
        %v1552 = vmul.f32 %v1540, 0.5
        %v1553 = vmul.f32 %v1541, 0.5
        %v1554 = vmul.f32 %v1542, 0.5
        %v1555 = vmul.f32 %v1543, 0.5
        %v1556 = vmul.f32 %v1544, 0.5
        %v1557 = vmul.f32 %v1545, 0.5
        %v1558 = vmul.f32 %v1546, 0.5
        %v1559 = vmul.f32 %v1547, 0.5
        %v1560 = vmul.f32 %v1548, 0.5
        %v1561 = vmul.f32 %v1537, 0.044715
        %v1562 = vmul.f32 %v1538, 0.044715
        %v1563 = vmul.f32 %v1539, 0.044715
        %v1564 = vmul.f32 %v1540, 0.044715
        %v1565 = vmul.f32 %v1541, 0.044715
        %v1566 = vmul.f32 %v1542, 0.044715
        %v1567 = vmul.f32 %v1543, 0.044715
        %v1568 = vmul.f32 %v1544, 0.044715
        %v1569 = vmul.f32 %v1545, 0.044715
        %v1570 = vmul.f32 %v1546, 0.044715
        %v1571 = vmul.f32 %v1547, 0.044715
        %v1572 = vmul.f32 %v1548, 0.044715
        %v1573 = vmul.f32 %v1561, %v1537
        %v1574 = vmul.f32 %v1562, %v1538
        %v1575 = vmul.f32 %v1563, %v1539
        %v1576 = vmul.f32 %v1564, %v1540
        %v1577 = vmul.f32 %v1565, %v1541
        %v1578 = vmul.f32 %v1566, %v1542
        %v1579 = vmul.f32 %v1567, %v1543
        %v1580 = vmul.f32 %v1568, %v1544
        %v1581 = vmul.f32 %v1569, %v1545
        %v1582 = vmul.f32 %v1570, %v1546
        %v1583 = vmul.f32 %v1571, %v1547
        %v1584 = vmul.f32 %v1572, %v1548
        %v1585 = vmul.f32 %v1573, %v1537
        %v1586 = vmul.f32 %v1574, %v1538
        %v1587 = vmul.f32 %v1575, %v1539
        %v1588 = vmul.f32 %v1576, %v1540
        %v1589 = vmul.f32 %v1577, %v1541
        %v1590 = vmul.f32 %v1578, %v1542
        %v1591 = vmul.f32 %v1579, %v1543
        %v1592 = vmul.f32 %v1580, %v1544
        %v1593 = vmul.f32 %v1581, %v1545
        %v1594 = vmul.f32 %v1582, %v1546
        %v1595 = vmul.f32 %v1583, %v1547
        %v1596 = vmul.f32 %v1584, %v1548
        %v1597 = vadd.f32 %v1537, %v1585
        %v1598 = vadd.f32 %v1538, %v1586
        %v1599 = vadd.f32 %v1539, %v1587
        %v1600 = vadd.f32 %v1540, %v1588
        %v1601 = vadd.f32 %v1541, %v1589
        %v1602 = vadd.f32 %v1542, %v1590
        %v1603 = vadd.f32 %v1543, %v1591
        %v1604 = vadd.f32 %v1544, %v1592
        %v1605 = vadd.f32 %v1545, %v1593
        %v1606 = vadd.f32 %v1546, %v1594
        %v1607 = vadd.f32 %v1547, %v1595
        %v1608 = vadd.f32 %v1548, %v1596
        %v1609 = vmul.f32 %v1597, 0.7978846
        %v1610 = vmul.f32 %v1598, 0.7978846
        %v1611 = vmul.f32 %v1599, 0.7978846
        %v1612 = vmul.f32 %v1600, 0.7978846
        %v1613 = vmul.f32 %v1601, 0.7978846
        %v1614 = vmul.f32 %v1602, 0.7978846
        %v1615 = vmul.f32 %v1603, 0.7978846
        %v1616 = vmul.f32 %v1604, 0.7978846
        %v1617 = vmul.f32 %v1605, 0.7978846
        %v1618 = vmul.f32 %v1606, 0.7978846
        %v1619 = vmul.f32 %v1607, 0.7978846
        %v1620 = vmul.f32 %v1608, 0.7978846
        %v1621 = vtanh.pop %v1609
        %v1622 = vtanh.pop %v1610
        %v1623 = vtanh.pop %v1611
        %v1624 = vtanh.pop %v1612
        %v1625 = vtanh.pop %v1613
        %v1626 = vtanh.pop %v1614
        %v1627 = vtanh.pop %v1615
        %v1628 = vtanh.pop %v1616
        %v1629 = vtanh.pop %v1617
        %v1630 = vtanh.pop %v1618
        %v1631 = vtanh.pop %v1619
        %v1632 = vtanh.pop %v1620
        %v1633 = vadd.f32 %v1621, 1.0
        %v1634 = vadd.f32 %v1622, 1.0
        %v1635 = vadd.f32 %v1623, 1.0
        %v1636 = vadd.f32 %v1624, 1.0
        %v1637 = vadd.f32 %v1625, 1.0
        %v1638 = vadd.f32 %v1626, 1.0
        %v1639 = vadd.f32 %v1627, 1.0
        %v1640 = vadd.f32 %v1628, 1.0
        %v1641 = vadd.f32 %v1629, 1.0
        %v1642 = vadd.f32 %v1630, 1.0
        %v1643 = vadd.f32 %v1631, 1.0
        %v1644 = vadd.f32 %v1632, 1.0
        %v1645 = vmul.f32 %v1549, %v1633
        %v1646 = vmul.f32 %v1550, %v1634
        %v1647 = vmul.f32 %v1551, %v1635
        %v1648 = vmul.f32 %v1552, %v1636
        %v1649 = vmul.f32 %v1553, %v1637
        %v1650 = vmul.f32 %v1554, %v1638
        %v1651 = vmul.f32 %v1555, %v1639
        %v1652 = vmul.f32 %v1556, %v1640
        %v1653 = vmul.f32 %v1557, %v1641
        %v1654 = vmul.f32 %v1558, %v1642
        %v1655 = vmul.f32 %v1559, %v1643
        %v1656 = vmul.f32 %v1560, %v1644
        %v1657 = vrot.slane %v1645, 7
        %v1658 = vrot.slane %v1646, 7
        %v1659 = vrot.slane %v1647, 7
        %v1660 = vrot.slane %v1648, 7
        %v1661 = vrot.slane %v1649, 7
        %v1662 = vrot.slane %v1650, 7
        %v1663 = vrot.slane %v1651, 7
        %v1664 = vrot.slane %v1652, 7
        %v1665 = vrot.slane %v1653, 7
        %v1666 = vrot.slane %v1654, 7
        %v1667 = vrot.slane %v1655, 7
        %v1668 = vrot.slane %v1656, 7
        %v1669 = vsel %vm300, %v1667, %v1668
        %v1670 = vsel %vm300, %v1666, %v1667
        %v1671 = vsel %vm300, %v1665, %v1666
        %v1672 = vsel %vm300, %v1664, %v1665
        %v1673 = vsel %vm300, %v1663, %v1664
        %v1674 = vsel %vm300, %v1662, %v1663
        %v1675 = vsel %vm300, %v1661, %v1662
        %v1676 = vsel %vm300, %v1660, %v1661
        %v1677 = vsel %vm300, %v1659, %v1660
        %v1678 = vsel %vm300, %v1658, %v1659
        %v1679 = vsel %vm300, %v1657, %v1658
        %v1680 = vsel %vm300, %v1668, %v1657
        %v1681 = vrot.slane %v1645, 1
        %v1682 = vrot.slane %v1646, 1
        %v1683 = vrot.slane %v1647, 1
        %v1684 = vrot.slane %v1648, 1
        %v1685 = vrot.slane %v1649, 1
        %v1686 = vrot.slane %v1650, 1
        %v1687 = vrot.slane %v1651, 1
        %v1688 = vrot.slane %v1652, 1
        %v1689 = vrot.slane %v1653, 1
        %v1690 = vrot.slane %v1654, 1
        %v1691 = vrot.slane %v1655, 1
        %v1692 = vrot.slane %v1656, 1
        %v1693 = vsel %vm333, %v1691, %v1692
        %v1694 = vsel %vm333, %v1690, %v1691
        %v1695 = vsel %vm333, %v1689, %v1690
        %v1696 = vsel %vm333, %v1688, %v1689
        %v1697 = vsel %vm333, %v1687, %v1688
        %v1698 = vsel %vm333, %v1686, %v1687
        %v1699 = vsel %vm333, %v1685, %v1686
        %v1700 = vsel %vm333, %v1684, %v1685
        %v1701 = vsel %vm333, %v1683, %v1684
        %v1702 = vsel %vm333, %v1682, %v1683
        %v1703 = vsel %vm333, %v1681, %v1682
        %v1704 = vsel %vm333, %v1692, %v1681
        %v1705 = vsel %vm352, %v1680, 0.0
        %v1706 = vsel %vm353, %v1679, 0.0
        %v1707 = vsel %vm352, %v1678, 0.0
        %v1708 = vsel %vm353, %v1677, 0.0
        %v1709 = vsel %vm352, %v1676, 0.0
        %v1710 = vsel %vm353, %v1675, 0.0
        %v1711 = vsel %vm352, %v1674, 0.0
        %v1712 = vsel %vm353, %v1673, 0.0
        %v1713 = vsel %vm352, %v1672, 0.0
        %v1714 = vsel %vm353, %v1671, 0.0
        %v1715 = vsel %vm352, %v1670, 0.0
        %v1716 = vsel %vm353, %v1669, 0.0
        %v1717 = vpack.c.bf16 %v1706, %v1705
        %v1718 = vpack.c.bf16 %v1708, %v1707
        %v1719 = vpack.c.bf16 %v1710, %v1709
        %v1720 = vpack.c.bf16 %v1712, %v1711
        %v1721 = vpack.c.bf16 %v1714, %v1713
        %v1722 = vpack.c.bf16 %v1716, %v1715
        %v1723 = vsel %vm380, %v1703, 0.0
        %v1724 = vsel %vm381, %v1702, 0.0
        %v1725 = vsel %vm380, %v1701, 0.0
        %v1726 = vsel %vm381, %v1700, 0.0
        %v1727 = vsel %vm380, %v1699, 0.0
        %v1728 = vsel %vm381, %v1698, 0.0
        %v1729 = vsel %vm380, %v1697, 0.0
        %v1730 = vsel %vm381, %v1696, 0.0
        %v1731 = vsel %vm380, %v1695, 0.0
        %v1732 = vsel %vm381, %v1694, 0.0
        %v1733 = vsel %vm380, %v1693, 0.0
        %v1734 = vsel %vm381, %v1704, 0.0
        %v1735 = vpack.c.bf16 %v1724, %v1723
        %v1736 = vpack.c.bf16 %v1726, %v1725
        %v1737 = vpack.c.bf16 %v1728, %v1727
        %v1738 = vpack.c.bf16 %v1730, %v1729
        %v1739 = vpack.c.bf16 %v1732, %v1731
        %v1740 = vpack.c.bf16 %v1734, %v1733
        %v1747 = vunpack.c.l.b16 %v1717
        %v1748 = vunpack.c.h.b16 %v1717
        %v1749 = vunpack.c.l.b16 %v1718
        %v1750 = vunpack.c.h.b16 %v1718
        %v1751 = vunpack.c.l.b16 %v1719
        %v1752 = vunpack.c.h.b16 %v1719
        %v1753 = vunpack.c.l.b16 %v1720
        %v1754 = vunpack.c.h.b16 %v1720
        %v1755 = vunpack.c.l.b16 %v1721
        %v1756 = vunpack.c.h.b16 %v1721
        %v1757 = vunpack.c.l.b16 %v1722
        %v1758 = vunpack.c.h.b16 %v1722
        %v1759 = vpack.c.b16 %v1747, %v1747
        %v1760 = vpack.c.b16 %v1748, %v1748
        %v1761 = vpack.c.b16 %v1749, %v1749
        %v1762 = vpack.c.b16 %v1750, %v1750
        %v1763 = vpack.c.b16 %v1751, %v1751
        %v1764 = vpack.c.b16 %v1752, %v1752
        %v1765 = vpack.c.b16 %v1753, %v1753
        %v1766 = vpack.c.b16 %v1754, %v1754
        %v1767 = vpack.c.b16 %v1755, %v1755
        %v1768 = vpack.c.b16 %v1756, %v1756
        %v1769 = vpack.c.b16 %v1757, %v1757
        %v1770 = vpack.c.b16 %v1758, %v1758
        %1783 = vst [vmem:[#allocation3] sm:$0xf] %v1759
        %1784 = vst [vmem:[#allocation3 + $0xc] sm:$0xf] %v1760
        %1785 = vst [vmem:[#allocation3 + $0x18] sm:$0xf] %v1761
        %1786 = vst [vmem:[#allocation3 + $0x24] sm:$0xf] %v1762
        %1787 = vst [vmem:[#allocation3 + $0x30] sm:$0xf] %v1763
        %1788 = vst [vmem:[#allocation3 + $0x3c] sm:$0xf] %v1764
        %1789 = vst [vmem:[#allocation3 + $0x48] sm:$0xf] %v1765
        %1790 = vst [vmem:[#allocation3 + $0x54] sm:$0xf] %v1766
        %1791 = vst [vmem:[#allocation3 + $0x60] sm:$0xf] %v1767
        %1792 = vst [vmem:[#allocation3 + $0x6c] sm:$0xf] %v1768
        %1793 = vst [vmem:[#allocation3 + $0x78] sm:$0xf] %v1769
        %1794 = vst [vmem:[#allocation3 + $0x84] sm:$0xf] %v1770
        %v1795 = vpack.c.bf16 %v1646, %v1645
        %v1796 = vpack.c.bf16 %v1648, %v1647
        %v1797 = vpack.c.bf16 %v1650, %v1649
        %v1798 = vpack.c.bf16 %v1652, %v1651
        %v1799 = vpack.c.bf16 %v1654, %v1653
        %v1800 = vpack.c.bf16 %v1656, %v1655
        %v1807 = vunpack.c.l.b16 %v1795
        %v1808 = vunpack.c.h.b16 %v1795
        %v1809 = vunpack.c.l.b16 %v1796
        %v1810 = vunpack.c.h.b16 %v1796
        %v1811 = vunpack.c.l.b16 %v1797
        %v1812 = vunpack.c.h.b16 %v1797
        %v1813 = vunpack.c.l.b16 %v1798
        %v1814 = vunpack.c.h.b16 %v1798
        %v1815 = vunpack.c.l.b16 %v1799
        %v1816 = vunpack.c.h.b16 %v1799
        %v1817 = vunpack.c.l.b16 %v1800
        %v1818 = vunpack.c.h.b16 %v1800
        %v1819 = vpack.c.b16 %v1807, %v1807
        %v1820 = vpack.c.b16 %v1808, %v1808
        %v1821 = vpack.c.b16 %v1809, %v1809
        %v1822 = vpack.c.b16 %v1810, %v1810
        %v1823 = vpack.c.b16 %v1811, %v1811
        %v1824 = vpack.c.b16 %v1812, %v1812
        %v1825 = vpack.c.b16 %v1813, %v1813
        %v1826 = vpack.c.b16 %v1814, %v1814
        %v1827 = vpack.c.b16 %v1815, %v1815
        %v1828 = vpack.c.b16 %v1816, %v1816
        %v1829 = vpack.c.b16 %v1817, %v1817
        %v1830 = vpack.c.b16 %v1818, %v1818
        %1843 = vst [vmem:[#allocation3 + $0x4] sm:$0xf] %v1819
        %1844 = vst [vmem:[#allocation3 + $0x10] sm:$0xf] %v1820
        %1845 = vst [vmem:[#allocation3 + $0x1c] sm:$0xf] %v1821
        %1846 = vst [vmem:[#allocation3 + $0x28] sm:$0xf] %v1822
        %1847 = vst [vmem:[#allocation3 + $0x34] sm:$0xf] %v1823
        %1848 = vst [vmem:[#allocation3 + $0x40] sm:$0xf] %v1824
        %1849 = vst [vmem:[#allocation3 + $0x4c] sm:$0xf] %v1825
        %1850 = vst [vmem:[#allocation3 + $0x58] sm:$0xf] %v1826
        %1851 = vst [vmem:[#allocation3 + $0x64] sm:$0xf] %v1827
        %1852 = vst [vmem:[#allocation3 + $0x70] sm:$0xf] %v1828
        %1853 = vst [vmem:[#allocation3 + $0x7c] sm:$0xf] %v1829
        %1854 = vst [vmem:[#allocation3 + $0x88] sm:$0xf] %v1830
        %v1861 = vunpack.c.l.b16 %v1735
        %v1862 = vunpack.c.h.b16 %v1735
        %v1863 = vunpack.c.l.b16 %v1736
        %v1864 = vunpack.c.h.b16 %v1736
        %v1865 = vunpack.c.l.b16 %v1737
        %v1866 = vunpack.c.h.b16 %v1737
        %v1867 = vunpack.c.l.b16 %v1738
        %v1868 = vunpack.c.h.b16 %v1738
        %v1869 = vunpack.c.l.b16 %v1739
        %v1870 = vunpack.c.h.b16 %v1739
        %v1871 = vunpack.c.l.b16 %v1740
        %v1872 = vunpack.c.h.b16 %v1740
        %v1873 = vpack.c.b16 %v1861, %v1861
        %v1874 = vpack.c.b16 %v1862, %v1862
        %v1875 = vpack.c.b16 %v1863, %v1863
        %v1876 = vpack.c.b16 %v1864, %v1864
        %v1877 = vpack.c.b16 %v1865, %v1865
        %v1878 = vpack.c.b16 %v1866, %v1866
        %v1879 = vpack.c.b16 %v1867, %v1867
        %v1880 = vpack.c.b16 %v1868, %v1868
        %v1881 = vpack.c.b16 %v1869, %v1869
        %v1882 = vpack.c.b16 %v1870, %v1870
        %v1883 = vpack.c.b16 %v1871, %v1871
        %v1884 = vpack.c.b16 %v1872, %v1872
        %1897 = vst [vmem:[#allocation3 + $0x8] sm:$0xf] %v1873
        %1898 = vst [vmem:[#allocation3 + $0x14] sm:$0xf] %v1874
        %1899 = vst [vmem:[#allocation3 + $0x20] sm:$0xf] %v1875
        %1900 = vst [vmem:[#allocation3 + $0x2c] sm:$0xf] %v1876
        %1901 = vst [vmem:[#allocation3 + $0x38] sm:$0xf] %v1877
        %1902 = vst [vmem:[#allocation3 + $0x44] sm:$0xf] %v1878
        %1903 = vst [vmem:[#allocation3 + $0x50] sm:$0xf] %v1879
        %1904 = vst [vmem:[#allocation3 + $0x5c] sm:$0xf] %v1880
        %1905 = vst [vmem:[#allocation3 + $0x68] sm:$0xf] %v1881
        %1906 = vst [vmem:[#allocation3 + $0x74] sm:$0xf] %v1882
        %1907 = vst [vmem:[#allocation3 + $0x80] sm:$0xf] %v1883
        %1908 = vst [vmem:[#allocation3 + $0x8c] sm:$0xf] %v1884
        %p1909 = scmp.eq.s32.totalorder %s26, 0
        // Predicated region
        $region49: #{tpu_custom_call.1} parent=35 // pred_check
          %p1910 = pneg %p1909
        $region50: #{tpu_custom_call.1} parent=35 // pred_check_branch
          %1912 = sbr.rel (%p1910) target = $region52
        $region51: #{tpu_custom_call.1} parent=35 // pred_region
          %1913 = vst [vmem:[#allocation3] sm:$0xff] 0
          %1914 = vst [vmem:[#allocation3 + $0x8] sm:$0xf] 0
          %1915 = vst [vmem:[#allocation3 + $0xc] sm:$0xff] 0
          %1916 = vst [vmem:[#allocation3 + $0x14] sm:$0xf] 0
        $region52: #{tpu_custom_call.1} parent=35 // pred_fallthru
          _
        %p1917 = scmp.eq.s32.totalorder %s26, 3
        // Predicated region
        $region53: #{tpu_custom_call.1} parent=35 // pred_check
          %p1918 = pneg %p1917
        $region54: #{tpu_custom_call.1} parent=35 // pred_check_branch
          %1920 = sbr.rel (%p1918) target = $region56
        $region55: #{tpu_custom_call.1} parent=35 // pred_region
          %s1921 = scalar_lea.vmem [#allocation3], 120
          %1922 = vst [vmem:[%s1921] sm:$0xff] 0
          %1923 = vst [vmem:[%s1921 + $0x8] sm:$0xf] 0
          %1924 = vst [vmem:[%s1921 + $0xc] sm:$0xff] 0
          %1925 = vst [vmem:[%s1921 + $0x14] sm:$0xf] 0
        $region56: #{tpu_custom_call.1} parent=35 // pred_fallthru
          _
        %v1926 = vld [vmem:[#allocation3] sm:$0xff]
        %v1927 = vld [vmem:[#allocation3 + $0x8] sm:$0xf]
        %v1928 = vld [vmem:[#allocation3 + $0xc] sm:$0xff]
        %v1929 = vld [vmem:[#allocation3 + $0x14] sm:$0xf]
        %v1930 = vld [vmem:[#allocation3 + $0x18] sm:$0xff]
        %v1931 = vld [vmem:[#allocation3 + $0x20] sm:$0xf]
        %v1932 = vld [vmem:[#allocation3 + $0x24] sm:$0xff]
        %v1933 = vld [vmem:[#allocation3 + $0x2c] sm:$0xf]
        %v1934 = vld [vmem:[#allocation3 + $0x30] sm:$0xff]
        %v1935 = vld [vmem:[#allocation3 + $0x38] sm:$0xf]
        %v1936 = vld [vmem:[#allocation3 + $0x3c] sm:$0xff]
        %v1937 = vld [vmem:[#allocation3 + $0x44] sm:$0xf]
        %v1938 = vld [vmem:[#allocation3 + $0x48] sm:$0xff]
        %v1939 = vld [vmem:[#allocation3 + $0x50] sm:$0xf]
        %v1940 = vld [vmem:[#allocation3 + $0x54] sm:$0xff]
        %v1941 = vld [vmem:[#allocation3 + $0x5c] sm:$0xf]
        %v1942 = vld [vmem:[#allocation3 + $0x60] sm:$0xff]
        %v1943 = vld [vmem:[#allocation3 + $0x68] sm:$0xf]
        %v1944 = vld [vmem:[#allocation3 + $0x6c] sm:$0xff]
        %v1945 = vld [vmem:[#allocation3 + $0x74] sm:$0xf]
        %v1946 = vld [vmem:[#allocation3 + $0x78] sm:$0xff]
        %v1947 = vld [vmem:[#allocation3 + $0x80] sm:$0xf]
        %v1948 = vld [vmem:[#allocation3 + $0x84] sm:$0xff]
        %v1949 = vld [vmem:[#allocation3 + $0x8c] sm:$0xf]
        %v1950 = vld [vmem:[#allocation8] sm:$0xf]
        %v1951 = vld [vmem:[#allocation8 + $0x4] sm:$0xf]
        %v1952 = vld [vmem:[#allocation8 + $0x8] sm:$0xf]
        %v1953 = vld [vmem:[#allocation8 + $0xc] sm:$0xf]
        %v1954 = vld [vmem:[#allocation8 + $0x10] sm:$0xf]
        %v1955 = vld [vmem:[#allocation8 + $0x14] sm:$0xf]
        %v1956 = vld [vmem:[#allocation8 + $0x18] sm:$0xf]
        %v1957 = vld [vmem:[#allocation8 + $0x1c] sm:$0xf]
        %v1958 = vld [vmem:[#allocation8 + $0x20] sm:$0xf]
        %v1959 = vld [vmem:[#allocation8 + $0x24] sm:$0xf]
        %v1960 = vld [vmem:[#allocation8 + $0x28] sm:$0xf]
        %v1961 = vld [vmem:[#allocation8 + $0x2c] sm:$0xf]
        %v1962 = vld [vmem:[#allocation8 + $0x30] sm:$0xf]
        %v1963 = vld [vmem:[#allocation8 + $0x34] sm:$0xf]
        %v1964 = vld [vmem:[#allocation8 + $0x38] sm:$0xf]
        %v1965 = vld [vmem:[#allocation8 + $0x3c] sm:$0xf]
        %v1966 = vld [vmem:[#allocation8 + $0x40] sm:$0xf]
        %v1967 = vld [vmem:[#allocation8 + $0x44] sm:$0xf]
        %v1968 = vld [vmem:[#allocation8 + $0x48] sm:$0xf]
        %v1969 = vld [vmem:[#allocation8 + $0x4c] sm:$0xf]
        %v1970 = vld [vmem:[#allocation8 + $0x50] sm:$0xf]
        %v1971 = vld [vmem:[#allocation8 + $0x54] sm:$0xf]
        %v1972 = vld [vmem:[#allocation8 + $0x58] sm:$0xf]
        %v1973 = vld [vmem:[#allocation8 + $0x5c] sm:$0xf]
        %v1974 = vld [vmem:[#allocation8 + $0x60] sm:$0xf]
        %v1975 = vld [vmem:[#allocation8 + $0x64] sm:$0xf]
        %v1976 = vld [vmem:[#allocation8 + $0x68] sm:$0xf]
        %v1977 = vld [vmem:[#allocation8 + $0x6c] sm:$0xf]
        %v1978 = vld [vmem:[#allocation8 + $0x70] sm:$0xf]
        %v1979 = vld [vmem:[#allocation8 + $0x74] sm:$0xf]
        %v1980 = vld [vmem:[#allocation8 + $0x78] sm:$0xf]
        %v1981 = vld [vmem:[#allocation8 + $0x7c] sm:$0xf]
        %v1982 = vld [vmem:[#allocation8 + $0x80] sm:$0xf]
        %v1983 = vld [vmem:[#allocation8 + $0x84] sm:$0xf]
        %v1984 = vld [vmem:[#allocation8 + $0x88] sm:$0xf]
        %v1985 = vld [vmem:[#allocation8 + $0x8c] sm:$0xf]
        %v1986 = vld [vmem:[#allocation8 + $0x90] sm:$0xf]
        %v1987 = vld [vmem:[#allocation8 + $0x94] sm:$0xf]
        %v1988 = vld [vmem:[#allocation8 + $0x98] sm:$0xf]
        %v1989 = vld [vmem:[#allocation8 + $0x9c] sm:$0xf]
        %v1990 = vld [vmem:[#allocation8 + $0xa0] sm:$0xf]
        %v1991 = vld [vmem:[#allocation8 + $0xa4] sm:$0xf]
        %v1992 = vld [vmem:[#allocation8 + $0xa8] sm:$0xf]
        %v1993 = vld [vmem:[#allocation8 + $0xac] sm:$0xf]
        %v1994 = vld [vmem:[#allocation8 + $0xb0] sm:$0xf]
        %v1995 = vld [vmem:[#allocation8 + $0xb4] sm:$0xf]
        %v1996 = vld [vmem:[#allocation8 + $0xb8] sm:$0xf]
        %v1997 = vld [vmem:[#allocation8 + $0xbc] sm:$0xf]
        %s1998 = scalar_lea.vmem [#allocation8], 192
        %v1999 = vld [vmem:[%s1998] sm:$0xf]
        %v2000 = vld [vmem:[%s1998 + $0x4] sm:$0xf]
        %v2001 = vld [vmem:[%s1998 + $0x8] sm:$0xf]
        %v2002 = vld [vmem:[%s1998 + $0xc] sm:$0xf]
        %v2003 = vld [vmem:[%s1998 + $0x10] sm:$0xf]
        %v2004 = vld [vmem:[%s1998 + $0x14] sm:$0xf]
        %v2005 = vld [vmem:[%s1998 + $0x18] sm:$0xf]
        %v2006 = vld [vmem:[%s1998 + $0x1c] sm:$0xf]
        %v2007 = vld [vmem:[%s1998 + $0x20] sm:$0xf]
        %v2008 = vld [vmem:[%s1998 + $0x24] sm:$0xf]
        %v2009 = vld [vmem:[%s1998 + $0x28] sm:$0xf]
        %v2010 = vld [vmem:[%s1998 + $0x2c] sm:$0xf]
        %v2011 = vld [vmem:[%s1998 + $0x30] sm:$0xf]
        %v2012 = vld [vmem:[%s1998 + $0x34] sm:$0xf]
        %v2013 = vld [vmem:[%s1998 + $0x38] sm:$0xf]
        %v2014 = vld [vmem:[%s1998 + $0x3c] sm:$0xf]
        %v2015 = vld [vmem:[%s1998 + $0x40] sm:$0xf]
        %v2016 = vld [vmem:[%s1998 + $0x44] sm:$0xf]
        %v2017 = vld [vmem:[%s1998 + $0x48] sm:$0xf]
        %v2018 = vld [vmem:[%s1998 + $0x4c] sm:$0xf]
        %v2019 = vld [vmem:[%s1998 + $0x50] sm:$0xf]
        %v2020 = vld [vmem:[%s1998 + $0x54] sm:$0xf]
        %v2021 = vld [vmem:[%s1998 + $0x58] sm:$0xf]
        %v2022 = vld [vmem:[%s1998 + $0x5c] sm:$0xf]
        %v2023 = vld [vmem:[%s1998 + $0x60] sm:$0xf]
        %v2024 = vld [vmem:[%s1998 + $0x64] sm:$0xf]
        %v2025 = vld [vmem:[%s1998 + $0x68] sm:$0xf]
        %v2026 = vld [vmem:[%s1998 + $0x6c] sm:$0xf]
        %v2027 = vld [vmem:[%s1998 + $0x70] sm:$0xf]
        %v2028 = vld [vmem:[%s1998 + $0x74] sm:$0xf]
        %v2029 = vld [vmem:[%s1998 + $0x78] sm:$0xf]
        %v2030 = vld [vmem:[%s1998 + $0x7c] sm:$0xf]
        %v2031 = vld [vmem:[%s1998 + $0x80] sm:$0xf]
        %v2032 = vld [vmem:[%s1998 + $0x84] sm:$0xf]
        %v2033 = vld [vmem:[%s1998 + $0x88] sm:$0xf]
        %v2034 = vld [vmem:[%s1998 + $0x8c] sm:$0xf]
        %v2035 = vld [vmem:[%s1998 + $0x90] sm:$0xf]
        %v2036 = vld [vmem:[%s1998 + $0x94] sm:$0xf]
        %v2037 = vld [vmem:[%s1998 + $0x98] sm:$0xf]
        %v2038 = vld [vmem:[%s1998 + $0x9c] sm:$0xf]
        %v2039 = vld [vmem:[%s1998 + $0xa0] sm:$0xf]
        %v2040 = vld [vmem:[%s1998 + $0xa4] sm:$0xf]
        %v2041 = vld [vmem:[%s1998 + $0xa8] sm:$0xf]
        %v2042 = vld [vmem:[%s1998 + $0xac] sm:$0xf]
        %v2043 = vld [vmem:[%s1998 + $0xb0] sm:$0xf]
        %v2044 = vld [vmem:[%s1998 + $0xb4] sm:$0xf]
        %v2045 = vld [vmem:[%s1998 + $0xb8] sm:$0xf]
        %v2046 = vld [vmem:[%s1998 + $0xbc] sm:$0xf]
        %v2063 = vunpack.c.l.b16 %v1930
        %v2064 = vunpack.c.h.b16 %v1930
        %v2065 = vunpack.c.l.b16 %v1931
        %v2066 = vunpack.c.l.b16 %v1932
        %v2067 = vunpack.c.h.b16 %v1932
        %v2068 = vunpack.c.l.b16 %v1933
        %v2069 = vunpack.c.l.b16 %v1934
        %v2070 = vunpack.c.h.b16 %v1934
        %v2071 = vunpack.c.l.b16 %v1935
        %v2072 = vunpack.c.l.b16 %v1936
        %v2073 = vunpack.c.h.b16 %v1936
        %v2074 = vunpack.c.l.b16 %v1937
        %v2075 = vunpack.c.l.b16 %v1938
        %v2076 = vunpack.c.h.b16 %v1938
        %v2077 = vunpack.c.l.b16 %v1939
        %v2078 = vunpack.c.l.b16 %v1940
        %v2079 = vunpack.c.h.b16 %v1940
        %v2080 = vunpack.c.l.b16 %v1941
        %v2081 = vunpack.c.l.b16 %v1942
        %v2082 = vunpack.c.h.b16 %v1942
        %v2083 = vunpack.c.l.b16 %v1943
        %v2084 = vunpack.c.l.b16 %v1944
        %v2085 = vunpack.c.h.b16 %v1944
        %v2086 = vunpack.c.l.b16 %v1945
        %v2087 = vpack.c.b16 %v2066, %v2063
        %v2088 = vpack.c.b16 %v2067, %v2064
        %v2089 = vpack.c.b16 %v2068, %v2065
        %v2090 = vpack.c.b16 %v2072, %v2069
        %v2091 = vpack.c.b16 %v2073, %v2070
        %v2092 = vpack.c.b16 %v2074, %v2071
        %v2093 = vpack.c.b16 %v2078, %v2075
        %v2094 = vpack.c.b16 %v2079, %v2076
        %v2095 = vpack.c.b16 %v2080, %v2077
        %v2096 = vpack.c.b16 %v2084, %v2081
        %v2097 = vpack.c.b16 %v2085, %v2082
        %v2098 = vpack.c.b16 %v2086, %v2083
        %v2159 = vunpack.c.l.b16 %v1999
        %v2160 = vunpack.c.l.b16 %v2000
        %v2161 = vunpack.c.l.b16 %v2001
        %v2162 = vunpack.c.l.b16 %v2002
        %v2163 = vunpack.c.l.b16 %v2003
        %v2164 = vunpack.c.l.b16 %v2004
        %v2165 = vunpack.c.l.b16 %v2005
        %v2166 = vunpack.c.l.b16 %v2006
        %v2167 = vunpack.c.l.b16 %v2007
        %v2168 = vunpack.c.l.b16 %v2008
        %v2169 = vunpack.c.l.b16 %v2009
        %v2170 = vunpack.c.l.b16 %v2010
        %v2171 = vunpack.c.l.b16 %v2011
        %v2172 = vunpack.c.l.b16 %v2012
        %v2173 = vunpack.c.l.b16 %v2013
        %v2174 = vunpack.c.l.b16 %v2014
        %v2175 = vunpack.c.l.b16 %v2015
        %v2176 = vunpack.c.l.b16 %v2016
        %v2177 = vunpack.c.l.b16 %v2017
        %v2178 = vunpack.c.l.b16 %v2018
        %v2179 = vunpack.c.l.b16 %v2019
        %v2180 = vunpack.c.l.b16 %v2020
        %v2181 = vunpack.c.l.b16 %v2021
        %v2182 = vunpack.c.l.b16 %v2022
        %v2183 = vunpack.c.l.b16 %v2023
        %v2184 = vunpack.c.l.b16 %v2024
        %v2185 = vunpack.c.l.b16 %v2025
        %v2186 = vunpack.c.l.b16 %v2026
        %v2187 = vunpack.c.l.b16 %v2027
        %v2188 = vunpack.c.l.b16 %v2028
        %v2189 = vunpack.c.l.b16 %v2029
        %v2190 = vunpack.c.l.b16 %v2030
        %v2191 = vunpack.c.l.b16 %v2031
        %v2192 = vunpack.c.l.b16 %v2032
        %v2193 = vunpack.c.l.b16 %v2033
        %v2194 = vunpack.c.l.b16 %v2034
        %v2195 = vunpack.c.l.b16 %v2035
        %v2196 = vunpack.c.l.b16 %v2036
        %v2197 = vunpack.c.l.b16 %v2037
        %v2198 = vunpack.c.l.b16 %v2038
        %v2199 = vunpack.c.l.b16 %v2039
        %v2200 = vunpack.c.l.b16 %v2040
        %v2201 = vunpack.c.l.b16 %v2041
        %v2202 = vunpack.c.l.b16 %v2042
        %v2203 = vunpack.c.l.b16 %v2043
        %v2204 = vunpack.c.l.b16 %v2044
        %v2205 = vunpack.c.l.b16 %v2045
        %v2206 = vunpack.c.l.b16 %v2046
        %v2207 = vpack.c.b16 %v2160, %v2159
        %v2208 = vpack.c.b16 %v2162, %v2161
        %v2209 = vpack.c.b16 %v2164, %v2163
        %v2210 = vpack.c.b16 %v2166, %v2165
        %v2211 = vpack.c.b16 %v2168, %v2167
        %v2212 = vpack.c.b16 %v2170, %v2169
        %v2213 = vpack.c.b16 %v2172, %v2171
        %v2214 = vpack.c.b16 %v2174, %v2173
        %v2215 = vpack.c.b16 %v2176, %v2175
        %v2216 = vpack.c.b16 %v2178, %v2177
        %v2217 = vpack.c.b16 %v2180, %v2179
        %v2218 = vpack.c.b16 %v2182, %v2181
        %v2219 = vpack.c.b16 %v2184, %v2183
        %v2220 = vpack.c.b16 %v2186, %v2185
        %v2221 = vpack.c.b16 %v2188, %v2187
        %v2222 = vpack.c.b16 %v2190, %v2189
        %v2223 = vpack.c.b16 %v2192, %v2191
        %v2224 = vpack.c.b16 %v2194, %v2193
        %v2225 = vpack.c.b16 %v2196, %v2195
        %v2226 = vpack.c.b16 %v2198, %v2197
        %v2227 = vpack.c.b16 %v2200, %v2199
        %v2228 = vpack.c.b16 %v2202, %v2201
        %v2229 = vpack.c.b16 %v2204, %v2203
        %v2230 = vpack.c.b16 %v2206, %v2205
        %2255 = vmatprep.subr.bf16.mxu0 0
        %2256 = vmatpush1.bf16.msra.mxu0 %v2214
        %2257 = vmatprep.subr.bf16.mxu0 0
        %2258 = vmatpush1.bf16.msra.mxu0 %v2213
        %2259 = vmatprep.subr.bf16.mxu0 0
        %2260 = vmatpush1.bf16.msra.mxu0 %v2212
        %2261 = vmatprep.subr.bf16.mxu0 0
        %2262 = vmatpush1.bf16.msra.mxu0 %v2211
        %2263 = vmatprep.subr.bf16.mxu0 0
        %2264 = vmatpush1.bf16.msra.mxu0 %v2210
        %2265 = vmatprep.subr.bf16.mxu0 0
        %2266 = vmatpush1.bf16.msra.mxu0 %v2209
        %2267 = vmatprep.subr.bf16.mxu0 0
        %2268 = vmatpush1.bf16.msra.mxu0 %v2208
        %2269 = vmatprep.subr.bf16.mxu0 0
        %2270 = vmatpush1.bf16.msra.mxu0 %v2207
        %2271 = vmatprep.subr.bf16.mxu0 0
        %2272 = vmatpush2.bf16.msra.mxu0 %v2222
        %2273 = vmatprep.subr.bf16.mxu0 0
        %2274 = vmatpush2.bf16.msra.mxu0 %v2221
        %2275 = vmatprep.subr.bf16.mxu0 0
        %2276 = vmatpush2.bf16.msra.mxu0 %v2220
        %2277 = vmatprep.subr.bf16.mxu0 0
        %2278 = vmatpush2.bf16.msra.mxu0 %v2219
        %2279 = vmatprep.subr.bf16.mxu0 0
        %2280 = vmatpush2.bf16.msra.mxu0 %v2218
        %2281 = vmatprep.subr.bf16.mxu0 0
        %2282 = vmatpush2.bf16.msra.mxu0 %v2217
        %2283 = vmatprep.subr.bf16.mxu0 0
        %2284 = vmatpush2.bf16.msra.mxu0 %v2216
        %2285 = vmatprep.subr.bf16.mxu0 0
        %2286 = vmatpush2.bf16.msra.mxu0 %v2215
        %2287 = vmatprep.mubr.bf16.mxu0 %v2088
        %2288 = vmatmul.mubr.bf16.gmra.mxu0 %v2087
        %v2289 = vpop.f32.mrf.mxu0
        %v2290 = vadd.f32 0.0, %v2289
        %v2291 = vpop.f32.mrf.mxu0
        %v2292 = vpop.f32.mrf.mxu0
        %v2293 = vadd.f32 0.0, %v2292
        %v2294 = vpop.f32.mrf.mxu0
        %2295 = vmatprep.mubr.bf16.mxu0 %v2091
        %2296 = vmatmul.mubr.bf16.gmra.mxu0 %v2090
        %v2297 = vpop.f32.mrf.mxu0
        %v2298 = vadd.f32 0.0, %v2297
        %v2299 = vpop.f32.mrf.mxu0
        %v2300 = vpop.f32.mrf.mxu0
        %v2301 = vadd.f32 0.0, %v2300
        %v2302 = vpop.f32.mrf.mxu0
        %2303 = vmatprep.mubr.bf16.mxu0 %v2094
        %2304 = vmatmul.mubr.bf16.gmra.mxu0 %v2093
        %v2305 = vpop.f32.mrf.mxu0
        %v2306 = vadd.f32 0.0, %v2305
        %v2307 = vpop.f32.mrf.mxu0
        %v2308 = vpop.f32.mrf.mxu0
        %v2309 = vadd.f32 0.0, %v2308
        %v2310 = vpop.f32.mrf.mxu0
        %2311 = vmatprep.mubr.bf16.mxu0 %v2097
        %2312 = vmatmul.mubr.bf16.gmra.mxu0 %v2096
        %v2313 = vpop.f32.mrf.mxu0
        %v2314 = vadd.f32 0.0, %v2313
        %v2315 = vpop.f32.mrf.mxu0
        %v2316 = vpop.f32.mrf.mxu0
        %v2317 = vadd.f32 0.0, %v2316
        %v2318 = vpop.f32.mrf.mxu0
        %2319 = vdwg.mxu0
        %2320 = vmatprep.subr.bf16.mxu0 0
        %2321 = vmatpush1.bf16.msra.mxu0 %v2230
        %2322 = vmatprep.subr.bf16.mxu0 0
        %2323 = vmatpush1.bf16.msra.mxu0 %v2229
        %2324 = vmatprep.subr.bf16.mxu0 0
        %2325 = vmatpush1.bf16.msra.mxu0 %v2228
        %2326 = vmatprep.subr.bf16.mxu0 0
        %2327 = vmatpush1.bf16.msra.mxu0 %v2227
        %2328 = vmatprep.subr.bf16.mxu0 0
        %2329 = vmatpush1.bf16.msra.mxu0 %v2226
        %2330 = vmatprep.subr.bf16.mxu0 0
        %2331 = vmatpush1.bf16.msra.mxu0 %v2225
        %2332 = vmatprep.subr.bf16.mxu0 0
        %2333 = vmatpush1.bf16.msra.mxu0 %v2224
        %2334 = vmatprep.subr.bf16.mxu0 0
        %2335 = vmatpush1.bf16.msra.mxu0 %v2223
        %2336 = vmatprep.subr.bf16.mxu0 0
        %2337 = vmatpush2.bf16.msra.mxu0 0
        %2338 = vmatprep.subr.bf16.mxu0 0
        %2339 = vmatpush2.bf16.msra.mxu0 0
        %2340 = vmatprep.subr.bf16.mxu0 0
        %2341 = vmatpush2.bf16.msra.mxu0 0
        %2342 = vmatprep.subr.bf16.mxu0 0
        %2343 = vmatpush2.bf16.msra.mxu0 0
        %2344 = vmatprep.subr.bf16.mxu0 0
        %2345 = vmatpush2.bf16.msra.mxu0 0
        %2346 = vmatprep.subr.bf16.mxu0 0
        %2347 = vmatpush2.bf16.msra.mxu0 0
        %2348 = vmatprep.subr.bf16.mxu0 0
        %2349 = vmatpush2.bf16.msra.mxu0 0
        %2350 = vmatprep.subr.bf16.mxu0 0
        %2351 = vmatpush2.bf16.msra.mxu0 0
        %2352 = vmatprep.mubr.bf16.mxu0 0
        %2353 = vmatmul.mubr.bf16.gmra.mxu0 %v2089
        %v2354 = vpop.f32.mrf.mxu0
        %v2355 = vadd.f32 %v2290, %v2354
        %v2356 = vpop.f32.mrf.mxu0
        %v2357 = vpop.f32.mrf.mxu0
        %v2358 = vadd.f32 %v2293, %v2357
        %v2359 = vpop.f32.mrf.mxu0
        %2360 = vmatprep.mubr.bf16.mxu0 0
        %2361 = vmatmul.mubr.bf16.gmra.mxu0 %v2092
        %v2362 = vpop.f32.mrf.mxu0
        %v2363 = vadd.f32 %v2298, %v2362
        %v2364 = vpop.f32.mrf.mxu0
        %v2365 = vpop.f32.mrf.mxu0
        %v2366 = vadd.f32 %v2301, %v2365
        %v2367 = vpop.f32.mrf.mxu0
        %2368 = vmatprep.mubr.bf16.mxu0 0
        %2369 = vmatmul.mubr.bf16.gmra.mxu0 %v2095
        %v2370 = vpop.f32.mrf.mxu0
        %v2371 = vadd.f32 %v2306, %v2370
        %v2372 = vpop.f32.mrf.mxu0
        %v2373 = vpop.f32.mrf.mxu0
        %v2374 = vadd.f32 %v2309, %v2373
        %v2375 = vpop.f32.mrf.mxu0
        %2376 = vmatprep.mubr.bf16.mxu0 0
        %2377 = vmatmul.mubr.bf16.gmra.mxu0 %v2098
        %v2378 = vpop.f32.mrf.mxu0
        %v2379 = vadd.f32 %v2314, %v2378
        %v2380 = vpop.f32.mrf.mxu0
        %v2381 = vpop.f32.mrf.mxu0
        %v2382 = vadd.f32 %v2317, %v2381
        %v2383 = vpop.f32.mrf.mxu0
        %2384 = vdwg.mxu0
        %v2389 = vunpack.c.l.b16 %v1926
        %v2390 = vunpack.c.h.b16 %v1926
        %v2391 = vunpack.c.l.b16 %v1927
        %v2392 = vunpack.c.l.b16 %v1928
        %v2393 = vunpack.c.h.b16 %v1928
        %v2394 = vunpack.c.l.b16 %v1929
        %v2395 = vpack.c.b16 %v2392, %v2389
        %v2396 = vpack.c.b16 %v2393, %v2390
        %v2397 = vpack.c.b16 %v2394, %v2391
        %v2449 = vunpack.c.l.b16 %v1950
        %v2450 = vunpack.c.l.b16 %v1951
        %v2451 = vunpack.c.l.b16 %v1952
        %v2452 = vunpack.c.l.b16 %v1953
        %v2453 = vunpack.c.l.b16 %v1954
        %v2454 = vunpack.c.l.b16 %v1955
        %v2455 = vunpack.c.l.b16 %v1956
        %v2456 = vunpack.c.l.b16 %v1957
        %v2457 = vunpack.c.l.b16 %v1958
        %v2458 = vunpack.c.l.b16 %v1959
        %v2459 = vunpack.c.l.b16 %v1960
        %v2460 = vunpack.c.l.b16 %v1961
        %v2461 = vunpack.c.l.b16 %v1962
        %v2462 = vunpack.c.l.b16 %v1963
        %v2463 = vunpack.c.l.b16 %v1964
        %v2464 = vunpack.c.l.b16 %v1965
        %v2465 = vunpack.c.l.b16 %v1966
        %v2466 = vunpack.c.l.b16 %v1967
        %v2467 = vunpack.c.l.b16 %v1968
        %v2468 = vunpack.c.l.b16 %v1969
        %v2469 = vunpack.c.l.b16 %v1970
        %v2470 = vunpack.c.l.b16 %v1971
        %v2471 = vunpack.c.l.b16 %v1972
        %v2472 = vunpack.c.l.b16 %v1973
        %v2473 = vunpack.c.l.b16 %v1974
        %v2474 = vunpack.c.l.b16 %v1975
        %v2475 = vunpack.c.l.b16 %v1976
        %v2476 = vunpack.c.l.b16 %v1977
        %v2477 = vunpack.c.l.b16 %v1978
        %v2478 = vunpack.c.l.b16 %v1979
        %v2479 = vunpack.c.l.b16 %v1980
        %v2480 = vunpack.c.l.b16 %v1981
        %v2481 = vunpack.c.l.b16 %v1982
        %v2482 = vunpack.c.l.b16 %v1983
        %v2483 = vunpack.c.l.b16 %v1984
        %v2484 = vunpack.c.l.b16 %v1985
        %v2485 = vunpack.c.l.b16 %v1986
        %v2486 = vunpack.c.l.b16 %v1987
        %v2487 = vunpack.c.l.b16 %v1988
        %v2488 = vunpack.c.l.b16 %v1989
        %v2489 = vunpack.c.l.b16 %v1990
        %v2490 = vunpack.c.l.b16 %v1991
        %v2491 = vunpack.c.l.b16 %v1992
        %v2492 = vunpack.c.l.b16 %v1993
        %v2493 = vunpack.c.l.b16 %v1994
        %v2494 = vunpack.c.l.b16 %v1995
        %v2495 = vunpack.c.l.b16 %v1996
        %v2496 = vunpack.c.l.b16 %v1997
        %v2497 = vpack.c.b16 %v2450, %v2449
        %v2498 = vpack.c.b16 %v2452, %v2451
        %v2499 = vpack.c.b16 %v2454, %v2453
        %v2500 = vpack.c.b16 %v2456, %v2455
        %v2501 = vpack.c.b16 %v2458, %v2457
        %v2502 = vpack.c.b16 %v2460, %v2459
        %v2503 = vpack.c.b16 %v2462, %v2461
        %v2504 = vpack.c.b16 %v2464, %v2463
        %v2505 = vpack.c.b16 %v2466, %v2465
        %v2506 = vpack.c.b16 %v2468, %v2467
        %v2507 = vpack.c.b16 %v2470, %v2469
        %v2508 = vpack.c.b16 %v2472, %v2471
        %v2509 = vpack.c.b16 %v2474, %v2473
        %v2510 = vpack.c.b16 %v2476, %v2475
        %v2511 = vpack.c.b16 %v2478, %v2477
        %v2512 = vpack.c.b16 %v2480, %v2479
        %v2513 = vpack.c.b16 %v2482, %v2481
        %v2514 = vpack.c.b16 %v2484, %v2483
        %v2515 = vpack.c.b16 %v2486, %v2485
        %v2516 = vpack.c.b16 %v2488, %v2487
        %v2517 = vpack.c.b16 %v2490, %v2489
        %v2518 = vpack.c.b16 %v2492, %v2491
        %v2519 = vpack.c.b16 %v2494, %v2493
        %v2520 = vpack.c.b16 %v2496, %v2495
        %2545 = vmatprep.subr.bf16.mxu0 0
        %2546 = vmatpush1.bf16.msra.mxu0 %v2504
        %2547 = vmatprep.subr.bf16.mxu0 0
        %2548 = vmatpush1.bf16.msra.mxu0 %v2503
        %2549 = vmatprep.subr.bf16.mxu0 0
        %2550 = vmatpush1.bf16.msra.mxu0 %v2502
        %2551 = vmatprep.subr.bf16.mxu0 0
        %2552 = vmatpush1.bf16.msra.mxu0 %v2501
        %2553 = vmatprep.subr.bf16.mxu0 0
        %2554 = vmatpush1.bf16.msra.mxu0 %v2500
        %2555 = vmatprep.subr.bf16.mxu0 0
        %2556 = vmatpush1.bf16.msra.mxu0 %v2499
        %2557 = vmatprep.subr.bf16.mxu0 0
        %2558 = vmatpush1.bf16.msra.mxu0 %v2498
        %2559 = vmatprep.subr.bf16.mxu0 0
        %2560 = vmatpush1.bf16.msra.mxu0 %v2497
        %2561 = vmatprep.subr.bf16.mxu0 0
        %2562 = vmatpush2.bf16.msra.mxu0 %v2512
        %2563 = vmatprep.subr.bf16.mxu0 0
        %2564 = vmatpush2.bf16.msra.mxu0 %v2511
        %2565 = vmatprep.subr.bf16.mxu0 0
        %2566 = vmatpush2.bf16.msra.mxu0 %v2510
        %2567 = vmatprep.subr.bf16.mxu0 0
        %2568 = vmatpush2.bf16.msra.mxu0 %v2509
        %2569 = vmatprep.subr.bf16.mxu0 0
        %2570 = vmatpush2.bf16.msra.mxu0 %v2508
        %2571 = vmatprep.subr.bf16.mxu0 0
        %2572 = vmatpush2.bf16.msra.mxu0 %v2507
        %2573 = vmatprep.subr.bf16.mxu0 0
        %2574 = vmatpush2.bf16.msra.mxu0 %v2506
        %2575 = vmatprep.subr.bf16.mxu0 0
        %2576 = vmatpush2.bf16.msra.mxu0 %v2505
        %2577 = vmatprep.mubr.bf16.mxu0 %v2396
        %2578 = vmatmul.mubr.bf16.gmra.mxu0 %v2395
        %v2579 = vpop.f32.mrf.mxu0
        %v2580 = vadd.f32 %v2355, %v2579
        %v2581 = vpop.f32.mrf.mxu0
        %v2582 = vpop.f32.mrf.mxu0
        %v2583 = vadd.f32 %v2358, %v2582
        %v2584 = vpop.f32.mrf.mxu0
        %2585 = vmatprep.mubr.bf16.mxu0 %v2088
        %2586 = vmatmul.mubr.bf16.gmra.mxu0 %v2087
        %v2587 = vpop.f32.mrf.mxu0
        %v2588 = vadd.f32 %v2363, %v2587
        %v2589 = vpop.f32.mrf.mxu0
        %v2590 = vpop.f32.mrf.mxu0
        %v2591 = vadd.f32 %v2366, %v2590
        %v2592 = vpop.f32.mrf.mxu0
        %2593 = vmatprep.mubr.bf16.mxu0 %v2091
        %2594 = vmatmul.mubr.bf16.gmra.mxu0 %v2090
        %v2595 = vpop.f32.mrf.mxu0
        %v2596 = vadd.f32 %v2371, %v2595
        %v2597 = vpop.f32.mrf.mxu0
        %v2598 = vpop.f32.mrf.mxu0
        %v2599 = vadd.f32 %v2374, %v2598
        %v2600 = vpop.f32.mrf.mxu0
        %2601 = vmatprep.mubr.bf16.mxu0 %v2094
        %2602 = vmatmul.mubr.bf16.gmra.mxu0 %v2093
        %v2603 = vpop.f32.mrf.mxu0
        %v2604 = vadd.f32 %v2379, %v2603
        %v2605 = vpop.f32.mrf.mxu0
        %v2606 = vpop.f32.mrf.mxu0
        %v2607 = vadd.f32 %v2382, %v2606
        %v2608 = vpop.f32.mrf.mxu0
        %2609 = vdwg.mxu0
        %2610 = vmatprep.subr.bf16.mxu0 0
        %2611 = vmatpush1.bf16.msra.mxu0 %v2520
        %2612 = vmatprep.subr.bf16.mxu0 0
        %2613 = vmatpush1.bf16.msra.mxu0 %v2519
        %2614 = vmatprep.subr.bf16.mxu0 0
        %2615 = vmatpush1.bf16.msra.mxu0 %v2518
        %2616 = vmatprep.subr.bf16.mxu0 0
        %2617 = vmatpush1.bf16.msra.mxu0 %v2517
        %2618 = vmatprep.subr.bf16.mxu0 0
        %2619 = vmatpush1.bf16.msra.mxu0 %v2516
        %2620 = vmatprep.subr.bf16.mxu0 0
        %2621 = vmatpush1.bf16.msra.mxu0 %v2515
        %2622 = vmatprep.subr.bf16.mxu0 0
        %2623 = vmatpush1.bf16.msra.mxu0 %v2514
        %2624 = vmatprep.subr.bf16.mxu0 0
        %2625 = vmatpush1.bf16.msra.mxu0 %v2513
        %2626 = vmatprep.subr.bf16.mxu0 0
        %2627 = vmatpush2.bf16.msra.mxu0 0
        %2628 = vmatprep.subr.bf16.mxu0 0
        %2629 = vmatpush2.bf16.msra.mxu0 0
        %2630 = vmatprep.subr.bf16.mxu0 0
        %2631 = vmatpush2.bf16.msra.mxu0 0
        %2632 = vmatprep.subr.bf16.mxu0 0
        %2633 = vmatpush2.bf16.msra.mxu0 0
        %2634 = vmatprep.subr.bf16.mxu0 0
        %2635 = vmatpush2.bf16.msra.mxu0 0
        %2636 = vmatprep.subr.bf16.mxu0 0
        %2637 = vmatpush2.bf16.msra.mxu0 0
        %2638 = vmatprep.subr.bf16.mxu0 0
        %2639 = vmatpush2.bf16.msra.mxu0 0
        %2640 = vmatprep.subr.bf16.mxu0 0
        %2641 = vmatpush2.bf16.msra.mxu0 0
        %2642 = vmatprep.mubr.bf16.mxu0 0
        %2643 = vmatmul.mubr.bf16.gmra.mxu0 %v2397
        %v2644 = vpop.f32.mrf.mxu0
        %v2645 = vadd.f32 %v2580, %v2644
        %v2646 = vpop.f32.mrf.mxu0
        %v2647 = vpop.f32.mrf.mxu0
        %v2648 = vadd.f32 %v2583, %v2647
        %v2649 = vpop.f32.mrf.mxu0
        %2650 = vmatprep.mubr.bf16.mxu0 0
        %2651 = vmatmul.mubr.bf16.gmra.mxu0 %v2089
        %v2652 = vpop.f32.mrf.mxu0
        %v2653 = vadd.f32 %v2588, %v2652
        %v2654 = vpop.f32.mrf.mxu0
        %v2655 = vpop.f32.mrf.mxu0
        %v2656 = vadd.f32 %v2591, %v2655
        %v2657 = vpop.f32.mrf.mxu0
        %2658 = vmatprep.mubr.bf16.mxu0 0
        %2659 = vmatmul.mubr.bf16.gmra.mxu0 %v2092
        %v2660 = vpop.f32.mrf.mxu0
        %v2661 = vadd.f32 %v2596, %v2660
        %v2662 = vpop.f32.mrf.mxu0
        %v2663 = vpop.f32.mrf.mxu0
        %v2664 = vadd.f32 %v2599, %v2663
        %v2665 = vpop.f32.mrf.mxu0
        %2666 = vmatprep.mubr.bf16.mxu0 0
        %2667 = vmatmul.mubr.bf16.gmra.mxu0 %v2095
        %v2668 = vpop.f32.mrf.mxu0
        %v2669 = vadd.f32 %v2604, %v2668
        %v2670 = vpop.f32.mrf.mxu0
        %v2671 = vpop.f32.mrf.mxu0
        %v2672 = vadd.f32 %v2607, %v2671
        %v2673 = vpop.f32.mrf.mxu0
        %2674 = vdwg.mxu0
        %s2675 = scalar_lea.vmem [#allocation8], 384
        %v2676 = vld [vmem:[%s2675] sm:$0xf]
        %v2677 = vld [vmem:[%s2675 + $0x4] sm:$0xf]
        %v2678 = vld [vmem:[%s2675 + $0x8] sm:$0xf]
        %v2679 = vld [vmem:[%s2675 + $0xc] sm:$0xf]
        %v2680 = vld [vmem:[%s2675 + $0x10] sm:$0xf]
        %v2681 = vld [vmem:[%s2675 + $0x14] sm:$0xf]
        %v2682 = vld [vmem:[%s2675 + $0x18] sm:$0xf]
        %v2683 = vld [vmem:[%s2675 + $0x1c] sm:$0xf]
        %v2684 = vld [vmem:[%s2675 + $0x20] sm:$0xf]
        %v2685 = vld [vmem:[%s2675 + $0x24] sm:$0xf]
        %v2686 = vld [vmem:[%s2675 + $0x28] sm:$0xf]
        %v2687 = vld [vmem:[%s2675 + $0x2c] sm:$0xf]
        %v2688 = vld [vmem:[%s2675 + $0x30] sm:$0xf]
        %v2689 = vld [vmem:[%s2675 + $0x34] sm:$0xf]
        %v2690 = vld [vmem:[%s2675 + $0x38] sm:$0xf]
        %v2691 = vld [vmem:[%s2675 + $0x3c] sm:$0xf]
        %v2692 = vld [vmem:[%s2675 + $0x40] sm:$0xf]
        %v2693 = vld [vmem:[%s2675 + $0x44] sm:$0xf]
        %v2694 = vld [vmem:[%s2675 + $0x48] sm:$0xf]
        %v2695 = vld [vmem:[%s2675 + $0x4c] sm:$0xf]
        %v2696 = vld [vmem:[%s2675 + $0x50] sm:$0xf]
        %v2697 = vld [vmem:[%s2675 + $0x54] sm:$0xf]
        %v2698 = vld [vmem:[%s2675 + $0x58] sm:$0xf]
        %v2699 = vld [vmem:[%s2675 + $0x5c] sm:$0xf]
        %v2700 = vld [vmem:[%s2675 + $0x60] sm:$0xf]
        %v2701 = vld [vmem:[%s2675 + $0x64] sm:$0xf]
        %v2702 = vld [vmem:[%s2675 + $0x68] sm:$0xf]
        %v2703 = vld [vmem:[%s2675 + $0x6c] sm:$0xf]
        %v2704 = vld [vmem:[%s2675 + $0x70] sm:$0xf]
        %v2705 = vld [vmem:[%s2675 + $0x74] sm:$0xf]
        %v2706 = vld [vmem:[%s2675 + $0x78] sm:$0xf]
        %v2707 = vld [vmem:[%s2675 + $0x7c] sm:$0xf]
        %v2708 = vld [vmem:[%s2675 + $0x80] sm:$0xf]
        %v2709 = vld [vmem:[%s2675 + $0x84] sm:$0xf]
        %v2710 = vld [vmem:[%s2675 + $0x88] sm:$0xf]
        %v2711 = vld [vmem:[%s2675 + $0x8c] sm:$0xf]
        %v2712 = vld [vmem:[%s2675 + $0x90] sm:$0xf]
        %v2713 = vld [vmem:[%s2675 + $0x94] sm:$0xf]
        %v2714 = vld [vmem:[%s2675 + $0x98] sm:$0xf]
        %v2715 = vld [vmem:[%s2675 + $0x9c] sm:$0xf]
        %v2716 = vld [vmem:[%s2675 + $0xa0] sm:$0xf]
        %v2717 = vld [vmem:[%s2675 + $0xa4] sm:$0xf]
        %v2718 = vld [vmem:[%s2675 + $0xa8] sm:$0xf]
        %v2719 = vld [vmem:[%s2675 + $0xac] sm:$0xf]
        %v2720 = vld [vmem:[%s2675 + $0xb0] sm:$0xf]
        %v2721 = vld [vmem:[%s2675 + $0xb4] sm:$0xf]
        %v2722 = vld [vmem:[%s2675 + $0xb8] sm:$0xf]
        %v2723 = vld [vmem:[%s2675 + $0xbc] sm:$0xf]
        %v2728 = vunpack.c.l.b16 %v1946
        %v2729 = vunpack.c.h.b16 %v1946
        %v2730 = vunpack.c.l.b16 %v1947
        %v2731 = vunpack.c.l.b16 %v1948
        %v2732 = vunpack.c.h.b16 %v1948
        %v2733 = vunpack.c.l.b16 %v1949
        %v2734 = vpack.c.b16 %v2731, %v2728
        %v2735 = vpack.c.b16 %v2732, %v2729
        %v2736 = vpack.c.b16 %v2733, %v2730
        %v2788 = vunpack.c.l.b16 %v2676
        %v2789 = vunpack.c.l.b16 %v2677
        %v2790 = vunpack.c.l.b16 %v2678
        %v2791 = vunpack.c.l.b16 %v2679
        %v2792 = vunpack.c.l.b16 %v2680
        %v2793 = vunpack.c.l.b16 %v2681
        %v2794 = vunpack.c.l.b16 %v2682
        %v2795 = vunpack.c.l.b16 %v2683
        %v2796 = vunpack.c.l.b16 %v2684
        %v2797 = vunpack.c.l.b16 %v2685
        %v2798 = vunpack.c.l.b16 %v2686
        %v2799 = vunpack.c.l.b16 %v2687
        %v2800 = vunpack.c.l.b16 %v2688
        %v2801 = vunpack.c.l.b16 %v2689
        %v2802 = vunpack.c.l.b16 %v2690
        %v2803 = vunpack.c.l.b16 %v2691
        %v2804 = vunpack.c.l.b16 %v2692
        %v2805 = vunpack.c.l.b16 %v2693
        %v2806 = vunpack.c.l.b16 %v2694
        %v2807 = vunpack.c.l.b16 %v2695
        %v2808 = vunpack.c.l.b16 %v2696
        %v2809 = vunpack.c.l.b16 %v2697
        %v2810 = vunpack.c.l.b16 %v2698
        %v2811 = vunpack.c.l.b16 %v2699
        %v2812 = vunpack.c.l.b16 %v2700
        %v2813 = vunpack.c.l.b16 %v2701
        %v2814 = vunpack.c.l.b16 %v2702
        %v2815 = vunpack.c.l.b16 %v2703
        %v2816 = vunpack.c.l.b16 %v2704
        %v2817 = vunpack.c.l.b16 %v2705
        %v2818 = vunpack.c.l.b16 %v2706
        %v2819 = vunpack.c.l.b16 %v2707
        %v2820 = vunpack.c.l.b16 %v2708
        %v2821 = vunpack.c.l.b16 %v2709
        %v2822 = vunpack.c.l.b16 %v2710
        %v2823 = vunpack.c.l.b16 %v2711
        %v2824 = vunpack.c.l.b16 %v2712
        %v2825 = vunpack.c.l.b16 %v2713
        %v2826 = vunpack.c.l.b16 %v2714
        %v2827 = vunpack.c.l.b16 %v2715
        %v2828 = vunpack.c.l.b16 %v2716
        %v2829 = vunpack.c.l.b16 %v2717
        %v2830 = vunpack.c.l.b16 %v2718
        %v2831 = vunpack.c.l.b16 %v2719
        %v2832 = vunpack.c.l.b16 %v2720
        %v2833 = vunpack.c.l.b16 %v2721
        %v2834 = vunpack.c.l.b16 %v2722
        %v2835 = vunpack.c.l.b16 %v2723
        %v2836 = vpack.c.b16 %v2789, %v2788
        %v2837 = vpack.c.b16 %v2791, %v2790
        %v2838 = vpack.c.b16 %v2793, %v2792
        %v2839 = vpack.c.b16 %v2795, %v2794
        %v2840 = vpack.c.b16 %v2797, %v2796
        %v2841 = vpack.c.b16 %v2799, %v2798
        %v2842 = vpack.c.b16 %v2801, %v2800
        %v2843 = vpack.c.b16 %v2803, %v2802
        %v2844 = vpack.c.b16 %v2805, %v2804
        %v2845 = vpack.c.b16 %v2807, %v2806
        %v2846 = vpack.c.b16 %v2809, %v2808
        %v2847 = vpack.c.b16 %v2811, %v2810
        %v2848 = vpack.c.b16 %v2813, %v2812
        %v2849 = vpack.c.b16 %v2815, %v2814
        %v2850 = vpack.c.b16 %v2817, %v2816
        %v2851 = vpack.c.b16 %v2819, %v2818
        %v2852 = vpack.c.b16 %v2821, %v2820
        %v2853 = vpack.c.b16 %v2823, %v2822
        %v2854 = vpack.c.b16 %v2825, %v2824
        %v2855 = vpack.c.b16 %v2827, %v2826
        %v2856 = vpack.c.b16 %v2829, %v2828
        %v2857 = vpack.c.b16 %v2831, %v2830
        %v2858 = vpack.c.b16 %v2833, %v2832
        %v2859 = vpack.c.b16 %v2835, %v2834
        %2884 = vmatprep.subr.bf16.mxu0 0
        %2885 = vmatpush1.bf16.msra.mxu0 %v2843
        %2886 = vmatprep.subr.bf16.mxu0 0
        %2887 = vmatpush1.bf16.msra.mxu0 %v2842
        %2888 = vmatprep.subr.bf16.mxu0 0
        %2889 = vmatpush1.bf16.msra.mxu0 %v2841
        %2890 = vmatprep.subr.bf16.mxu0 0
        %2891 = vmatpush1.bf16.msra.mxu0 %v2840
        %2892 = vmatprep.subr.bf16.mxu0 0
        %2893 = vmatpush1.bf16.msra.mxu0 %v2839
        %2894 = vmatprep.subr.bf16.mxu0 0
        %2895 = vmatpush1.bf16.msra.mxu0 %v2838
        %2896 = vmatprep.subr.bf16.mxu0 0
        %2897 = vmatpush1.bf16.msra.mxu0 %v2837
        %2898 = vmatprep.subr.bf16.mxu0 0
        %2899 = vmatpush1.bf16.msra.mxu0 %v2836
        %2900 = vmatprep.subr.bf16.mxu0 0
        %2901 = vmatpush2.bf16.msra.mxu0 %v2851
        %2902 = vmatprep.subr.bf16.mxu0 0
        %2903 = vmatpush2.bf16.msra.mxu0 %v2850
        %2904 = vmatprep.subr.bf16.mxu0 0
        %2905 = vmatpush2.bf16.msra.mxu0 %v2849
        %2906 = vmatprep.subr.bf16.mxu0 0
        %2907 = vmatpush2.bf16.msra.mxu0 %v2848
        %2908 = vmatprep.subr.bf16.mxu0 0
        %2909 = vmatpush2.bf16.msra.mxu0 %v2847
        %2910 = vmatprep.subr.bf16.mxu0 0
        %2911 = vmatpush2.bf16.msra.mxu0 %v2846
        %2912 = vmatprep.subr.bf16.mxu0 0
        %2913 = vmatpush2.bf16.msra.mxu0 %v2845
        %2914 = vmatprep.subr.bf16.mxu0 0
        %2915 = vmatpush2.bf16.msra.mxu0 %v2844
        %2916 = vmatprep.mubr.bf16.mxu0 %v2091
        %2917 = vmatmul.mubr.bf16.gmra.mxu0 %v2090
        %v2918 = vpop.f32.mrf.mxu0
        %v2919 = vadd.f32 0.0, %v2918
        %v2920 = vpop.f32.mrf.mxu0
        %v2921 = vpop.f32.mrf.mxu0
        %v2922 = vadd.f32 0.0, %v2921
        %v2923 = vpop.f32.mrf.mxu0
        %2924 = vmatprep.mubr.bf16.mxu0 %v2094
        %2925 = vmatmul.mubr.bf16.gmra.mxu0 %v2093
        %v2926 = vpop.f32.mrf.mxu0
        %v2927 = vadd.f32 0.0, %v2926
        %v2928 = vpop.f32.mrf.mxu0
        %v2929 = vpop.f32.mrf.mxu0
        %v2930 = vadd.f32 0.0, %v2929
        %v2931 = vpop.f32.mrf.mxu0
        %2932 = vmatprep.mubr.bf16.mxu0 %v2097
        %2933 = vmatmul.mubr.bf16.gmra.mxu0 %v2096
        %v2934 = vpop.f32.mrf.mxu0
        %v2935 = vadd.f32 0.0, %v2934
        %v2936 = vpop.f32.mrf.mxu0
        %v2937 = vpop.f32.mrf.mxu0
        %v2938 = vadd.f32 0.0, %v2937
        %v2939 = vpop.f32.mrf.mxu0
        %2940 = vmatprep.mubr.bf16.mxu0 %v2735
        %2941 = vmatmul.mubr.bf16.gmra.mxu0 %v2734
        %v2942 = vpop.f32.mrf.mxu0
        %v2943 = vadd.f32 0.0, %v2942
        %v2944 = vpop.f32.mrf.mxu0
        %v2945 = vpop.f32.mrf.mxu0
        %v2946 = vadd.f32 0.0, %v2945
        %v2947 = vpop.f32.mrf.mxu0
        %2948 = vdwg.mxu0
        %2949 = vmatprep.subr.bf16.mxu0 0
        %2950 = vmatpush1.bf16.msra.mxu0 %v2859
        %2951 = vmatprep.subr.bf16.mxu0 0
        %2952 = vmatpush1.bf16.msra.mxu0 %v2858
        %2953 = vmatprep.subr.bf16.mxu0 0
        %2954 = vmatpush1.bf16.msra.mxu0 %v2857
        %2955 = vmatprep.subr.bf16.mxu0 0
        %2956 = vmatpush1.bf16.msra.mxu0 %v2856
        %2957 = vmatprep.subr.bf16.mxu0 0
        %2958 = vmatpush1.bf16.msra.mxu0 %v2855
        %2959 = vmatprep.subr.bf16.mxu0 0
        %2960 = vmatpush1.bf16.msra.mxu0 %v2854
        %2961 = vmatprep.subr.bf16.mxu0 0
        %2962 = vmatpush1.bf16.msra.mxu0 %v2853
        %2963 = vmatprep.subr.bf16.mxu0 0
        %2964 = vmatpush1.bf16.msra.mxu0 %v2852
        %2965 = vmatprep.subr.bf16.mxu0 0
        %2966 = vmatpush2.bf16.msra.mxu0 0
        %2967 = vmatprep.subr.bf16.mxu0 0
        %2968 = vmatpush2.bf16.msra.mxu0 0
        %2969 = vmatprep.subr.bf16.mxu0 0
        %2970 = vmatpush2.bf16.msra.mxu0 0
        %2971 = vmatprep.subr.bf16.mxu0 0
        %2972 = vmatpush2.bf16.msra.mxu0 0
        %2973 = vmatprep.subr.bf16.mxu0 0
        %2974 = vmatpush2.bf16.msra.mxu0 0
        %2975 = vmatprep.subr.bf16.mxu0 0
        %2976 = vmatpush2.bf16.msra.mxu0 0
        %2977 = vmatprep.subr.bf16.mxu0 0
        %2978 = vmatpush2.bf16.msra.mxu0 0
        %2979 = vmatprep.subr.bf16.mxu0 0
        %2980 = vmatpush2.bf16.msra.mxu0 0
        %2981 = vmatprep.mubr.bf16.mxu0 0
        %2982 = vmatmul.mubr.bf16.gmra.mxu0 %v2092
        %v2983 = vpop.f32.mrf.mxu0
        %v2984 = vadd.f32 %v2919, %v2983
        %v2985 = vpop.f32.mrf.mxu0
        %v2986 = vpop.f32.mrf.mxu0
        %v2987 = vadd.f32 %v2922, %v2986
        %v2988 = vpop.f32.mrf.mxu0
        %2989 = vmatprep.mubr.bf16.mxu0 0
        %2990 = vmatmul.mubr.bf16.gmra.mxu0 %v2095
        %v2991 = vpop.f32.mrf.mxu0
        %v2992 = vadd.f32 %v2927, %v2991
        %v2993 = vpop.f32.mrf.mxu0
        %v2994 = vpop.f32.mrf.mxu0
        %v2995 = vadd.f32 %v2930, %v2994
        %v2996 = vpop.f32.mrf.mxu0
        %2997 = vmatprep.mubr.bf16.mxu0 0
        %2998 = vmatmul.mubr.bf16.gmra.mxu0 %v2098
        %v2999 = vpop.f32.mrf.mxu0
        %v3000 = vadd.f32 %v2935, %v2999
        %v3001 = vpop.f32.mrf.mxu0
        %v3002 = vpop.f32.mrf.mxu0
        %v3003 = vadd.f32 %v2938, %v3002
        %v3004 = vpop.f32.mrf.mxu0
        %3005 = vmatprep.mubr.bf16.mxu0 0
        %3006 = vmatmul.mubr.bf16.gmra.mxu0 %v2736
        %v3007 = vpop.f32.mrf.mxu0
        %v3008 = vadd.f32 %v2943, %v3007
        %v3009 = vpop.f32.mrf.mxu0
        %v3010 = vpop.f32.mrf.mxu0
        %v3011 = vadd.f32 %v2946, %v3010
        %v3012 = vpop.f32.mrf.mxu0
        %3013 = vdwg.mxu0
        %v3014 = vadd.f32 %v2645, %v2984
        %v3015 = vadd.f32 %v2648, %v2987
        %v3016 = vadd.f32 %v2653, %v2992
        %v3017 = vadd.f32 %v2656, %v2995
        %v3018 = vadd.f32 %v2661, %v3000
        %v3019 = vadd.f32 %v2664, %v3003
        %v3020 = vadd.f32 %v2669, %v3008
        %v3021 = vadd.f32 %v2672, %v3011
        %v3022 = vld [vmem:[%s4] sm:$0x1]
        %v3024 = vlaneseq
        %v3025 = vshrl.u32 %v3024, 7
        %v3026 = vsub.s32 0, %v3025
        %v3027 = vrot.slane %v3022, %v3026
        %v3029 = vadd.f32 %v3014, %v3027
        %v3030 = vadd.f32 %v3015, %v3027
        %v3031 = vadd.f32 %v3016, %v3027
        %v3032 = vadd.f32 %v3017, %v3027
        %v3033 = vadd.f32 %v3018, %v3027
        %v3034 = vadd.f32 %v3019, %v3027
        %v3035 = vadd.f32 %v3020, %v3027
        %v3036 = vadd.f32 %v3021, %v3027
        %v3037 = vadd.f32 %v272, %v3029
        %v3038 = vadd.f32 %v273, %v3030
        %v3039 = vadd.f32 %v274, %v3031
        %v3040 = vadd.f32 %v275, %v3032
        %v3041 = vadd.f32 %v276, %v3033
        %v3042 = vadd.f32 %v277, %v3034
        %v3043 = vadd.f32 %v278, %v3035
        %v3044 = vadd.f32 %v279, %v3036
        %3045 = vst [vmem:[%s220] sm:$0xff] %v3037
        %3046 = vst [vmem:[%s220 + $0x8] sm:$0xff] %v3038
        %3047 = vst [vmem:[%s220 + $0x10] sm:$0xff] %v3039
        %3048 = vst [vmem:[%s220 + $0x18] sm:$0xff] %v3040
        %3049 = vst [vmem:[%s220 + $0x20] sm:$0xff] %v3041
        %3050 = vst [vmem:[%s220 + $0x28] sm:$0xff] %v3042
        %3051 = vst [vmem:[%s220 + $0x30] sm:$0xff] %v3043
        %3052 = vst [vmem:[%s220 + $0x38] sm:$0xff] %v3044
        %s3053 = sand.u32 %s127, 1
        %s3054 = scalar_lea.sflag [#allocation7], %s3053
        %s3055 = sand.u32 %s127, 1
        %s3056 = smul.addr %s3055, 64
        %s3057 = scalar_lea.vmem [#allocation10], %s3056
        // Predicated region
        $region57: #{tpu_custom_call.1} parent=35 // pred_check
          %p3058 = pneg %p137
        $region58: #{tpu_custom_call.1} parent=35 // pred_check_branch
          %3060 = sbr.rel (%p3058) target = $region60
        $region59: #{tpu_custom_call.1} parent=35 // pred_region
          %s3061 = smul.u32 4, %s26
          %s3063 = ssub.s32 1024, 1024
          %3064 = vsyncadd %s3054, %s3063
          %s3065 = smul.addr %s3061, 2
          %s3066 = smul.addr %s25, 32
          %s3067 = sadd.s32 %s3065, %s3066
          %s3068 = smul.addr %s3067, 128
          %s3069 = scalar_lea.hbm %s5, %s3068
          %s3070 = sshll.u32 %s3057, 4
          %s3071 = int_to_ptr.vmem [resolvable:$true] %s3070
          %3076 = dma.vmem_to_hbm [thread:$0]  %s3071, 1024, %s3069, %s3054, 128, 128, 8
        $region60: #{tpu_custom_call.1} parent=35 // pred_fallthru
          _
      $region36: #{tpu_custom_call.1} parent=5 // pred_fallthru
        _
      %p3077 = scmp.le.s32.totalorder 2, %s16
      // Predicated region
      $region61: #{tpu_custom_call.1} parent=5 // pred_check
        %p3078 = pneg %p3077
      $region62: #{tpu_custom_call.1} parent=5 // pred_check_branch
        %3080 = sbr.rel (%p3078) target = $region64
      $region63: #{tpu_custom_call.1} parent=5 // pred_region
        %s3081 = ssub.s32 %s16, 2
        // Predicated region
        $region65: #{tpu_custom_call.1} parent=63 // pred_check
          %p3082 = pneg %p143
        $region66: #{tpu_custom_call.1} parent=63 // pred_check_branch
          %3084 = sbr.rel (%p3082) target = $region68
        $region67: #{tpu_custom_call.1} parent=63 // pred_region
          %s3085 = sand.u32 %s128, 1
          %s3086 = scalar_lea.sflag [#allocation7], %s3085
          %s3087 = sand.u32 %s128, 1
          %s3088 = smul.addr %s3087, 64
          %s3089 = scalar_lea.vmem [#allocation10], %s3088
          %3090 = dma.done %s3086, 1024
        $region68: #{tpu_custom_call.1} parent=63 // pred_fallthru
          _
      $region64: #{tpu_custom_call.1} parent=5 // pred_fallthru
        _
    $region6: #{tpu_custom_call.1} parent=1 // loop_footer
      %s20 = sadd.s32 1, %s16
    $region7: #{tpu_custom_call.1} parent=1 // loop_footer_branch
      %15 = sbr.rel target = $region3
    $region8: #{tpu_custom_call.1} parent=1 // loop_exit
      _
    %3091 = vsyncpa [#allocation6], 1
    %s3092 = scalar_lea.sflag [#allocation6], 1
    %3093 = vsyncpa %s3092, 1
    %3094 = vsyncpa [#allocation9], 1
    %3095 = vsyncpa [#allocation7], 1
    %s3096 = scalar_lea.sflag [#allocation7], 1
    %3097 = vsyncpa %s3096, 1
  %3098 = vsyncmov [#allocation4]
  %s3099 = vpop.sfrf %3098
  %p3100 = scmp.eq.s32.totalorder %s3099, 0
  %p3101 = pneg %p3100
  %3103 = shalt.err (%p3101)

</llo_original>
